<compile_context>
chip_gen: v7x
topology: tpu7x:2x2x1
jax: 0.10.0
libtpu: 0.0.40
codegen_flags: <defaults>
</compile_context>

<pallas_src>
import functools
import math

import numpy as np
import jax
import jax.numpy as jnp
from jax.experimental import pallas as pl
from jax.experimental.pallas import tpu as pltpu

# ----------------------------- model dimensions ------------------------------
B = 2                      # batch (videos / questions)
C_IN = 3                   # image channels
IMG = 16                   # image spatial size
PATCH = 8                  # vit 'base_8' -> patch size 8
GH = GW = IMG // PATCH     # 2 x 2 patch grid
NUM_PATCHES = GH * GW      # 4
PATCH_DIM = C_IN * PATCH * PATCH   # 192
S_V = NUM_PATCHES + 1      # +cls = 5 image tokens

D_V = 32                   # vision_width
D_T = 32                   # text hidden size
assert D_V == D_T          # packed [32, :] weight slab assumes equal widths
NUM_HEADS = 4              # (12 in real config; scaled down)
HEAD_DIM = D_T // NUM_HEADS
FF_V = 64
FF_T = 64
L_VIT = 1
L_ENC = 1
L_DEC = 1

VOCAB = 130                # vocab_size + 2 extra tokens
MAX_POS = 64               # max_position_embeddings (scaled down from 512)
LQ = 8                     # question length (<= 35 in the module)
LA = 6                     # answer length

PAD_TOKEN_ID = 0
BOS_TOKEN_ID = 1
ENC_TOKEN_ID = 2

N_PER_Q = (1, 2)           # `n`: number of answers per question
N_ANS = sum(N_PER_Q)       # 3

NEG_INF = -1e9

NV_TOK = B * S_V           # 10 stacked image tokens
NQ_TOK = B * LQ            # 16 stacked question tokens
NA_TOK = N_ANS * LA        # 18 stacked answer tokens

_VMEM_SPEC = pl.BlockSpec(memory_space=pltpu.MemorySpace.VMEM)


# --------------------------- packed-slab layouts ------------------------------
class _RowSlab:
    """Many small matrices packed side-by-side along the lane axis."""

    def __init__(self, entries):               # entries: [(name, width)]
        self.names = [n for n, _ in entries]
        self.off, self.width, total = {}, {}, 0
        for n, w in entries:
            self.off[n] = total
            self.width[n] = w
            total += w
        self.total = total

    def slice(self, ref, name):
        o, w = self.off[name], self.width[name]
        return ref[:, o:o + w]


class _MaskSlab:
    """2-D masks packed along lanes; rows padded to a common height."""

    def __init__(self, entries):               # entries: [(name, rows, cols)]
        self.names = [n for n, _, _ in entries]
        self.shape_of, self.off, total, rows = {}, {}, 0, 0
        for n, r, c in entries:
            self.shape_of[n] = (r, c)
            self.off[n] = total
            total += c
            rows = max(rows, r)
        self.total = total
        self.rows = rows

    def slice(self, ref, name):
        r, c = self.shape_of[name]
        o = self.off[name]
        return ref[:r, o:o + c]


def _w32_entries():
    e = []
    for l in range(L_VIT):
        e += [(f"vit{l}_wqkv", 3 * D_V), (f"vit{l}_wo", D_V), (f"vit{l}_fc1", FF_V)]
    for pfx, nl in (("enc", L_ENC), ("dec", L_DEC)):
        for l in range(nl):
            e += [(f"{pfx}{l}_self_wqkv", 3 * D_T), (f"{pfx}{l}_self_wo", D_T),
                  (f"{pfx}{l}_cross_wq", D_T), (f"{pfx}{l}_cross_wkv", 2 * D_T),
                  (f"{pfx}{l}_cross_wo", D_T), (f"{pfx}{l}_ffn_wi", FF_T)]
    e += [("lm_wt", D_T), ("lm_wd", VOCAB)]
    return e


def _w64_entries():
    e = [(f"vit{l}_fc2", D_V) for l in range(L_VIT)]
    for pfx, nl in (("enc", L_ENC), ("dec", L_DEC)):
        e += [(f"{pfx}{l}_ffn_wo", D_T) for l in range(nl)]
    return e


def _vec_entries():
    # (name, width, init) with init in {"zeros", "ones"} -- biases + LN params
    e = []
    for l in range(L_VIT):
        e += [(f"vit{l}_ln1_g", D_V, "ones"), (f"vit{l}_ln1_b", D_V, "zeros"),
              (f"vit{l}_bqkv", 3 * D_V, "zeros"), (f"vit{l}_bo", D_V, "zeros"),
              (f"vit{l}_ln2_g", D_V, "ones"), (f"vit{l}_ln2_b", D_V, "zeros"),
              (f"vit{l}_bfc1", FF_V, "zeros"), (f"vit{l}_bfc2", D_V, "zeros")]
    e += [("vit_lnf_g", D_V, "ones"), ("vit_lnf_b", D_V, "zeros")]
    for pfx, nl in (("enc", L_ENC), ("dec", L_DEC)):
        e += [(f"{pfx}_emb_ln_g", D_T, "ones"), (f"{pfx}_emb_ln_b", D_T, "zeros")]
        for l in range(nl):
            e += [(f"{pfx}{l}_self_bqkv", 3 * D_T, "zeros"), (f"{pfx}{l}_self_bo", D_T, "zeros"),
                  (f"{pfx}{l}_self_ln_g", D_T, "ones"), (f"{pfx}{l}_self_ln_b", D_T, "zeros"),
                  (f"{pfx}{l}_cross_bq", D_T, "zeros"), (f"{pfx}{l}_cross_bkv", 2 * D_T, "zeros"),
                  (f"{pfx}{l}_cross_bo", D_T, "zeros"),
                  (f"{pfx}{l}_cross_ln_g", D_T, "ones"), (f"{pfx}{l}_cross_ln_b", D_T, "zeros"),
                  (f"{pfx}{l}_ffn_bi", FF_T, "zeros"), (f"{pfx}{l}_ffn_bo", D_T, "zeros"),
                  (f"{pfx}{l}_ffn_ln_g", D_T, "ones"), (f"{pfx}{l}_ffn_ln_b", D_T, "zeros")]
    e += [("lm_bt", D_T, "zeros"), ("lm_ln_g", D_T, "ones"),
          ("lm_ln_b", D_T, "zeros"), ("lm_bd", VOCAB, "zeros")]
    return e


_W32_ENTRIES = _w32_entries()
_W64_ENTRIES = _w64_entries()
_VEC_ENTRIES = _vec_entries()
_L32 = _RowSlab(_W32_ENTRIES)
_L64 = _RowSlab(_W64_ENTRIES)
_LVEC = _RowSlab([(n, w) for n, w, _ in _VEC_ENTRIES])
_H = NUM_HEADS
_LMASK = _MaskSlab([
    ("vit", _H * NV_TOK, _H * NV_TOK),
    ("enc_self", _H * NQ_TOK, _H * NQ_TOK),
    ("enc_cross", _H * NQ_TOK, _H * NV_TOK),
    ("dec_self", _H * NA_TOK, _H * NA_TOK),
    ("dec_cross", _H * NA_TOK, _H * NQ_TOK),
])


# ------------------------------- fused kernel ---------------------------------
def _blip_kernel(xp_ref, temb_ref, mask_ref, oh_ref, waug_ref, pos_ref,
                 w32_ref, w64_ref, vec_ref, out_ref, *, inv_batch):
    f32 = jnp.float32
    bf16 = jnp.bfloat16

    def W32(name):
        return _L32.slice(w32_ref, name)

    def W64(name):
        return _L64.slice(w64_ref, name)

    def V(name):
        return _LVEC.slice(vec_ref, name)

    def M(name):
        return _LMASK.slice(mask_ref, name)

    def dot(a, b):                              # a: f32/bf16 act, b: bf16 weight slice
        return jnp.dot(a.astype(bf16), b, preferred_element_type=f32)

    def ln(x, g, b, eps):
        mu = jnp.mean(x, axis=-1, keepdims=True)
        xc = x - mu
        var = jnp.mean(xc * xc, axis=-1, keepdims=True)
        return xc * jax.lax.rsqrt(var + eps) * g + b

    def mha_core(q, k, v, wo, bo, mask, d):
        """All-head attention; heads stacked along sublanes, one softmax."""
        heads, dh = NUM_HEADS, d // NUM_HEADS
        sq = q.shape[0]
        scale = 1.0 / math.sqrt(dh)
        q_s = jnp.concatenate([q[:, h * dh:(h + 1) * dh] for h in range(heads)], axis=0)
        k_s = jnp.concatenate([k[:, h * dh:(h + 1) * dh] for h in range(heads)], axis=0)
        v_s = jnp.concatenate([v[:, h * dh:(h + 1) * dh] for h in range(heads)], axis=0)
        s = jax.lax.dot_general(q_s.astype(bf16), k_s.astype(bf16),
                                (((1,), (1,)), ((), ())),
                                preferred_element_type=f32) * scale + mask
        s = s - jnp.max(s, axis=-1, keepdims=True)
        e = jnp.exp(s)
        p = e * pl.reciprocal(jnp.sum(e, axis=-1, keepdims=True), approx=True)
        ctx = dot(p, v_s.astype(bf16))                                   # [H*Sq, dh]
        ctx_m = jnp.concatenate([ctx[h * sq:(h + 1) * sq, :] for h in range(heads)], axis=1)
        return dot(ctx_m, wo) + bo                                       # [Sq, d]

    def self_attn(x, wqkv, bqkv, wo, bo, mask, d):
        qkv = dot(x, wqkv) + bqkv                                        # one QKV matmul
        return mha_core(qkv[:, :d], qkv[:, d:2 * d], qkv[:, 2 * d:], wo, bo, mask, d)

    def cross_attn(xq, xkv, wq, bq, wkv, bkv, wo, bo, mask, d):
        q = dot(xq, wq) + bq
        kv = dot(xkv, wkv) + bkv                                         # one KV matmul
        return mha_core(q, kv[:, :d], kv[:, d:], wo, bo, mask, d)

    def bert_self(x, pfx, mask):
        a = self_attn(x, W32(f"{pfx}_self_wqkv"), V(f"{pfx}_self_bqkv"),
                      W32(f"{pfx}_self_wo"), V(f"{pfx}_self_bo"), mask, D_T)
        return ln(a + x, V(f"{pfx}_self_ln_g"), V(f"{pfx}_self_ln_b"), 1e-12)

    def bert_cross(x, kv, pfx, mask):
        a = cross_attn(x, kv, W32(f"{pfx}_cross_wq"), V(f"{pfx}_cross_bq"),
                       W32(f"{pfx}_cross_wkv"), V(f"{pfx}_cross_bkv"),
                       W32(f"{pfx}_cross_wo"), V(f"{pfx}_cross_bo"), mask, D_T)
        return ln(a + x, V(f"{pfx}_cross_ln_g"), V(f"{pfx}_cross_ln_b"), 1e-12)

    def bert_ffn(x, pfx):
        inter = jax.nn.gelu(dot(x, W32(f"{pfx}_ffn_wi")) + V(f"{pfx}_ffn_bi"),
                            approximate=True)
        out = dot(inter, W64(f"{pfx}_ffn_wo")) + V(f"{pfx}_ffn_bo")
        return ln(out + x, V(f"{pfx}_ffn_ln_g"), V(f"{pfx}_ffn_ln_b"), 1e-12)

    # ------------------ ViT (patch-embed + cls + pos folded in one matmul) ----
    x = dot(xp_ref[...], waug_ref[...]) + pos_ref[...]                  # [B*S_V, D_V]
    for l in range(L_VIT):   # TODO(synk): fori_loop over stacked weights at depth
        h = ln(x, V(f"vit{l}_ln1_g"), V(f"vit{l}_ln1_b"), 1e-6)
        x = x + self_attn(h, W32(f"vit{l}_wqkv"), V(f"vit{l}_bqkv"),
                          W32(f"vit{l}_wo"), V(f"vit{l}_bo"), M("vit"), D_V)
        h = ln(x, V(f"vit{l}_ln2_g"), V(f"vit{l}_ln2_b"), 1e-6)
        h = jax.nn.gelu(dot(h, W32(f"vit{l}_fc1")) + V(f"vit{l}_bfc1"), approximate=True)
        x = x + dot(h, W64(f"vit{l}_fc2")) + V(f"vit{l}_bfc2")
    img = ln(x, V("vit_lnf_g"), V("vit_lnf_b"), 1e-6)                   # image embeds

    # ------------------ text encoder (all batches stacked along rows) ---------
    xq = ln(temb_ref[0:NQ_TOK, :], V("enc_emb_ln_g"), V("enc_emb_ln_b"), 1e-12)
    for l in range(L_ENC):
        xq = bert_self(xq, f"enc{l}", M("enc_self"))
        xq = bert_cross(xq, img, f"enc{l}", M("enc_cross"))
        xq = bert_ffn(xq, f"enc{l}")
    # xq = question states, [B*LQ, D_T]; replication by n is done via the
    # dec_cross mask, so K/V projections over question states happen only once.

    # ------------------ text decoder (all answers stacked along rows) ---------
    xa = ln(temb_ref[NQ_TOK:NQ_TOK + NA_TOK, :],
            V("dec_emb_ln_g"), V("dec_emb_ln_b"), 1e-12)
    for l in range(L_DEC):
        xa = bert_self(xa, f"dec{l}", M("dec_self"))
        xa = bert_cross(xa, xq, f"dec{l}", M("dec_cross"))
        xa = bert_ffn(xa, f"dec{l}")

    # ------------------ LM head + shifted cross-entropy (logits stay in VMEM) -
    # TODO(synk): at real vocab sizes, tile over vocab with an online LSE.
    t = jax.nn.gelu(dot(xa, W32("lm_wt")) + V("lm_bt"), approximate=True)
    t = ln(t, V("lm_ln_g"), V("lm_ln_b"), 1e-12)
    logits = dot(t, W32("lm_wd")) + V("lm_bd")                          # [N*LA, VOCAB]
    m = jnp.max(logits, axis=-1, keepdims=True)
    lse = jnp.log(jnp.sum(jnp.exp(logits - m), axis=-1, keepdims=True)) + m
    oh = oh_ref[...]                                                    # one-hot labels
    picked = jnp.sum(logits * oh, axis=-1, keepdims=True)
    valid = jnp.sum(oh, axis=-1, keepdims=True)                         # 0 => ignore
    tok = valid * (lse - picked)                                        # [N*LA, 1]
    out_ref[...] = jnp.sum(tok, axis=0, keepdims=True) * inv_batch


# ------------------------------- parameters -----------------------------------
def _key_iter(key):
    while True:
        key, sub = jax.random.split(key)
        yield sub


def init_params(seed=0):
    ks = _key_iter(jax.random.PRNGKey(seed))

    def rnd(shape):
        return jax.random.normal(next(ks), shape, jnp.float32) * 0.02

    w32 = jnp.concatenate([rnd((D_T, w)) for _, w in _W32_ENTRIES], axis=1)
    w64 = jnp.concatenate([rnd((FF_T, w)) for _, w in _W64_ENTRIES], axis=1)
    vec = jnp.concatenate(
        [jnp.ones((1, w), jnp.float32) if kind == "ones" else jnp.zeros((1, w), jnp.float32)
         for _, w, kind in _VEC_ENTRIES], axis=1)

    patch_w = rnd((PATCH_DIM, D_V))
    patch_b = jnp.zeros((1, D_V), jnp.float32)
    cls = rnd((1, D_V))
    pos_vit = rnd((S_V, D_V))
    # cls token & conv bias folded into the single patch-embed matmul / pos add
    w_aug = jnp.concatenate([patch_w, cls - patch_b], axis=0)

    return {
        "w_aug": w_aug.astype(jnp.bfloat16),           # [PATCH_DIM+1, D_V]
        "pos_vit": pos_vit + patch_b,                  # [S_V, D_V]
        "W32": w32.astype(jnp.bfloat16),               # [D, sum widths]
        "W64": w64.astype(jnp.bfloat16),               # [FF, sum widths]
        "VEC": vec,                                    # [1, sum widths] biases+LN
        # TODO(synk): token_type embeddings omitted (all type-0 -> constant).
        "enc_word": rnd((VOCAB, D_T)), "enc_pos": rnd((MAX_POS, D_T)),
        "dec_word": rnd((VOCAB, D_T)), "dec_pos": rnd((MAX_POS, D_T)),
    }


# --------------------------------- masks ---------------------------------------
def _build_masks(q_mask, a_mask, n):
    """Additive attention masks, head-tiled to [H*Sq, H*Sk] and packed.

    Encodes (a) batch/answer block-diagonal structure (batch folded into rows),
    (b) key padding, (c) causality for the decoder, (d) head block-diagonal
    structure for the stacked-head softmax, and (e) the question-state
    replication by n (each answer attends only to its source question)."""
    h = NUM_HEADS

    def head_tile(valid):
        nq, nk = valid.shape
        hq = (np.arange(h * nq) // nq)[:, None]
        hk = (np.arange(h * nk) // nk)[None, :]
        ok = jnp.tile(valid, (h, h)) & jnp.asarray(hq == hk)
        return jnp.where(ok, 0.0, NEG_INF).astype(jnp.float32)

    b_img = np.repeat(np.arange(B), S_V)
    b_q = np.repeat(np.arange(B), LQ)
    a_grp = np.repeat(np.arange(N_ANS), LA)
    a_src = np.repeat(np.repeat(np.arange(B), np.asarray(n)), LA)
    pos_a = np.tile(np.arange(LA), N_ANS)

    qk = q_mask.reshape(-1) > 0                      # [B*LQ]
    ak = a_mask.reshape(-1) > 0                      # [N*LA]

    masks = {
        "vit": head_tile(jnp.asarray(b_img[:, None] == b_img[None, :])),
        "enc_self": head_tile(jnp.asarray(b_q[:, None] == b_q[None, :]) & qk[None, :]),
        "enc_cross": head_tile(jnp.asarray(b_q[:, None] == b_img[None, :])),
        "dec_self": head_tile(jnp.asarray((a_grp[:, None] == a_grp[None, :])
                                          & (pos_a[:, None] >= pos_a[None, :]))
                              & ak[None, :]),
        "dec_cross": head_tile(jnp.asarray(a_src[:, None] == b_q[None, :]) & qk[None, :]),
    }
    cols = []
    for name in _LMASK.names:
        m = masks[name]
        pad = _LMASK.rows - m.shape[0]
        if pad:
            m = jnp.concatenate([m, jnp.zeros((pad, m.shape[1]), jnp.float32)], axis=0)
        cols.append(m)
    return jnp.concatenate(cols, axis=1)             # [rows, total]


# ------------------------------ BLIP_VQA forward -------------------------------
def blip_vqa_forward_train(params, video, q_ids, q_mask, a_ids, a_mask, n):
    assert video.shape[0] == B and sum(n) == N_ANS

    # tokenizer-side token replacements
    q_ids = q_ids.at[:, 0].set(ENC_TOKEN_ID)
    a_ids = a_ids.at[:, 0].set(BOS_TOKEN_ID)

    # glue: patchify NCHW -> rows; cls handled by a one-hot row on the
    # augmented patch-embed weight (single matmul in-kernel)
    x = video.reshape(B, C_IN, GH, PATCH, GW, PATCH)
    patches = x.transpose(0, 2, 4, 1, 3, 5).reshape(B, NUM_PATCHES, PATCH_DIM)
    patches = jnp.concatenate(
        [patches, jnp.zeros((B, NUM_PATCHES, 1), jnp.float32)], axis=-1)
    cls_row = jnp.zeros((B, 1, PATCH_DIM + 1), jnp.float32).at[:, :, -1].set(1.0)
    x_aug = jnp.concatenate([cls_row, patches], axis=1).reshape(NV_TOK, PATCH_DIM + 1)
    pos_full = jnp.tile(params["pos_vit"], (B, 1))                      # [B*S_V, D_V]

    # glue: embedding gathers (word + position); questions & answers stacked
    q_emb = params["enc_word"][q_ids] + params["enc_pos"][:LQ][None, :, :]
    a_emb = params["dec_word"][a_ids] + params["dec_pos"][:LA][None, :, :]
    temb = jnp.concatenate([q_emb.reshape(NQ_TOK, D_T),
                            a_emb.reshape(NA_TOK, D_T)], axis=0)

    # masks (block-diag batch, padding, causal, head tiling, replication-by-n)
    mask_slab = _build_masks(q_mask, a_mask, n)

    # shifted labels -> dense one-hot (all-zero row == ignore_index -100)
    targets = jnp.where(a_ids == PAD_TOKEN_ID, -100, a_ids)
    shifted = jnp.concatenate(
        [targets[:, 1:], jnp.full((N_ANS, 1), -100, targets.dtype)], axis=1).reshape(NA_TOK)
    valid = shifted >= 0
    onehot = jax.nn.one_hot(jnp.where(valid, shifted, 0), VOCAB, dtype=jnp.float32)
    onehot = onehot * valid.astype(jnp.float32)[:, None]

    loss = pl.pallas_call(
        functools.partial(_blip_kernel, inv_batch=1.0 / float(B)),
        out_shape=jax.ShapeDtypeStruct((1, 1), jnp.float32),
        in_specs=[_VMEM_SPEC] * 9,
        out_specs=_VMEM_SPEC,
        compiler_params=pltpu.CompilerParams(vmem_limit_bytes=32 * 1024 * 1024),
        # TODO(synk): for v7x, add a parallel batch/answer grid axis so the
        # second TensorCore is used (at toy dims the fused single call wins).
    )(x_aug.astype(jnp.bfloat16), temb, mask_slab, onehot,
      params["w_aug"], pos_full, params["W32"], params["W64"], params["VEC"])
    return loss[0, 0]


# ----------------------------------- main ---------------------------------------
if __name__ == "__main__":
    key = jax.random.PRNGKey(0)
    k_video, k_q, k_a = jax.random.split(key, 3)

    video = jax.random.normal(k_video, (B, C_IN, IMG, IMG), jnp.float32)

    q_mask = jnp.array([[1, 1, 1, 1, 1, 1, 1, 1],
                        [1, 1, 1, 1, 1, 1, 1, 0]], jnp.int32)
    q_ids = jax.random.randint(k_q, (B, LQ), 4, VOCAB, jnp.int32)
    q_ids = jnp.where(q_mask == 0, PAD_TOKEN_ID, q_ids)

    a_mask = jnp.array([[1, 1, 1, 1, 1, 1],
                        [1, 1, 1, 1, 0, 0],
                        [1, 1, 1, 0, 0, 0]], jnp.int32)
    a_ids = jax.random.randint(k_a, (N_ANS, LA), 4, VOCAB, jnp.int32)
    a_ids = jnp.where(a_mask == 0, PAD_TOKEN_ID, a_ids)

    params = init_params(seed=0)

    fwd = jax.jit(blip_vqa_forward_train, static_argnames=("n",))
    loss = fwd(params, video, q_ids, q_mask, a_ids, a_mask, n=N_PER_Q)
    loss = jax.block_until_ready(loss)
    assert jnp.isfinite(loss)
    print("KERNEL_OK")
</pallas_src>

<mosaic_0001>
module attributes {stable_mosaic.version = 11 : i64} {
  func.func @_blip_kernel(%arg0: memref<10x193xbf16, #tpu.memory_space<vmem>>, %arg1: memref<34x32xf32, #tpu.memory_space<vmem>>, %arg2: memref<72x280xf32, #tpu.memory_space<vmem>>, %arg3: memref<18x130xf32, #tpu.memory_space<vmem>>, %arg4: memref<193x32xbf16, #tpu.memory_space<vmem>>, %arg5: memref<10x32xf32, #tpu.memory_space<vmem>>, %arg6: memref<32x994xbf16, #tpu.memory_space<vmem>>, %arg7: memref<64x96xbf16, #tpu.memory_space<vmem>>, %arg8: memref<1x1858xf32, #tpu.memory_space<vmem>>, %arg9: memref<1x1xf32, #tpu.memory_space<vmem>>) attributes {dimension_semantics = [], scalar_prefetch = 0 : i64, scratch_operands = 0 : i64, tpu.core_type = #tpu.core_type<tc>} {
    %c0 = arith.constant 0 : index
    %c0_0 = arith.constant 0 : index
    %0 = vector.load %arg0[%c0, %c0_0] : memref<10x193xbf16, #tpu.memory_space<vmem>>, vector<10x193xbf16>
    %c0_1 = arith.constant 0 : index
    %c0_2 = arith.constant 0 : index
    %1 = vector.load %arg4[%c0_1, %c0_2] : memref<193x32xbf16, #tpu.memory_space<vmem>>, vector<193x32xbf16>
    %cst = arith.constant dense<0.000000e+00> : vector<10x32xf32>
    %2 = tpu.matmul %0, %1, %cst {dimension_numbers = #tpu.dot_dimension_numbers<[1], [0], [0], [1], [0, 0, 1, 1], [], []>} : vector<10x193xbf16>, vector<193x32xbf16>, vector<10x32xf32> -> vector<10x32xf32>
    %c0_3 = arith.constant 0 : index
    %c0_4 = arith.constant 0 : index
    %3 = vector.load %arg5[%c0_3, %c0_4] : memref<10x32xf32, #tpu.memory_space<vmem>>, vector<10x32xf32>
    %4 = arith.addf %2, %3 : vector<10x32xf32>
    %c0_5 = arith.constant 0 : index
    %c0_6 = arith.constant 0 : index
    %5 = vector.load %arg8[%c0_5, %c0_6] : memref<1x1858xf32, #tpu.memory_space<vmem>>, vector<1x32xf32>
    %c0_7 = arith.constant 0 : index
    %c32 = arith.constant 32 : index
    %6 = vector.load %arg8[%c0_7, %c32] : memref<1x1858xf32, #tpu.memory_space<vmem>>, vector<1x32xf32>
    %cst_8 = arith.constant dense<0.000000e+00> : vector<10xf32>
    %7 = vector.multi_reduction <add>, %4, %cst_8 [1] : vector<10x32xf32> to vector<10xf32>
    %8 = vector.shape_cast %7 : vector<10xf32> to vector<10x1xf32>
    %cst_9 = arith.constant 3.200000e+01 : f32
    %9 = vector.broadcast %cst_9 : f32 to vector<10x1xf32>
    %10 = arith.divf %8, %9 : vector<10x1xf32>
    %11 = vector.broadcast %10 : vector<10x1xf32> to vector<10x32xf32>
    %12 = arith.subf %4, %11 : vector<10x32xf32>
    %13 = arith.mulf %12, %12 : vector<10x32xf32>
    %cst_10 = arith.constant dense<0.000000e+00> : vector<10xf32>
    %14 = vector.multi_reduction <add>, %13, %cst_10 [1] : vector<10x32xf32> to vector<10xf32>
    %15 = vector.shape_cast %14 : vector<10xf32> to vector<10x1xf32>
    %cst_11 = arith.constant 3.200000e+01 : f32
    %16 = vector.broadcast %cst_11 : f32 to vector<10x1xf32>
    %17 = arith.divf %15, %16 : vector<10x1xf32>
    %cst_12 = arith.constant 9.99999997E-7 : f32
    %18 = vector.broadcast %cst_12 : f32 to vector<10x1xf32>
    %19 = arith.addf %17, %18 : vector<10x1xf32>
    %20 = math.rsqrt %19 : vector<10x1xf32>
    %21 = vector.broadcast %20 : vector<10x1xf32> to vector<10x32xf32>
    %22 = arith.mulf %12, %21 : vector<10x32xf32>
    %23 = vector.broadcast %5 : vector<1x32xf32> to vector<10x32xf32>
    %24 = arith.mulf %22, %23 : vector<10x32xf32>
    %25 = vector.broadcast %6 : vector<1x32xf32> to vector<10x32xf32>
    %26 = arith.addf %24, %25 : vector<10x32xf32>
    %c0_13 = arith.constant 0 : index
    %c0_14 = arith.constant 0 : index
    %27 = vector.load %arg6[%c0_13, %c0_14] : memref<32x994xbf16, #tpu.memory_space<vmem>>, vector<32x96xbf16>
    %c0_15 = arith.constant 0 : index
    %c64 = arith.constant 64 : index
    %28 = vector.load %arg8[%c0_15, %c64] : memref<1x1858xf32, #tpu.memory_space<vmem>>, vector<1x96xf32>
    %c0_16 = arith.constant 0 : index
    %c96 = arith.constant 96 : index
    %29 = vector.load %arg6[%c0_16, %c96] : memref<32x994xbf16, #tpu.memory_space<vmem>>, vector<32x32xbf16>
    %c0_17 = arith.constant 0 : index
    %c160 = arith.constant 160 : index
    %30 = vector.load %arg8[%c0_17, %c160] : memref<1x1858xf32, #tpu.memory_space<vmem>>, vector<1x32xf32>
    %c0_18 = arith.constant 0 : index
    %c0_19 = arith.constant 0 : index
    %31 = vector.load %arg2[%c0_18, %c0_19] : memref<72x280xf32, #tpu.memory_space<vmem>>, vector<40x40xf32>
    %32 = arith.truncf %26 : vector<10x32xf32> to vector<10x32xbf16>
    %cst_20 = arith.constant dense<0.000000e+00> : vector<10x96xf32>
    %33 = tpu.matmul %32, %27, %cst_20 {dimension_numbers = #tpu.dot_dimension_numbers<[1], [0], [0], [1], [0, 0, 1, 1], [], []>} : vector<10x32xbf16>, vector<32x96xbf16>, vector<10x96xf32> -> vector<10x96xf32>
    %34 = vector.broadcast %28 : vector<1x96xf32> to vector<10x96xf32>
    %35 = arith.addf %33, %34 : vector<10x96xf32>
    %36 = vector.extract_strided_slice %35 {offsets = [0, 0], sizes = [10, 32], strides = [1, 1]} : vector<10x96xf32> to vector<10x32xf32>
    %37 = vector.extract_strided_slice %35 {offsets = [0, 32], sizes = [10, 32], strides = [1, 1]} : vector<10x96xf32> to vector<10x32xf32>
    %38 = vector.extract_strided_slice %35 {offsets = [0, 64], sizes = [10, 32], strides = [1, 1]} : vector<10x96xf32> to vector<10x32xf32>
    %39 = vector.extract_strided_slice %36 {offsets = [0, 0], sizes = [10, 8], strides = [1, 1]} : vector<10x32xf32> to vector<10x8xf32>
    %40 = vector.extract_strided_slice %36 {offsets = [0, 8], sizes = [10, 8], strides = [1, 1]} : vector<10x32xf32> to vector<10x8xf32>
    %41 = vector.extract_strided_slice %36 {offsets = [0, 16], sizes = [10, 8], strides = [1, 1]} : vector<10x32xf32> to vector<10x8xf32>
    %42 = vector.extract_strided_slice %36 {offsets = [0, 24], sizes = [10, 8], strides = [1, 1]} : vector<10x32xf32> to vector<10x8xf32>
    %43 = tpu.concatenate %39, %40, %41, %42 in 0 : vector<10x8xf32>, vector<10x8xf32>, vector<10x8xf32>, vector<10x8xf32> -> vector<40x8xf32>
    %44 = vector.extract_strided_slice %37 {offsets = [0, 0], sizes = [10, 8], strides = [1, 1]} : vector<10x32xf32> to vector<10x8xf32>
    %45 = vector.extract_strided_slice %37 {offsets = [0, 8], sizes = [10, 8], strides = [1, 1]} : vector<10x32xf32> to vector<10x8xf32>
    %46 = vector.extract_strided_slice %37 {offsets = [0, 16], sizes = [10, 8], strides = [1, 1]} : vector<10x32xf32> to vector<10x8xf32>
    %47 = vector.extract_strided_slice %37 {offsets = [0, 24], sizes = [10, 8], strides = [1, 1]} : vector<10x32xf32> to vector<10x8xf32>
    %48 = tpu.concatenate %44, %45, %46, %47 in 0 : vector<10x8xf32>, vector<10x8xf32>, vector<10x8xf32>, vector<10x8xf32> -> vector<40x8xf32>
    %49 = vector.extract_strided_slice %38 {offsets = [0, 0], sizes = [10, 8], strides = [1, 1]} : vector<10x32xf32> to vector<10x8xf32>
    %50 = vector.extract_strided_slice %38 {offsets = [0, 8], sizes = [10, 8], strides = [1, 1]} : vector<10x32xf32> to vector<10x8xf32>
    %51 = vector.extract_strided_slice %38 {offsets = [0, 16], sizes = [10, 8], strides = [1, 1]} : vector<10x32xf32> to vector<10x8xf32>
    %52 = vector.extract_strided_slice %38 {offsets = [0, 24], sizes = [10, 8], strides = [1, 1]} : vector<10x32xf32> to vector<10x8xf32>
    %53 = tpu.concatenate %49, %50, %51, %52 in 0 : vector<10x8xf32>, vector<10x8xf32>, vector<10x8xf32>, vector<10x8xf32> -> vector<40x8xf32>
    %54 = arith.truncf %43 : vector<40x8xf32> to vector<40x8xbf16>
    %55 = arith.truncf %48 : vector<40x8xf32> to vector<40x8xbf16>
    %cst_21 = arith.constant dense<0.000000e+00> : vector<40x40xf32>
    %56 = tpu.matmul %54, %55, %cst_21 {dimension_numbers = #tpu.dot_dimension_numbers<[1], [1], [0], [0], [0, 0, 1, 0], [], []>} : vector<40x8xbf16>, vector<40x8xbf16>, vector<40x40xf32> -> vector<40x40xf32>
    %cst_22 = arith.constant 0.353553385 : f32
    %57 = vector.broadcast %cst_22 : f32 to vector<40x40xf32>
    %58 = arith.mulf %56, %57 : vector<40x40xf32>
    %59 = arith.addf %58, %31 : vector<40x40xf32>
    %cst_23 = arith.constant dense<0xFF800000> : vector<40xf32>
    %60 = vector.multi_reduction <maximumf>, %59, %cst_23 [1] : vector<40x40xf32> to vector<40xf32>
    %61 = vector.shape_cast %60 : vector<40xf32> to vector<40x1xf32>
    %62 = vector.broadcast %61 : vector<40x1xf32> to vector<40x40xf32>
    %63 = arith.subf %59, %62 : vector<40x40xf32>
    %64 = math.exp %63 : vector<40x40xf32>
    %cst_24 = arith.constant dense<0.000000e+00> : vector<40xf32>
    %65 = vector.multi_reduction <add>, %64, %cst_24 [1] : vector<40x40xf32> to vector<40xf32>
    %66 = vector.shape_cast %65 : vector<40xf32> to vector<40x1xf32>
    %67 = tpu.reciprocal %66 {approx = true} : vector<40x1xf32> -> vector<40x1xf32>
    %68 = vector.broadcast %67 : vector<40x1xf32> to vector<40x40xf32>
    %69 = arith.mulf %64, %68 : vector<40x40xf32>
    %70 = arith.truncf %53 : vector<40x8xf32> to vector<40x8xbf16>
    %71 = arith.truncf %69 : vector<40x40xf32> to vector<40x40xbf16>
    %cst_25 = arith.constant dense<0.000000e+00> : vector<40x8xf32>
    %72 = tpu.matmul %71, %70, %cst_25 {dimension_numbers = #tpu.dot_dimension_numbers<[1], [0], [0], [1], [0, 0, 1, 1], [], []>} : vector<40x40xbf16>, vector<40x8xbf16>, vector<40x8xf32> -> vector<40x8xf32>
    %73 = vector.extract_strided_slice %72 {offsets = [0, 0], sizes = [10, 8], strides = [1, 1]} : vector<40x8xf32> to vector<10x8xf32>
    %74 = vector.extract_strided_slice %72 {offsets = [10, 0], sizes = [10, 8], strides = [1, 1]} : vector<40x8xf32> to vector<10x8xf32>
    %75 = vector.extract_strided_slice %72 {offsets = [20, 0], sizes = [10, 8], strides = [1, 1]} : vector<40x8xf32> to vector<10x8xf32>
    %76 = vector.extract_strided_slice %72 {offsets = [30, 0], sizes = [10, 8], strides = [1, 1]} : vector<40x8xf32> to vector<10x8xf32>
    %77 = tpu.concatenate %73, %74, %75, %76 in 1 : vector<10x8xf32>, vector<10x8xf32>, vector<10x8xf32>, vector<10x8xf32> -> vector<10x32xf32>
    %78 = arith.truncf %77 : vector<10x32xf32> to vector<10x32xbf16>
    %cst_26 = arith.constant dense<0.000000e+00> : vector<10x32xf32>
    %79 = tpu.matmul %78, %29, %cst_26 {dimension_numbers = #tpu.dot_dimension_numbers<[1], [0], [0], [1], [0, 0, 1, 1], [], []>} : vector<10x32xbf16>, vector<32x32xbf16>, vector<10x32xf32> -> vector<10x32xf32>
    %80 = vector.broadcast %30 : vector<1x32xf32> to vector<10x32xf32>
    %81 = arith.addf %79, %80 : vector<10x32xf32>
    %82 = arith.addf %4, %81 : vector<10x32xf32>
    %c0_27 = arith.constant 0 : index
    %c192 = arith.constant 192 : index
    %83 = vector.load %arg8[%c0_27, %c192] : memref<1x1858xf32, #tpu.memory_space<vmem>>, vector<1x32xf32>
    %c0_28 = arith.constant 0 : index
    %c224 = arith.constant 224 : index
    %84 = vector.load %arg8[%c0_28, %c224] : memref<1x1858xf32, #tpu.memory_space<vmem>>, vector<1x32xf32>
    %cst_29 = arith.constant dense<0.000000e+00> : vector<10xf32>
    %85 = vector.multi_reduction <add>, %82, %cst_29 [1] : vector<10x32xf32> to vector<10xf32>
    %86 = vector.shape_cast %85 : vector<10xf32> to vector<10x1xf32>
    %cst_30 = arith.constant 3.200000e+01 : f32
    %87 = vector.broadcast %cst_30 : f32 to vector<10x1xf32>
    %88 = arith.divf %86, %87 : vector<10x1xf32>
    %89 = vector.broadcast %88 : vector<10x1xf32> to vector<10x32xf32>
    %90 = arith.subf %82, %89 : vector<10x32xf32>
    %91 = arith.mulf %90, %90 : vector<10x32xf32>
    %cst_31 = arith.constant dense<0.000000e+00> : vector<10xf32>
    %92 = vector.multi_reduction <add>, %91, %cst_31 [1] : vector<10x32xf32> to vector<10xf32>
    %93 = vector.shape_cast %92 : vector<10xf32> to vector<10x1xf32>
    %cst_32 = arith.constant 3.200000e+01 : f32
    %94 = vector.broadcast %cst_32 : f32 to vector<10x1xf32>
    %95 = arith.divf %93, %94 : vector<10x1xf32>
    %cst_33 = arith.constant 9.99999997E-7 : f32
    %96 = vector.broadcast %cst_33 : f32 to vector<10x1xf32>
    %97 = arith.addf %95, %96 : vector<10x1xf32>
    %98 = math.rsqrt %97 : vector<10x1xf32>
    %99 = vector.broadcast %98 : vector<10x1xf32> to vector<10x32xf32>
    %100 = arith.mulf %90, %99 : vector<10x32xf32>
    %101 = vector.broadcast %83 : vector<1x32xf32> to vector<10x32xf32>
    %102 = arith.mulf %100, %101 : vector<10x32xf32>
    %103 = vector.broadcast %84 : vector<1x32xf32> to vector<10x32xf32>
    %104 = arith.addf %102, %103 : vector<10x32xf32>
    %c0_34 = arith.constant 0 : index
    %c128 = arith.constant 128 : index
    %105 = vector.load %arg6[%c0_34, %c128] : memref<32x994xbf16, #tpu.memory_space<vmem>>, vector<32x64xbf16>
    %106 = arith.truncf %104 : vector<10x32xf32> to vector<10x32xbf16>
    %cst_35 = arith.constant dense<0.000000e+00> : vector<10x64xf32>
    %107 = tpu.matmul %106, %105, %cst_35 {dimension_numbers = #tpu.dot_dimension_numbers<[1], [0], [0], [1], [0, 0, 1, 1], [], []>} : vector<10x32xbf16>, vector<32x64xbf16>, vector<10x64xf32> -> vector<10x64xf32>
    %c0_36 = arith.constant 0 : index
    %c256 = arith.constant 256 : index
    %108 = vector.load %arg8[%c0_36, %c256] : memref<1x1858xf32, #tpu.memory_space<vmem>>, vector<1x64xf32>
    %109 = vector.broadcast %108 : vector<1x64xf32> to vector<10x64xf32>
    %110 = arith.addf %107, %109 : vector<10x64xf32>
    %111 = arith.mulf %110, %110 : vector<10x64xf32>
    %112 = arith.mulf %110, %111 : vector<10x64xf32>
    %cst_37 = arith.constant 4.471500e-02 : f32
    %113 = vector.broadcast %cst_37 : f32 to vector<10x64xf32>
    %114 = arith.mulf %113, %112 : vector<10x64xf32>
    %115 = arith.addf %110, %114 : vector<10x64xf32>
    %cst_38 = arith.constant 0.797884583 : f32
    %116 = vector.broadcast %cst_38 : f32 to vector<10x64xf32>
    %117 = arith.mulf %116, %115 : vector<10x64xf32>
    %118 = math.tanh %117 : vector<10x64xf32>
    %cst_39 = arith.constant 1.000000e+00 : f32
    %119 = vector.broadcast %cst_39 : f32 to vector<10x64xf32>
    %120 = arith.addf %119, %118 : vector<10x64xf32>
    %cst_40 = arith.constant 5.000000e-01 : f32
    %121 = vector.broadcast %cst_40 : f32 to vector<10x64xf32>
    %122 = arith.mulf %121, %120 : vector<10x64xf32>
    %123 = arith.mulf %110, %122 : vector<10x64xf32>
    %c0_41 = arith.constant 0 : index
    %c0_42 = arith.constant 0 : index
    %124 = vector.load %arg7[%c0_41, %c0_42] : memref<64x96xbf16, #tpu.memory_space<vmem>>, vector<64x32xbf16>
    %125 = arith.truncf %123 : vector<10x64xf32> to vector<10x64xbf16>
    %cst_43 = arith.constant dense<0.000000e+00> : vector<10x32xf32>
    %126 = tpu.matmul %125, %124, %cst_43 {dimension_numbers = #tpu.dot_dimension_numbers<[1], [0], [0], [1], [0, 0, 1, 1], [], []>} : vector<10x64xbf16>, vector<64x32xbf16>, vector<10x32xf32> -> vector<10x32xf32>
    %127 = arith.addf %82, %126 : vector<10x32xf32>
    %c0_44 = arith.constant 0 : index
    %c320 = arith.constant 320 : index
    %128 = vector.load %arg8[%c0_44, %c320] : memref<1x1858xf32, #tpu.memory_space<vmem>>, vector<1x32xf32>
    %129 = vector.broadcast %128 : vector<1x32xf32> to vector<10x32xf32>
    %130 = arith.addf %127, %129 : vector<10x32xf32>
    %c0_45 = arith.constant 0 : index
    %c352 = arith.constant 352 : index
    %131 = vector.load %arg8[%c0_45, %c352] : memref<1x1858xf32, #tpu.memory_space<vmem>>, vector<1x32xf32>
    %c0_46 = arith.constant 0 : index
    %c384 = arith.constant 384 : index
    %132 = vector.load %arg8[%c0_46, %c384] : memref<1x1858xf32, #tpu.memory_space<vmem>>, vector<1x32xf32>
    %cst_47 = arith.constant dense<0.000000e+00> : vector<10xf32>
    %133 = vector.multi_reduction <add>, %130, %cst_47 [1] : vector<10x32xf32> to vector<10xf32>
    %134 = vector.shape_cast %133 : vector<10xf32> to vector<10x1xf32>
    %cst_48 = arith.constant 3.200000e+01 : f32
    %135 = vector.broadcast %cst_48 : f32 to vector<10x1xf32>
    %136 = arith.divf %134, %135 : vector<10x1xf32>
    %137 = vector.broadcast %136 : vector<10x1xf32> to vector<10x32xf32>
    %138 = arith.subf %130, %137 : vector<10x32xf32>
    %139 = arith.mulf %138, %138 : vector<10x32xf32>
    %cst_49 = arith.constant dense<0.000000e+00> : vector<10xf32>
    %140 = vector.multi_reduction <add>, %139, %cst_49 [1] : vector<10x32xf32> to vector<10xf32>
    %141 = vector.shape_cast %140 : vector<10xf32> to vector<10x1xf32>
    %cst_50 = arith.constant 3.200000e+01 : f32
    %142 = vector.broadcast %cst_50 : f32 to vector<10x1xf32>
    %143 = arith.divf %141, %142 : vector<10x1xf32>
    %cst_51 = arith.constant 9.99999997E-7 : f32
    %144 = vector.broadcast %cst_51 : f32 to vector<10x1xf32>
    %145 = arith.addf %143, %144 : vector<10x1xf32>
    %146 = math.rsqrt %145 : vector<10x1xf32>
    %147 = vector.broadcast %146 : vector<10x1xf32> to vector<10x32xf32>
    %148 = arith.mulf %138, %147 : vector<10x32xf32>
    %149 = vector.broadcast %131 : vector<1x32xf32> to vector<10x32xf32>
    %150 = arith.mulf %148, %149 : vector<10x32xf32>
    %151 = vector.broadcast %132 : vector<1x32xf32> to vector<10x32xf32>
    %152 = arith.addf %150, %151 : vector<10x32xf32>
    %c0_52 = arith.constant 0 : index
    %c0_53 = arith.constant 0 : index
    %153 = vector.load %arg1[%c0_52, %c0_53] : memref<34x32xf32, #tpu.memory_space<vmem>>, vector<16x32xf32>
    %c0_54 = arith.constant 0 : index
    %c416 = arith.constant 416 : index
    %154 = vector.load %arg8[%c0_54, %c416] : memref<1x1858xf32, #tpu.memory_space<vmem>>, vector<1x32xf32>
    %c0_55 = arith.constant 0 : index
    %c448 = arith.constant 448 : index
    %155 = vector.load %arg8[%c0_55, %c448] : memref<1x1858xf32, #tpu.memory_space<vmem>>, vector<1x32xf32>
    %cst_56 = arith.constant dense<0.000000e+00> : vector<16xf32>
    %156 = vector.multi_reduction <add>, %153, %cst_56 [1] : vector<16x32xf32> to vector<16xf32>
    %157 = vector.shape_cast %156 : vector<16xf32> to vector<16x1xf32>
    %cst_57 = arith.constant 3.200000e+01 : f32
    %158 = vector.broadcast %cst_57 : f32 to vector<16x1xf32>
    %159 = arith.divf %157, %158 : vector<16x1xf32>
    %160 = vector.broadcast %159 : vector<16x1xf32> to vector<16x32xf32>
    %161 = arith.subf %153, %160 : vector<16x32xf32>
    %162 = arith.mulf %161, %161 : vector<16x32xf32>
    %cst_58 = arith.constant dense<0.000000e+00> : vector<16xf32>
    %163 = vector.multi_reduction <add>, %162, %cst_58 [1] : vector<16x32xf32> to vector<16xf32>
    %164 = vector.shape_cast %163 : vector<16xf32> to vector<16x1xf32>
    %cst_59 = arith.constant 3.200000e+01 : f32
    %165 = vector.broadcast %cst_59 : f32 to vector<16x1xf32>
    %166 = arith.divf %164, %165 : vector<16x1xf32>
    %cst_60 = arith.constant 9.99999996E-13 : f32
    %167 = vector.broadcast %cst_60 : f32 to vector<16x1xf32>
    %168 = arith.addf %166, %167 : vector<16x1xf32>
    %169 = math.rsqrt %168 : vector<16x1xf32>
    %170 = vector.broadcast %169 : vector<16x1xf32> to vector<16x32xf32>
    %171 = arith.mulf %161, %170 : vector<16x32xf32>
    %172 = vector.broadcast %154 : vector<1x32xf32> to vector<16x32xf32>
    %173 = arith.mulf %171, %172 : vector<16x32xf32>
    %174 = vector.broadcast %155 : vector<1x32xf32> to vector<16x32xf32>
    %175 = arith.addf %173, %174 : vector<16x32xf32>
    %c0_61 = arith.constant 0 : index
    %c40 = arith.constant 40 : index
    %176 = vector.load %arg2[%c0_61, %c40] : memref<72x280xf32, #tpu.memory_space<vmem>>, vector<64x64xf32>
    %c0_62 = arith.constant 0 : index
    %c192_63 = arith.constant 192 : index
    %177 = vector.load %arg6[%c0_62, %c192_63] : memref<32x994xbf16, #tpu.memory_space<vmem>>, vector<32x96xbf16>
    %c0_64 = arith.constant 0 : index
    %c480 = arith.constant 480 : index
    %178 = vector.load %arg8[%c0_64, %c480] : memref<1x1858xf32, #tpu.memory_space<vmem>>, vector<1x96xf32>
    %c0_65 = arith.constant 0 : index
    %c288 = arith.constant 288 : index
    %179 = vector.load %arg6[%c0_65, %c288] : memref<32x994xbf16, #tpu.memory_space<vmem>>, vector<32x32xbf16>
    %c0_66 = arith.constant 0 : index
    %c576 = arith.constant 576 : index
    %180 = vector.load %arg8[%c0_66, %c576] : memref<1x1858xf32, #tpu.memory_space<vmem>>, vector<1x32xf32>
    %181 = arith.truncf %175 : vector<16x32xf32> to vector<16x32xbf16>
    %cst_67 = arith.constant dense<0.000000e+00> : vector<16x96xf32>
    %182 = tpu.matmul %181, %177, %cst_67 {dimension_numbers = #tpu.dot_dimension_numbers<[1], [0], [0], [1], [0, 0, 1, 1], [], []>} : vector<16x32xbf16>, vector<32x96xbf16>, vector<16x96xf32> -> vector<16x96xf32>
    %183 = vector.broadcast %178 : vector<1x96xf32> to vector<16x96xf32>
    %184 = arith.addf %182, %183 : vector<16x96xf32>
    %185 = vector.extract_strided_slice %184 {offsets = [0, 0], sizes = [16, 32], strides = [1, 1]} : vector<16x96xf32> to vector<16x32xf32>
    %186 = vector.extract_strided_slice %184 {offsets = [0, 32], sizes = [16, 32], strides = [1, 1]} : vector<16x96xf32> to vector<16x32xf32>
    %187 = vector.extract_strided_slice %184 {offsets = [0, 64], sizes = [16, 32], strides = [1, 1]} : vector<16x96xf32> to vector<16x32xf32>
    %188 = vector.extract_strided_slice %185 {offsets = [0, 0], sizes = [16, 8], strides = [1, 1]} : vector<16x32xf32> to vector<16x8xf32>
    %189 = vector.extract_strided_slice %185 {offsets = [0, 8], sizes = [16, 8], strides = [1, 1]} : vector<16x32xf32> to vector<16x8xf32>
    %190 = vector.extract_strided_slice %185 {offsets = [0, 16], sizes = [16, 8], strides = [1, 1]} : vector<16x32xf32> to vector<16x8xf32>
    %191 = vector.extract_strided_slice %185 {offsets = [0, 24], sizes = [16, 8], strides = [1, 1]} : vector<16x32xf32> to vector<16x8xf32>
    %192 = tpu.concatenate %188, %189, %190, %191 in 0 : vector<16x8xf32>, vector<16x8xf32>, vector<16x8xf32>, vector<16x8xf32> -> vector<64x8xf32>
    %193 = vector.extract_strided_slice %186 {offsets = [0, 0], sizes = [16, 8], strides = [1, 1]} : vector<16x32xf32> to vector<16x8xf32>
    %194 = vector.extract_strided_slice %186 {offsets = [0, 8], sizes = [16, 8], strides = [1, 1]} : vector<16x32xf32> to vector<16x8xf32>
    %195 = vector.extract_strided_slice %186 {offsets = [0, 16], sizes = [16, 8], strides = [1, 1]} : vector<16x32xf32> to vector<16x8xf32>
    %196 = vector.extract_strided_slice %186 {offsets = [0, 24], sizes = [16, 8], strides = [1, 1]} : vector<16x32xf32> to vector<16x8xf32>
    %197 = tpu.concatenate %193, %194, %195, %196 in 0 : vector<16x8xf32>, vector<16x8xf32>, vector<16x8xf32>, vector<16x8xf32> -> vector<64x8xf32>
    %198 = vector.extract_strided_slice %187 {offsets = [0, 0], sizes = [16, 8], strides = [1, 1]} : vector<16x32xf32> to vector<16x8xf32>
    %199 = vector.extract_strided_slice %187 {offsets = [0, 8], sizes = [16, 8], strides = [1, 1]} : vector<16x32xf32> to vector<16x8xf32>
    %200 = vector.extract_strided_slice %187 {offsets = [0, 16], sizes = [16, 8], strides = [1, 1]} : vector<16x32xf32> to vector<16x8xf32>
    %201 = vector.extract_strided_slice %187 {offsets = [0, 24], sizes = [16, 8], strides = [1, 1]} : vector<16x32xf32> to vector<16x8xf32>
    %202 = tpu.concatenate %198, %199, %200, %201 in 0 : vector<16x8xf32>, vector<16x8xf32>, vector<16x8xf32>, vector<16x8xf32> -> vector<64x8xf32>
    %203 = arith.truncf %192 : vector<64x8xf32> to vector<64x8xbf16>
    %204 = arith.truncf %197 : vector<64x8xf32> to vector<64x8xbf16>
    %cst_68 = arith.constant dense<0.000000e+00> : vector<64x64xf32>
    %205 = tpu.matmul %203, %204, %cst_68 {dimension_numbers = #tpu.dot_dimension_numbers<[1], [1], [0], [0], [0, 0, 1, 0], [], []>} : vector<64x8xbf16>, vector<64x8xbf16>, vector<64x64xf32> -> vector<64x64xf32>
    %cst_69 = arith.constant 0.353553385 : f32
    %206 = vector.broadcast %cst_69 : f32 to vector<64x64xf32>
    %207 = arith.mulf %205, %206 : vector<64x64xf32>
    %208 = arith.addf %207, %176 : vector<64x64xf32>
    %cst_70 = arith.constant dense<0xFF800000> : vector<64xf32>
    %209 = vector.multi_reduction <maximumf>, %208, %cst_70 [1] : vector<64x64xf32> to vector<64xf32>
    %210 = vector.shape_cast %209 : vector<64xf32> to vector<64x1xf32>
    %211 = vector.broadcast %210 : vector<64x1xf32> to vector<64x64xf32>
    %212 = arith.subf %208, %211 : vector<64x64xf32>
    %213 = math.exp %212 : vector<64x64xf32>
    %cst_71 = arith.constant dense<0.000000e+00> : vector<64xf32>
    %214 = vector.multi_reduction <add>, %213, %cst_71 [1] : vector<64x64xf32> to vector<64xf32>
    %215 = vector.shape_cast %214 : vector<64xf32> to vector<64x1xf32>
    %216 = tpu.reciprocal %215 {approx = true} : vector<64x1xf32> -> vector<64x1xf32>
    %217 = vector.broadcast %216 : vector<64x1xf32> to vector<64x64xf32>
    %218 = arith.mulf %213, %217 : vector<64x64xf32>
    %219 = arith.truncf %202 : vector<64x8xf32> to vector<64x8xbf16>
    %220 = arith.truncf %218 : vector<64x64xf32> to vector<64x64xbf16>
    %cst_72 = arith.constant dense<0.000000e+00> : vector<64x8xf32>
    %221 = tpu.matmul %220, %219, %cst_72 {dimension_numbers = #tpu.dot_dimension_numbers<[1], [0], [0], [1], [0, 0, 1, 1], [], []>} : vector<64x64xbf16>, vector<64x8xbf16>, vector<64x8xf32> -> vector<64x8xf32>
    %222 = vector.extract_strided_slice %221 {offsets = [0, 0], sizes = [16, 8], strides = [1, 1]} : vector<64x8xf32> to vector<16x8xf32>
    %223 = vector.extract_strided_slice %221 {offsets = [16, 0], sizes = [16, 8], strides = [1, 1]} : vector<64x8xf32> to vector<16x8xf32>
    %224 = vector.extract_strided_slice %221 {offsets = [32, 0], sizes = [16, 8], strides = [1, 1]} : vector<64x8xf32> to vector<16x8xf32>
    %225 = vector.extract_strided_slice %221 {offsets = [48, 0], sizes = [16, 8], strides = [1, 1]} : vector<64x8xf32> to vector<16x8xf32>
    %226 = tpu.concatenate %222, %223, %224, %225 in 1 : vector<16x8xf32>, vector<16x8xf32>, vector<16x8xf32>, vector<16x8xf32> -> vector<16x32xf32>
    %227 = arith.truncf %226 : vector<16x32xf32> to vector<16x32xbf16>
    %cst_73 = arith.constant dense<0.000000e+00> : vector<16x32xf32>
    %228 = tpu.matmul %227, %179, %cst_73 {dimension_numbers = #tpu.dot_dimension_numbers<[1], [0], [0], [1], [0, 0, 1, 1], [], []>} : vector<16x32xbf16>, vector<32x32xbf16>, vector<16x32xf32> -> vector<16x32xf32>
    %229 = vector.broadcast %180 : vector<1x32xf32> to vector<16x32xf32>
    %230 = arith.addf %228, %229 : vector<16x32xf32>
    %231 = arith.addf %230, %175 : vector<16x32xf32>
    %c0_74 = arith.constant 0 : index
    %c608 = arith.constant 608 : index
    %232 = vector.load %arg8[%c0_74, %c608] : memref<1x1858xf32, #tpu.memory_space<vmem>>, vector<1x32xf32>
    %c0_75 = arith.constant 0 : index
    %c640 = arith.constant 640 : index
    %233 = vector.load %arg8[%c0_75, %c640] : memref<1x1858xf32, #tpu.memory_space<vmem>>, vector<1x32xf32>
    %cst_76 = arith.constant dense<0.000000e+00> : vector<16xf32>
    %234 = vector.multi_reduction <add>, %231, %cst_76 [1] : vector<16x32xf32> to vector<16xf32>
    %235 = vector.shape_cast %234 : vector<16xf32> to vector<16x1xf32>
    %cst_77 = arith.constant 3.200000e+01 : f32
    %236 = vector.broadcast %cst_77 : f32 to vector<16x1xf32>
    %237 = arith.divf %235, %236 : vector<16x1xf32>
    %238 = vector.broadcast %237 : vector<16x1xf32> to vector<16x32xf32>
    %239 = arith.subf %231, %238 : vector<16x32xf32>
    %240 = arith.mulf %239, %239 : vector<16x32xf32>
    %cst_78 = arith.constant dense<0.000000e+00> : vector<16xf32>
    %241 = vector.multi_reduction <add>, %240, %cst_78 [1] : vector<16x32xf32> to vector<16xf32>
    %242 = vector.shape_cast %241 : vector<16xf32> to vector<16x1xf32>
    %cst_79 = arith.constant 3.200000e+01 : f32
    %243 = vector.broadcast %cst_79 : f32 to vector<16x1xf32>
    %244 = arith.divf %242, %243 : vector<16x1xf32>
    %cst_80 = arith.constant 9.99999996E-13 : f32
    %245 = vector.broadcast %cst_80 : f32 to vector<16x1xf32>
    %246 = arith.addf %244, %245 : vector<16x1xf32>
    %247 = math.rsqrt %246 : vector<16x1xf32>
    %248 = vector.broadcast %247 : vector<16x1xf32> to vector<16x32xf32>
    %249 = arith.mulf %239, %248 : vector<16x32xf32>
    %250 = vector.broadcast %232 : vector<1x32xf32> to vector<16x32xf32>
    %251 = arith.mulf %249, %250 : vector<16x32xf32>
    %252 = vector.broadcast %233 : vector<1x32xf32> to vector<16x32xf32>
    %253 = arith.addf %251, %252 : vector<16x32xf32>
    %c0_81 = arith.constant 0 : index
    %c104 = arith.constant 104 : index
    %254 = vector.load %arg2[%c0_81, %c104] : memref<72x280xf32, #tpu.memory_space<vmem>>, vector<64x40xf32>
    %c0_82 = arith.constant 0 : index
    %c320_83 = arith.constant 320 : index
    %255 = vector.load %arg6[%c0_82, %c320_83] : memref<32x994xbf16, #tpu.memory_space<vmem>>, vector<32x32xbf16>
    %c0_84 = arith.constant 0 : index
    %c672 = arith.constant 672 : index
    %256 = vector.load %arg8[%c0_84, %c672] : memref<1x1858xf32, #tpu.memory_space<vmem>>, vector<1x32xf32>
    %c0_85 = arith.constant 0 : index
    %c352_86 = arith.constant 352 : index
    %257 = vector.load %arg6[%c0_85, %c352_86] : memref<32x994xbf16, #tpu.memory_space<vmem>>, vector<32x64xbf16>
    %c0_87 = arith.constant 0 : index
    %c704 = arith.constant 704 : index
    %258 = vector.load %arg8[%c0_87, %c704] : memref<1x1858xf32, #tpu.memory_space<vmem>>, vector<1x64xf32>
    %c0_88 = arith.constant 0 : index
    %c416_89 = arith.constant 416 : index
    %259 = vector.load %arg6[%c0_88, %c416_89] : memref<32x994xbf16, #tpu.memory_space<vmem>>, vector<32x32xbf16>
    %c0_90 = arith.constant 0 : index
    %c768 = arith.constant 768 : index
    %260 = vector.load %arg8[%c0_90, %c768] : memref<1x1858xf32, #tpu.memory_space<vmem>>, vector<1x32xf32>
    %261 = arith.truncf %253 : vector<16x32xf32> to vector<16x32xbf16>
    %cst_91 = arith.constant dense<0.000000e+00> : vector<16x32xf32>
    %262 = tpu.matmul %261, %255, %cst_91 {dimension_numbers = #tpu.dot_dimension_numbers<[1], [0], [0], [1], [0, 0, 1, 1], [], []>} : vector<16x32xbf16>, vector<32x32xbf16>, vector<16x32xf32> -> vector<16x32xf32>
    %263 = vector.broadcast %256 : vector<1x32xf32> to vector<16x32xf32>
    %264 = arith.addf %262, %263 : vector<16x32xf32>
    %265 = arith.truncf %152 : vector<10x32xf32> to vector<10x32xbf16>
    %cst_92 = arith.constant dense<0.000000e+00> : vector<10x64xf32>
    %266 = tpu.matmul %265, %257, %cst_92 {dimension_numbers = #tpu.dot_dimension_numbers<[1], [0], [0], [1], [0, 0, 1, 1], [], []>} : vector<10x32xbf16>, vector<32x64xbf16>, vector<10x64xf32> -> vector<10x64xf32>
    %267 = vector.broadcast %258 : vector<1x64xf32> to vector<10x64xf32>
    %268 = arith.addf %266, %267 : vector<10x64xf32>
    %269 = vector.extract_strided_slice %268 {offsets = [0, 0], sizes = [10, 32], strides = [1, 1]} : vector<10x64xf32> to vector<10x32xf32>
    %270 = vector.extract_strided_slice %268 {offsets = [0, 32], sizes = [10, 32], strides = [1, 1]} : vector<10x64xf32> to vector<10x32xf32>
    %271 = vector.extract_strided_slice %264 {offsets = [0, 0], sizes = [16, 8], strides = [1, 1]} : vector<16x32xf32> to vector<16x8xf32>
    %272 = vector.extract_strided_slice %264 {offsets = [0, 8], sizes = [16, 8], strides = [1, 1]} : vector<16x32xf32> to vector<16x8xf32>
    %273 = vector.extract_strided_slice %264 {offsets = [0, 16], sizes = [16, 8], strides = [1, 1]} : vector<16x32xf32> to vector<16x8xf32>
    %274 = vector.extract_strided_slice %264 {offsets = [0, 24], sizes = [16, 8], strides = [1, 1]} : vector<16x32xf32> to vector<16x8xf32>
    %275 = tpu.concatenate %271, %272, %273, %274 in 0 : vector<16x8xf32>, vector<16x8xf32>, vector<16x8xf32>, vector<16x8xf32> -> vector<64x8xf32>
    %276 = vector.extract_strided_slice %269 {offsets = [0, 0], sizes = [10, 8], strides = [1, 1]} : vector<10x32xf32> to vector<10x8xf32>
    %277 = vector.extract_strided_slice %269 {offsets = [0, 8], sizes = [10, 8], strides = [1, 1]} : vector<10x32xf32> to vector<10x8xf32>
    %278 = vector.extract_strided_slice %269 {offsets = [0, 16], sizes = [10, 8], strides = [1, 1]} : vector<10x32xf32> to vector<10x8xf32>
    %279 = vector.extract_strided_slice %269 {offsets = [0, 24], sizes = [10, 8], strides = [1, 1]} : vector<10x32xf32> to vector<10x8xf32>
    %280 = tpu.concatenate %276, %277, %278, %279 in 0 : vector<10x8xf32>, vector<10x8xf32>, vector<10x8xf32>, vector<10x8xf32> -> vector<40x8xf32>
    %281 = vector.extract_strided_slice %270 {offsets = [0, 0], sizes = [10, 8], strides = [1, 1]} : vector<10x32xf32> to vector<10x8xf32>
    %282 = vector.extract_strided_slice %270 {offsets = [0, 8], sizes = [10, 8], strides = [1, 1]} : vector<10x32xf32> to vector<10x8xf32>
    %283 = vector.extract_strided_slice %270 {offsets = [0, 16], sizes = [10, 8], strides = [1, 1]} : vector<10x32xf32> to vector<10x8xf32>
    %284 = vector.extract_strided_slice %270 {offsets = [0, 24], sizes = [10, 8], strides = [1, 1]} : vector<10x32xf32> to vector<10x8xf32>
    %285 = tpu.concatenate %281, %282, %283, %284 in 0 : vector<10x8xf32>, vector<10x8xf32>, vector<10x8xf32>, vector<10x8xf32> -> vector<40x8xf32>
    %286 = arith.truncf %275 : vector<64x8xf32> to vector<64x8xbf16>
    %287 = arith.truncf %280 : vector<40x8xf32> to vector<40x8xbf16>
    %cst_93 = arith.constant dense<0.000000e+00> : vector<64x40xf32>
    %288 = tpu.matmul %286, %287, %cst_93 {dimension_numbers = #tpu.dot_dimension_numbers<[1], [1], [0], [0], [0, 0, 1, 0], [], []>} : vector<64x8xbf16>, vector<40x8xbf16>, vector<64x40xf32> -> vector<64x40xf32>
    %cst_94 = arith.constant 0.353553385 : f32
    %289 = vector.broadcast %cst_94 : f32 to vector<64x40xf32>
    %290 = arith.mulf %288, %289 : vector<64x40xf32>
    %291 = arith.addf %290, %254 : vector<64x40xf32>
    %cst_95 = arith.constant dense<0xFF800000> : vector<64xf32>
    %292 = vector.multi_reduction <maximumf>, %291, %cst_95 [1] : vector<64x40xf32> to vector<64xf32>
    %293 = vector.shape_cast %292 : vector<64xf32> to vector<64x1xf32>
    %294 = vector.broadcast %293 : vector<64x1xf32> to vector<64x40xf32>
    %295 = arith.subf %291, %294 : vector<64x40xf32>
    %296 = math.exp %295 : vector<64x40xf32>
    %cst_96 = arith.constant dense<0.000000e+00> : vector<64xf32>
    %297 = vector.multi_reduction <add>, %296, %cst_96 [1] : vector<64x40xf32> to vector<64xf32>
    %298 = vector.shape_cast %297 : vector<64xf32> to vector<64x1xf32>
    %299 = tpu.reciprocal %298 {approx = true} : vector<64x1xf32> -> vector<64x1xf32>
    %300 = vector.broadcast %299 : vector<64x1xf32> to vector<64x40xf32>
    %301 = arith.mulf %296, %300 : vector<64x40xf32>
    %302 = arith.truncf %285 : vector<40x8xf32> to vector<40x8xbf16>
    %303 = arith.truncf %301 : vector<64x40xf32> to vector<64x40xbf16>
    %cst_97 = arith.constant dense<0.000000e+00> : vector<64x8xf32>
    %304 = tpu.matmul %303, %302, %cst_97 {dimension_numbers = #tpu.dot_dimension_numbers<[1], [0], [0], [1], [0, 0, 1, 1], [], []>} : vector<64x40xbf16>, vector<40x8xbf16>, vector<64x8xf32> -> vector<64x8xf32>
    %305 = vector.extract_strided_slice %304 {offsets = [0, 0], sizes = [16, 8], strides = [1, 1]} : vector<64x8xf32> to vector<16x8xf32>
    %306 = vector.extract_strided_slice %304 {offsets = [16, 0], sizes = [16, 8], strides = [1, 1]} : vector<64x8xf32> to vector<16x8xf32>
    %307 = vector.extract_strided_slice %304 {offsets = [32, 0], sizes = [16, 8], strides = [1, 1]} : vector<64x8xf32> to vector<16x8xf32>
    %308 = vector.extract_strided_slice %304 {offsets = [48, 0], sizes = [16, 8], strides = [1, 1]} : vector<64x8xf32> to vector<16x8xf32>
    %309 = tpu.concatenate %305, %306, %307, %308 in 1 : vector<16x8xf32>, vector<16x8xf32>, vector<16x8xf32>, vector<16x8xf32> -> vector<16x32xf32>
    %310 = arith.truncf %309 : vector<16x32xf32> to vector<16x32xbf16>
    %cst_98 = arith.constant dense<0.000000e+00> : vector<16x32xf32>
    %311 = tpu.matmul %310, %259, %cst_98 {dimension_numbers = #tpu.dot_dimension_numbers<[1], [0], [0], [1], [0, 0, 1, 1], [], []>} : vector<16x32xbf16>, vector<32x32xbf16>, vector<16x32xf32> -> vector<16x32xf32>
    %312 = vector.broadcast %260 : vector<1x32xf32> to vector<16x32xf32>
    %313 = arith.addf %311, %312 : vector<16x32xf32>
    %314 = arith.addf %313, %253 : vector<16x32xf32>
    %c0_99 = arith.constant 0 : index
    %c800 = arith.constant 800 : index
    %315 = vector.load %arg8[%c0_99, %c800] : memref<1x1858xf32, #tpu.memory_space<vmem>>, vector<1x32xf32>
    %c0_100 = arith.constant 0 : index
    %c832 = arith.constant 832 : index
    %316 = vector.load %arg8[%c0_100, %c832] : memref<1x1858xf32, #tpu.memory_space<vmem>>, vector<1x32xf32>
    %cst_101 = arith.constant dense<0.000000e+00> : vector<16xf32>
    %317 = vector.multi_reduction <add>, %314, %cst_101 [1] : vector<16x32xf32> to vector<16xf32>
    %318 = vector.shape_cast %317 : vector<16xf32> to vector<16x1xf32>
    %cst_102 = arith.constant 3.200000e+01 : f32
    %319 = vector.broadcast %cst_102 : f32 to vector<16x1xf32>
    %320 = arith.divf %318, %319 : vector<16x1xf32>
    %321 = vector.broadcast %320 : vector<16x1xf32> to vector<16x32xf32>
    %322 = arith.subf %314, %321 : vector<16x32xf32>
    %323 = arith.mulf %322, %322 : vector<16x32xf32>
    %cst_103 = arith.constant dense<0.000000e+00> : vector<16xf32>
    %324 = vector.multi_reduction <add>, %323, %cst_103 [1] : vector<16x32xf32> to vector<16xf32>
    %325 = vector.shape_cast %324 : vector<16xf32> to vector<16x1xf32>
    %cst_104 = arith.constant 3.200000e+01 : f32
    %326 = vector.broadcast %cst_104 : f32 to vector<16x1xf32>
    %327 = arith.divf %325, %326 : vector<16x1xf32>
    %cst_105 = arith.constant 9.99999996E-13 : f32
    %328 = vector.broadcast %cst_105 : f32 to vector<16x1xf32>
    %329 = arith.addf %327, %328 : vector<16x1xf32>
    %330 = math.rsqrt %329 : vector<16x1xf32>
    %331 = vector.broadcast %330 : vector<16x1xf32> to vector<16x32xf32>
    %332 = arith.mulf %322, %331 : vector<16x32xf32>
    %333 = vector.broadcast %315 : vector<1x32xf32> to vector<16x32xf32>
    %334 = arith.mulf %332, %333 : vector<16x32xf32>
    %335 = vector.broadcast %316 : vector<1x32xf32> to vector<16x32xf32>
    %336 = arith.addf %334, %335 : vector<16x32xf32>
    %c0_106 = arith.constant 0 : index
    %c448_107 = arith.constant 448 : index
    %337 = vector.load %arg6[%c0_106, %c448_107] : memref<32x994xbf16, #tpu.memory_space<vmem>>, vector<32x64xbf16>
    %338 = arith.truncf %336 : vector<16x32xf32> to vector<16x32xbf16>
    %cst_108 = arith.constant dense<0.000000e+00> : vector<16x64xf32>
    %339 = tpu.matmul %338, %337, %cst_108 {dimension_numbers = #tpu.dot_dimension_numbers<[1], [0], [0], [1], [0, 0, 1, 1], [], []>} : vector<16x32xbf16>, vector<32x64xbf16>, vector<16x64xf32> -> vector<16x64xf32>
    %c0_109 = arith.constant 0 : index
    %c864 = arith.constant 864 : index
    %340 = vector.load %arg8[%c0_109, %c864] : memref<1x1858xf32, #tpu.memory_space<vmem>>, vector<1x64xf32>
    %341 = vector.broadcast %340 : vector<1x64xf32> to vector<16x64xf32>
    %342 = arith.addf %339, %341 : vector<16x64xf32>
    %343 = arith.mulf %342, %342 : vector<16x64xf32>
    %344 = arith.mulf %342, %343 : vector<16x64xf32>
    %cst_110 = arith.constant 4.471500e-02 : f32
    %345 = vector.broadcast %cst_110 : f32 to vector<16x64xf32>
    %346 = arith.mulf %345, %344 : vector<16x64xf32>
    %347 = arith.addf %342, %346 : vector<16x64xf32>
    %cst_111 = arith.constant 0.797884583 : f32
    %348 = vector.broadcast %cst_111 : f32 to vector<16x64xf32>
    %349 = arith.mulf %348, %347 : vector<16x64xf32>
    %350 = math.tanh %349 : vector<16x64xf32>
    %cst_112 = arith.constant 1.000000e+00 : f32
    %351 = vector.broadcast %cst_112 : f32 to vector<16x64xf32>
    %352 = arith.addf %351, %350 : vector<16x64xf32>
    %cst_113 = arith.constant 5.000000e-01 : f32
    %353 = vector.broadcast %cst_113 : f32 to vector<16x64xf32>
    %354 = arith.mulf %353, %352 : vector<16x64xf32>
    %355 = arith.mulf %342, %354 : vector<16x64xf32>
    %c0_114 = arith.constant 0 : index
    %c32_115 = arith.constant 32 : index
    %356 = vector.load %arg7[%c0_114, %c32_115] : memref<64x96xbf16, #tpu.memory_space<vmem>>, vector<64x32xbf16>
    %357 = arith.truncf %355 : vector<16x64xf32> to vector<16x64xbf16>
    %cst_116 = arith.constant dense<0.000000e+00> : vector<16x32xf32>
    %358 = tpu.matmul %357, %356, %cst_116 {dimension_numbers = #tpu.dot_dimension_numbers<[1], [0], [0], [1], [0, 0, 1, 1], [], []>} : vector<16x64xbf16>, vector<64x32xbf16>, vector<16x32xf32> -> vector<16x32xf32>
    %c0_117 = arith.constant 0 : index
    %c928 = arith.constant 928 : index
    %359 = vector.load %arg8[%c0_117, %c928] : memref<1x1858xf32, #tpu.memory_space<vmem>>, vector<1x32xf32>
    %360 = vector.broadcast %359 : vector<1x32xf32> to vector<16x32xf32>
    %361 = arith.addf %358, %360 : vector<16x32xf32>
    %362 = arith.addf %361, %336 : vector<16x32xf32>
    %c0_118 = arith.constant 0 : index
    %c960 = arith.constant 960 : index
    %363 = vector.load %arg8[%c0_118, %c960] : memref<1x1858xf32, #tpu.memory_space<vmem>>, vector<1x32xf32>
    %c0_119 = arith.constant 0 : index
    %c992 = arith.constant 992 : index
    %364 = vector.load %arg8[%c0_119, %c992] : memref<1x1858xf32, #tpu.memory_space<vmem>>, vector<1x32xf32>
    %cst_120 = arith.constant dense<0.000000e+00> : vector<16xf32>
    %365 = vector.multi_reduction <add>, %362, %cst_120 [1] : vector<16x32xf32> to vector<16xf32>
    %366 = vector.shape_cast %365 : vector<16xf32> to vector<16x1xf32>
    %cst_121 = arith.constant 3.200000e+01 : f32
    %367 = vector.broadcast %cst_121 : f32 to vector<16x1xf32>
    %368 = arith.divf %366, %367 : vector<16x1xf32>
    %369 = vector.broadcast %368 : vector<16x1xf32> to vector<16x32xf32>
    %370 = arith.subf %362, %369 : vector<16x32xf32>
    %371 = arith.mulf %370, %370 : vector<16x32xf32>
    %cst_122 = arith.constant dense<0.000000e+00> : vector<16xf32>
    %372 = vector.multi_reduction <add>, %371, %cst_122 [1] : vector<16x32xf32> to vector<16xf32>
    %373 = vector.shape_cast %372 : vector<16xf32> to vector<16x1xf32>
    %cst_123 = arith.constant 3.200000e+01 : f32
    %374 = vector.broadcast %cst_123 : f32 to vector<16x1xf32>
    %375 = arith.divf %373, %374 : vector<16x1xf32>
    %cst_124 = arith.constant 9.99999996E-13 : f32
    %376 = vector.broadcast %cst_124 : f32 to vector<16x1xf32>
    %377 = arith.addf %375, %376 : vector<16x1xf32>
    %378 = math.rsqrt %377 : vector<16x1xf32>
    %379 = vector.broadcast %378 : vector<16x1xf32> to vector<16x32xf32>
    %380 = arith.mulf %370, %379 : vector<16x32xf32>
    %381 = vector.broadcast %363 : vector<1x32xf32> to vector<16x32xf32>
    %382 = arith.mulf %380, %381 : vector<16x32xf32>
    %383 = vector.broadcast %364 : vector<1x32xf32> to vector<16x32xf32>
    %384 = arith.addf %382, %383 : vector<16x32xf32>
    %c16 = arith.constant 16 : index
    %c0_125 = arith.constant 0 : index
    %385 = vector.load %arg1[%c16, %c0_125] : memref<34x32xf32, #tpu.memory_space<vmem>>, vector<18x32xf32>
    %c0_126 = arith.constant 0 : index
    %c1024 = arith.constant 1024 : index
    %386 = vector.load %arg8[%c0_126, %c1024] : memref<1x1858xf32, #tpu.memory_space<vmem>>, vector<1x32xf32>
    %c0_127 = arith.constant 0 : index
    %c1056 = arith.constant 1056 : index
    %387 = vector.load %arg8[%c0_127, %c1056] : memref<1x1858xf32, #tpu.memory_space<vmem>>, vector<1x32xf32>
    %cst_128 = arith.constant dense<0.000000e+00> : vector<18xf32>
    %388 = vector.multi_reduction <add>, %385, %cst_128 [1] : vector<18x32xf32> to vector<18xf32>
    %389 = vector.shape_cast %388 : vector<18xf32> to vector<18x1xf32>
    %cst_129 = arith.constant 3.200000e+01 : f32
    %390 = vector.broadcast %cst_129 : f32 to vector<18x1xf32>
    %391 = arith.divf %389, %390 : vector<18x1xf32>
    %392 = vector.broadcast %391 : vector<18x1xf32> to vector<18x32xf32>
    %393 = arith.subf %385, %392 : vector<18x32xf32>
    %394 = arith.mulf %393, %393 : vector<18x32xf32>
    %cst_130 = arith.constant dense<0.000000e+00> : vector<18xf32>
    %395 = vector.multi_reduction <add>, %394, %cst_130 [1] : vector<18x32xf32> to vector<18xf32>
    %396 = vector.shape_cast %395 : vector<18xf32> to vector<18x1xf32>
    %cst_131 = arith.constant 3.200000e+01 : f32
    %397 = vector.broadcast %cst_131 : f32 to vector<18x1xf32>
    %398 = arith.divf %396, %397 : vector<18x1xf32>
    %cst_132 = arith.constant 9.99999996E-13 : f32
    %399 = vector.broadcast %cst_132 : f32 to vector<18x1xf32>
    %400 = arith.addf %398, %399 : vector<18x1xf32>
    %401 = math.rsqrt %400 : vector<18x1xf32>
    %402 = vector.broadcast %401 : vector<18x1xf32> to vector<18x32xf32>
    %403 = arith.mulf %393, %402 : vector<18x32xf32>
    %404 = vector.broadcast %386 : vector<1x32xf32> to vector<18x32xf32>
    %405 = arith.mulf %403, %404 : vector<18x32xf32>
    %406 = vector.broadcast %387 : vector<1x32xf32> to vector<18x32xf32>
    %407 = arith.addf %405, %406 : vector<18x32xf32>
    %c0_133 = arith.constant 0 : index
    %c144 = arith.constant 144 : index
    %408 = vector.load %arg2[%c0_133, %c144] : memref<72x280xf32, #tpu.memory_space<vmem>>, vector<72x72xf32>
    %c0_134 = arith.constant 0 : index
    %c512 = arith.constant 512 : index
    %409 = vector.load %arg6[%c0_134, %c512] : memref<32x994xbf16, #tpu.memory_space<vmem>>, vector<32x96xbf16>
    %c0_135 = arith.constant 0 : index
    %c1088 = arith.constant 1088 : index
    %410 = vector.load %arg8[%c0_135, %c1088] : memref<1x1858xf32, #tpu.memory_space<vmem>>, vector<1x96xf32>
    %c0_136 = arith.constant 0 : index
    %c608_137 = arith.constant 608 : index
    %411 = vector.load %arg6[%c0_136, %c608_137] : memref<32x994xbf16, #tpu.memory_space<vmem>>, vector<32x32xbf16>
    %c0_138 = arith.constant 0 : index
    %c1184 = arith.constant 1184 : index
    %412 = vector.load %arg8[%c0_138, %c1184] : memref<1x1858xf32, #tpu.memory_space<vmem>>, vector<1x32xf32>
    %413 = arith.truncf %407 : vector<18x32xf32> to vector<18x32xbf16>
    %cst_139 = arith.constant dense<0.000000e+00> : vector<18x96xf32>
    %414 = tpu.matmul %413, %409, %cst_139 {dimension_numbers = #tpu.dot_dimension_numbers<[1], [0], [0], [1], [0, 0, 1, 1], [], []>} : vector<18x32xbf16>, vector<32x96xbf16>, vector<18x96xf32> -> vector<18x96xf32>
    %415 = vector.broadcast %410 : vector<1x96xf32> to vector<18x96xf32>
    %416 = arith.addf %414, %415 : vector<18x96xf32>
    %417 = vector.extract_strided_slice %416 {offsets = [0, 0], sizes = [18, 32], strides = [1, 1]} : vector<18x96xf32> to vector<18x32xf32>
    %418 = vector.extract_strided_slice %416 {offsets = [0, 32], sizes = [18, 32], strides = [1, 1]} : vector<18x96xf32> to vector<18x32xf32>
    %419 = vector.extract_strided_slice %416 {offsets = [0, 64], sizes = [18, 32], strides = [1, 1]} : vector<18x96xf32> to vector<18x32xf32>
    %420 = vector.extract_strided_slice %417 {offsets = [0, 0], sizes = [18, 8], strides = [1, 1]} : vector<18x32xf32> to vector<18x8xf32>
    %421 = vector.extract_strided_slice %417 {offsets = [0, 8], sizes = [18, 8], strides = [1, 1]} : vector<18x32xf32> to vector<18x8xf32>
    %422 = vector.extract_strided_slice %417 {offsets = [0, 16], sizes = [18, 8], strides = [1, 1]} : vector<18x32xf32> to vector<18x8xf32>
    %423 = vector.extract_strided_slice %417 {offsets = [0, 24], sizes = [18, 8], strides = [1, 1]} : vector<18x32xf32> to vector<18x8xf32>
    %424 = tpu.concatenate %420, %421, %422, %423 in 0 : vector<18x8xf32>, vector<18x8xf32>, vector<18x8xf32>, vector<18x8xf32> -> vector<72x8xf32>
    %425 = vector.extract_strided_slice %418 {offsets = [0, 0], sizes = [18, 8], strides = [1, 1]} : vector<18x32xf32> to vector<18x8xf32>
    %426 = vector.extract_strided_slice %418 {offsets = [0, 8], sizes = [18, 8], strides = [1, 1]} : vector<18x32xf32> to vector<18x8xf32>
    %427 = vector.extract_strided_slice %418 {offsets = [0, 16], sizes = [18, 8], strides = [1, 1]} : vector<18x32xf32> to vector<18x8xf32>
    %428 = vector.extract_strided_slice %418 {offsets = [0, 24], sizes = [18, 8], strides = [1, 1]} : vector<18x32xf32> to vector<18x8xf32>
    %429 = tpu.concatenate %425, %426, %427, %428 in 0 : vector<18x8xf32>, vector<18x8xf32>, vector<18x8xf32>, vector<18x8xf32> -> vector<72x8xf32>
    %430 = vector.extract_strided_slice %419 {offsets = [0, 0], sizes = [18, 8], strides = [1, 1]} : vector<18x32xf32> to vector<18x8xf32>
    %431 = vector.extract_strided_slice %419 {offsets = [0, 8], sizes = [18, 8], strides = [1, 1]} : vector<18x32xf32> to vector<18x8xf32>
    %432 = vector.extract_strided_slice %419 {offsets = [0, 16], sizes = [18, 8], strides = [1, 1]} : vector<18x32xf32> to vector<18x8xf32>
    %433 = vector.extract_strided_slice %419 {offsets = [0, 24], sizes = [18, 8], strides = [1, 1]} : vector<18x32xf32> to vector<18x8xf32>
    %434 = tpu.concatenate %430, %431, %432, %433 in 0 : vector<18x8xf32>, vector<18x8xf32>, vector<18x8xf32>, vector<18x8xf32> -> vector<72x8xf32>
    %435 = arith.truncf %424 : vector<72x8xf32> to vector<72x8xbf16>
    %436 = arith.truncf %429 : vector<72x8xf32> to vector<72x8xbf16>
    %cst_140 = arith.constant dense<0.000000e+00> : vector<72x72xf32>
    %437 = tpu.matmul %435, %436, %cst_140 {dimension_numbers = #tpu.dot_dimension_numbers<[1], [1], [0], [0], [0, 0, 1, 0], [], []>} : vector<72x8xbf16>, vector<72x8xbf16>, vector<72x72xf32> -> vector<72x72xf32>
    %cst_141 = arith.constant 0.353553385 : f32
    %438 = vector.broadcast %cst_141 : f32 to vector<72x72xf32>
    %439 = arith.mulf %437, %438 : vector<72x72xf32>
    %440 = arith.addf %439, %408 : vector<72x72xf32>
    %cst_142 = arith.constant dense<0xFF800000> : vector<72xf32>
    %441 = vector.multi_reduction <maximumf>, %440, %cst_142 [1] : vector<72x72xf32> to vector<72xf32>
    %442 = vector.shape_cast %441 : vector<72xf32> to vector<72x1xf32>
    %443 = vector.broadcast %442 : vector<72x1xf32> to vector<72x72xf32>
    %444 = arith.subf %440, %443 : vector<72x72xf32>
    %445 = math.exp %444 : vector<72x72xf32>
    %cst_143 = arith.constant dense<0.000000e+00> : vector<72xf32>
    %446 = vector.multi_reduction <add>, %445, %cst_143 [1] : vector<72x72xf32> to vector<72xf32>
    %447 = vector.shape_cast %446 : vector<72xf32> to vector<72x1xf32>
    %448 = tpu.reciprocal %447 {approx = true} : vector<72x1xf32> -> vector<72x1xf32>
    %449 = vector.broadcast %448 : vector<72x1xf32> to vector<72x72xf32>
    %450 = arith.mulf %445, %449 : vector<72x72xf32>
    %451 = arith.truncf %434 : vector<72x8xf32> to vector<72x8xbf16>
    %452 = arith.truncf %450 : vector<72x72xf32> to vector<72x72xbf16>
    %cst_144 = arith.constant dense<0.000000e+00> : vector<72x8xf32>
    %453 = tpu.matmul %452, %451, %cst_144 {dimension_numbers = #tpu.dot_dimension_numbers<[1], [0], [0], [1], [0, 0, 1, 1], [], []>} : vector<72x72xbf16>, vector<72x8xbf16>, vector<72x8xf32> -> vector<72x8xf32>
    %454 = vector.extract_strided_slice %453 {offsets = [0, 0], sizes = [18, 8], strides = [1, 1]} : vector<72x8xf32> to vector<18x8xf32>
    %455 = vector.extract_strided_slice %453 {offsets = [18, 0], sizes = [18, 8], strides = [1, 1]} : vector<72x8xf32> to vector<18x8xf32>
    %456 = vector.extract_strided_slice %453 {offsets = [36, 0], sizes = [18, 8], strides = [1, 1]} : vector<72x8xf32> to vector<18x8xf32>
    %457 = vector.extract_strided_slice %453 {offsets = [54, 0], sizes = [18, 8], strides = [1, 1]} : vector<72x8xf32> to vector<18x8xf32>
    %458 = tpu.concatenate %454, %455, %456, %457 in 1 : vector<18x8xf32>, vector<18x8xf32>, vector<18x8xf32>, vector<18x8xf32> -> vector<18x32xf32>
    %459 = arith.truncf %458 : vector<18x32xf32> to vector<18x32xbf16>
    %cst_145 = arith.constant dense<0.000000e+00> : vector<18x32xf32>
    %460 = tpu.matmul %459, %411, %cst_145 {dimension_numbers = #tpu.dot_dimension_numbers<[1], [0], [0], [1], [0, 0, 1, 1], [], []>} : vector<18x32xbf16>, vector<32x32xbf16>, vector<18x32xf32> -> vector<18x32xf32>
    %461 = vector.broadcast %412 : vector<1x32xf32> to vector<18x32xf32>
    %462 = arith.addf %460, %461 : vector<18x32xf32>
    %463 = arith.addf %462, %407 : vector<18x32xf32>
    %c0_146 = arith.constant 0 : index
    %c1216 = arith.constant 1216 : index
    %464 = vector.load %arg8[%c0_146, %c1216] : memref<1x1858xf32, #tpu.memory_space<vmem>>, vector<1x32xf32>
    %c0_147 = arith.constant 0 : index
    %c1248 = arith.constant 1248 : index
    %465 = vector.load %arg8[%c0_147, %c1248] : memref<1x1858xf32, #tpu.memory_space<vmem>>, vector<1x32xf32>
    %cst_148 = arith.constant dense<0.000000e+00> : vector<18xf32>
    %466 = vector.multi_reduction <add>, %463, %cst_148 [1] : vector<18x32xf32> to vector<18xf32>
    %467 = vector.shape_cast %466 : vector<18xf32> to vector<18x1xf32>
    %cst_149 = arith.constant 3.200000e+01 : f32
    %468 = vector.broadcast %cst_149 : f32 to vector<18x1xf32>
    %469 = arith.divf %467, %468 : vector<18x1xf32>
    %470 = vector.broadcast %469 : vector<18x1xf32> to vector<18x32xf32>
    %471 = arith.subf %463, %470 : vector<18x32xf32>
    %472 = arith.mulf %471, %471 : vector<18x32xf32>
    %cst_150 = arith.constant dense<0.000000e+00> : vector<18xf32>
    %473 = vector.multi_reduction <add>, %472, %cst_150 [1] : vector<18x32xf32> to vector<18xf32>
    %474 = vector.shape_cast %473 : vector<18xf32> to vector<18x1xf32>
    %cst_151 = arith.constant 3.200000e+01 : f32
    %475 = vector.broadcast %cst_151 : f32 to vector<18x1xf32>
    %476 = arith.divf %474, %475 : vector<18x1xf32>
    %cst_152 = arith.constant 9.99999996E-13 : f32
    %477 = vector.broadcast %cst_152 : f32 to vector<18x1xf32>
    %478 = arith.addf %476, %477 : vector<18x1xf32>
    %479 = math.rsqrt %478 : vector<18x1xf32>
    %480 = vector.broadcast %479 : vector<18x1xf32> to vector<18x32xf32>
    %481 = arith.mulf %471, %480 : vector<18x32xf32>
    %482 = vector.broadcast %464 : vector<1x32xf32> to vector<18x32xf32>
    %483 = arith.mulf %481, %482 : vector<18x32xf32>
    %484 = vector.broadcast %465 : vector<1x32xf32> to vector<18x32xf32>
    %485 = arith.addf %483, %484 : vector<18x32xf32>
    %c0_153 = arith.constant 0 : index
    %c216 = arith.constant 216 : index
    %486 = vector.load %arg2[%c0_153, %c216] : memref<72x280xf32, #tpu.memory_space<vmem>>, vector<72x64xf32>
    %c0_154 = arith.constant 0 : index
    %c640_155 = arith.constant 640 : index
    %487 = vector.load %arg6[%c0_154, %c640_155] : memref<32x994xbf16, #tpu.memory_space<vmem>>, vector<32x32xbf16>
    %c0_156 = arith.constant 0 : index
    %c1280 = arith.constant 1280 : index
    %488 = vector.load %arg8[%c0_156, %c1280] : memref<1x1858xf32, #tpu.memory_space<vmem>>, vector<1x32xf32>
    %c0_157 = arith.constant 0 : index
    %c672_158 = arith.constant 672 : index
    %489 = vector.load %arg6[%c0_157, %c672_158] : memref<32x994xbf16, #tpu.memory_space<vmem>>, vector<32x64xbf16>
    %c0_159 = arith.constant 0 : index
    %c1312 = arith.constant 1312 : index
    %490 = vector.load %arg8[%c0_159, %c1312] : memref<1x1858xf32, #tpu.memory_space<vmem>>, vector<1x64xf32>
    %c0_160 = arith.constant 0 : index
    %c736 = arith.constant 736 : index
    %491 = vector.load %arg6[%c0_160, %c736] : memref<32x994xbf16, #tpu.memory_space<vmem>>, vector<32x32xbf16>
    %c0_161 = arith.constant 0 : index
    %c1376 = arith.constant 1376 : index
    %492 = vector.load %arg8[%c0_161, %c1376] : memref<1x1858xf32, #tpu.memory_space<vmem>>, vector<1x32xf32>
    %493 = arith.truncf %485 : vector<18x32xf32> to vector<18x32xbf16>
    %cst_162 = arith.constant dense<0.000000e+00> : vector<18x32xf32>
    %494 = tpu.matmul %493, %487, %cst_162 {dimension_numbers = #tpu.dot_dimension_numbers<[1], [0], [0], [1], [0, 0, 1, 1], [], []>} : vector<18x32xbf16>, vector<32x32xbf16>, vector<18x32xf32> -> vector<18x32xf32>
    %495 = vector.broadcast %488 : vector<1x32xf32> to vector<18x32xf32>
    %496 = arith.addf %494, %495 : vector<18x32xf32>
    %497 = arith.truncf %384 : vector<16x32xf32> to vector<16x32xbf16>
    %cst_163 = arith.constant dense<0.000000e+00> : vector<16x64xf32>
    %498 = tpu.matmul %497, %489, %cst_163 {dimension_numbers = #tpu.dot_dimension_numbers<[1], [0], [0], [1], [0, 0, 1, 1], [], []>} : vector<16x32xbf16>, vector<32x64xbf16>, vector<16x64xf32> -> vector<16x64xf32>
    %499 = vector.broadcast %490 : vector<1x64xf32> to vector<16x64xf32>
    %500 = arith.addf %498, %499 : vector<16x64xf32>
    %501 = vector.extract_strided_slice %500 {offsets = [0, 0], sizes = [16, 32], strides = [1, 1]} : vector<16x64xf32> to vector<16x32xf32>
    %502 = vector.extract_strided_slice %500 {offsets = [0, 32], sizes = [16, 32], strides = [1, 1]} : vector<16x64xf32> to vector<16x32xf32>
    %503 = vector.extract_strided_slice %496 {offsets = [0, 0], sizes = [18, 8], strides = [1, 1]} : vector<18x32xf32> to vector<18x8xf32>
    %504 = vector.extract_strided_slice %496 {offsets = [0, 8], sizes = [18, 8], strides = [1, 1]} : vector<18x32xf32> to vector<18x8xf32>
    %505 = vector.extract_strided_slice %496 {offsets = [0, 16], sizes = [18, 8], strides = [1, 1]} : vector<18x32xf32> to vector<18x8xf32>
    %506 = vector.extract_strided_slice %496 {offsets = [0, 24], sizes = [18, 8], strides = [1, 1]} : vector<18x32xf32> to vector<18x8xf32>
    %507 = tpu.concatenate %503, %504, %505, %506 in 0 : vector<18x8xf32>, vector<18x8xf32>, vector<18x8xf32>, vector<18x8xf32> -> vector<72x8xf32>
    %508 = vector.extract_strided_slice %501 {offsets = [0, 0], sizes = [16, 8], strides = [1, 1]} : vector<16x32xf32> to vector<16x8xf32>
    %509 = vector.extract_strided_slice %501 {offsets = [0, 8], sizes = [16, 8], strides = [1, 1]} : vector<16x32xf32> to vector<16x8xf32>
    %510 = vector.extract_strided_slice %501 {offsets = [0, 16], sizes = [16, 8], strides = [1, 1]} : vector<16x32xf32> to vector<16x8xf32>
    %511 = vector.extract_strided_slice %501 {offsets = [0, 24], sizes = [16, 8], strides = [1, 1]} : vector<16x32xf32> to vector<16x8xf32>
    %512 = tpu.concatenate %508, %509, %510, %511 in 0 : vector<16x8xf32>, vector<16x8xf32>, vector<16x8xf32>, vector<16x8xf32> -> vector<64x8xf32>
    %513 = vector.extract_strided_slice %502 {offsets = [0, 0], sizes = [16, 8], strides = [1, 1]} : vector<16x32xf32> to vector<16x8xf32>
    %514 = vector.extract_strided_slice %502 {offsets = [0, 8], sizes = [16, 8], strides = [1, 1]} : vector<16x32xf32> to vector<16x8xf32>
    %515 = vector.extract_strided_slice %502 {offsets = [0, 16], sizes = [16, 8], strides = [1, 1]} : vector<16x32xf32> to vector<16x8xf32>
    %516 = vector.extract_strided_slice %502 {offsets = [0, 24], sizes = [16, 8], strides = [1, 1]} : vector<16x32xf32> to vector<16x8xf32>
    %517 = tpu.concatenate %513, %514, %515, %516 in 0 : vector<16x8xf32>, vector<16x8xf32>, vector<16x8xf32>, vector<16x8xf32> -> vector<64x8xf32>
    %518 = arith.truncf %507 : vector<72x8xf32> to vector<72x8xbf16>
    %519 = arith.truncf %512 : vector<64x8xf32> to vector<64x8xbf16>
    %cst_164 = arith.constant dense<0.000000e+00> : vector<72x64xf32>
    %520 = tpu.matmul %518, %519, %cst_164 {dimension_numbers = #tpu.dot_dimension_numbers<[1], [1], [0], [0], [0, 0, 1, 0], [], []>} : vector<72x8xbf16>, vector<64x8xbf16>, vector<72x64xf32> -> vector<72x64xf32>
    %cst_165 = arith.constant 0.353553385 : f32
    %521 = vector.broadcast %cst_165 : f32 to vector<72x64xf32>
    %522 = arith.mulf %520, %521 : vector<72x64xf32>
    %523 = arith.addf %522, %486 : vector<72x64xf32>
    %cst_166 = arith.constant dense<0xFF800000> : vector<72xf32>
    %524 = vector.multi_reduction <maximumf>, %523, %cst_166 [1] : vector<72x64xf32> to vector<72xf32>
    %525 = vector.shape_cast %524 : vector<72xf32> to vector<72x1xf32>
    %526 = vector.broadcast %525 : vector<72x1xf32> to vector<72x64xf32>
    %527 = arith.subf %523, %526 : vector<72x64xf32>
    %528 = math.exp %527 : vector<72x64xf32>
    %cst_167 = arith.constant dense<0.000000e+00> : vector<72xf32>
    %529 = vector.multi_reduction <add>, %528, %cst_167 [1] : vector<72x64xf32> to vector<72xf32>
    %530 = vector.shape_cast %529 : vector<72xf32> to vector<72x1xf32>
    %531 = tpu.reciprocal %530 {approx = true} : vector<72x1xf32> -> vector<72x1xf32>
    %532 = vector.broadcast %531 : vector<72x1xf32> to vector<72x64xf32>
    %533 = arith.mulf %528, %532 : vector<72x64xf32>
    %534 = arith.truncf %517 : vector<64x8xf32> to vector<64x8xbf16>
    %535 = arith.truncf %533 : vector<72x64xf32> to vector<72x64xbf16>
    %cst_168 = arith.constant dense<0.000000e+00> : vector<72x8xf32>
    %536 = tpu.matmul %535, %534, %cst_168 {dimension_numbers = #tpu.dot_dimension_numbers<[1], [0], [0], [1], [0, 0, 1, 1], [], []>} : vector<72x64xbf16>, vector<64x8xbf16>, vector<72x8xf32> -> vector<72x8xf32>
    %537 = vector.extract_strided_slice %536 {offsets = [0, 0], sizes = [18, 8], strides = [1, 1]} : vector<72x8xf32> to vector<18x8xf32>
    %538 = vector.extract_strided_slice %536 {offsets = [18, 0], sizes = [18, 8], strides = [1, 1]} : vector<72x8xf32> to vector<18x8xf32>
    %539 = vector.extract_strided_slice %536 {offsets = [36, 0], sizes = [18, 8], strides = [1, 1]} : vector<72x8xf32> to vector<18x8xf32>
    %540 = vector.extract_strided_slice %536 {offsets = [54, 0], sizes = [18, 8], strides = [1, 1]} : vector<72x8xf32> to vector<18x8xf32>
    %541 = tpu.concatenate %537, %538, %539, %540 in 1 : vector<18x8xf32>, vector<18x8xf32>, vector<18x8xf32>, vector<18x8xf32> -> vector<18x32xf32>
    %542 = arith.truncf %541 : vector<18x32xf32> to vector<18x32xbf16>
    %cst_169 = arith.constant dense<0.000000e+00> : vector<18x32xf32>
    %543 = tpu.matmul %542, %491, %cst_169 {dimension_numbers = #tpu.dot_dimension_numbers<[1], [0], [0], [1], [0, 0, 1, 1], [], []>} : vector<18x32xbf16>, vector<32x32xbf16>, vector<18x32xf32> -> vector<18x32xf32>
    %544 = vector.broadcast %492 : vector<1x32xf32> to vector<18x32xf32>
    %545 = arith.addf %543, %544 : vector<18x32xf32>
    %546 = arith.addf %545, %485 : vector<18x32xf32>
    %c0_170 = arith.constant 0 : index
    %c1408 = arith.constant 1408 : index
    %547 = vector.load %arg8[%c0_170, %c1408] : memref<1x1858xf32, #tpu.memory_space<vmem>>, vector<1x32xf32>
    %c0_171 = arith.constant 0 : index
    %c1440 = arith.constant 1440 : index
    %548 = vector.load %arg8[%c0_171, %c1440] : memref<1x1858xf32, #tpu.memory_space<vmem>>, vector<1x32xf32>
    %cst_172 = arith.constant dense<0.000000e+00> : vector<18xf32>
    %549 = vector.multi_reduction <add>, %546, %cst_172 [1] : vector<18x32xf32> to vector<18xf32>
    %550 = vector.shape_cast %549 : vector<18xf32> to vector<18x1xf32>
    %cst_173 = arith.constant 3.200000e+01 : f32
    %551 = vector.broadcast %cst_173 : f32 to vector<18x1xf32>
    %552 = arith.divf %550, %551 : vector<18x1xf32>
    %553 = vector.broadcast %552 : vector<18x1xf32> to vector<18x32xf32>
    %554 = arith.subf %546, %553 : vector<18x32xf32>
    %555 = arith.mulf %554, %554 : vector<18x32xf32>
    %cst_174 = arith.constant dense<0.000000e+00> : vector<18xf32>
    %556 = vector.multi_reduction <add>, %555, %cst_174 [1] : vector<18x32xf32> to vector<18xf32>
    %557 = vector.shape_cast %556 : vector<18xf32> to vector<18x1xf32>
    %cst_175 = arith.constant 3.200000e+01 : f32
    %558 = vector.broadcast %cst_175 : f32 to vector<18x1xf32>
    %559 = arith.divf %557, %558 : vector<18x1xf32>
    %cst_176 = arith.constant 9.99999996E-13 : f32
    %560 = vector.broadcast %cst_176 : f32 to vector<18x1xf32>
    %561 = arith.addf %559, %560 : vector<18x1xf32>
    %562 = math.rsqrt %561 : vector<18x1xf32>
    %563 = vector.broadcast %562 : vector<18x1xf32> to vector<18x32xf32>
    %564 = arith.mulf %554, %563 : vector<18x32xf32>
    %565 = vector.broadcast %547 : vector<1x32xf32> to vector<18x32xf32>
    %566 = arith.mulf %564, %565 : vector<18x32xf32>
    %567 = vector.broadcast %548 : vector<1x32xf32> to vector<18x32xf32>
    %568 = arith.addf %566, %567 : vector<18x32xf32>
    %c0_177 = arith.constant 0 : index
    %c768_178 = arith.constant 768 : index
    %569 = vector.load %arg6[%c0_177, %c768_178] : memref<32x994xbf16, #tpu.memory_space<vmem>>, vector<32x64xbf16>
    %570 = arith.truncf %568 : vector<18x32xf32> to vector<18x32xbf16>
    %cst_179 = arith.constant dense<0.000000e+00> : vector<18x64xf32>
    %571 = tpu.matmul %570, %569, %cst_179 {dimension_numbers = #tpu.dot_dimension_numbers<[1], [0], [0], [1], [0, 0, 1, 1], [], []>} : vector<18x32xbf16>, vector<32x64xbf16>, vector<18x64xf32> -> vector<18x64xf32>
    %c0_180 = arith.constant 0 : index
    %c1472 = arith.constant 1472 : index
    %572 = vector.load %arg8[%c0_180, %c1472] : memref<1x1858xf32, #tpu.memory_space<vmem>>, vector<1x64xf32>
    %573 = vector.broadcast %572 : vector<1x64xf32> to vector<18x64xf32>
    %574 = arith.addf %571, %573 : vector<18x64xf32>
    %575 = arith.mulf %574, %574 : vector<18x64xf32>
    %576 = arith.mulf %574, %575 : vector<18x64xf32>
    %cst_181 = arith.constant 4.471500e-02 : f32
    %577 = vector.broadcast %cst_181 : f32 to vector<18x64xf32>
    %578 = arith.mulf %577, %576 : vector<18x64xf32>
    %579 = arith.addf %574, %578 : vector<18x64xf32>
    %cst_182 = arith.constant 0.797884583 : f32
    %580 = vector.broadcast %cst_182 : f32 to vector<18x64xf32>
    %581 = arith.mulf %580, %579 : vector<18x64xf32>
    %582 = math.tanh %581 : vector<18x64xf32>
    %cst_183 = arith.constant 1.000000e+00 : f32
    %583 = vector.broadcast %cst_183 : f32 to vector<18x64xf32>
    %584 = arith.addf %583, %582 : vector<18x64xf32>
    %cst_184 = arith.constant 5.000000e-01 : f32
    %585 = vector.broadcast %cst_184 : f32 to vector<18x64xf32>
    %586 = arith.mulf %585, %584 : vector<18x64xf32>
    %587 = arith.mulf %574, %586 : vector<18x64xf32>
    %c0_185 = arith.constant 0 : index
    %c64_186 = arith.constant 64 : index
    %588 = vector.load %arg7[%c0_185, %c64_186] : memref<64x96xbf16, #tpu.memory_space<vmem>>, vector<64x32xbf16>
    %589 = arith.truncf %587 : vector<18x64xf32> to vector<18x64xbf16>
    %cst_187 = arith.constant dense<0.000000e+00> : vector<18x32xf32>
    %590 = tpu.matmul %589, %588, %cst_187 {dimension_numbers = #tpu.dot_dimension_numbers<[1], [0], [0], [1], [0, 0, 1, 1], [], []>} : vector<18x64xbf16>, vector<64x32xbf16>, vector<18x32xf32> -> vector<18x32xf32>
    %c0_188 = arith.constant 0 : index
    %c1536 = arith.constant 1536 : index
    %591 = vector.load %arg8[%c0_188, %c1536] : memref<1x1858xf32, #tpu.memory_space<vmem>>, vector<1x32xf32>
    %592 = vector.broadcast %591 : vector<1x32xf32> to vector<18x32xf32>
    %593 = arith.addf %590, %592 : vector<18x32xf32>
    %594 = arith.addf %593, %568 : vector<18x32xf32>
    %c0_189 = arith.constant 0 : index
    %c1568 = arith.constant 1568 : index
    %595 = vector.load %arg8[%c0_189, %c1568] : memref<1x1858xf32, #tpu.memory_space<vmem>>, vector<1x32xf32>
    %c0_190 = arith.constant 0 : index
    %c1600 = arith.constant 1600 : index
    %596 = vector.load %arg8[%c0_190, %c1600] : memref<1x1858xf32, #tpu.memory_space<vmem>>, vector<1x32xf32>
    %cst_191 = arith.constant dense<0.000000e+00> : vector<18xf32>
    %597 = vector.multi_reduction <add>, %594, %cst_191 [1] : vector<18x32xf32> to vector<18xf32>
    %598 = vector.shape_cast %597 : vector<18xf32> to vector<18x1xf32>
    %cst_192 = arith.constant 3.200000e+01 : f32
    %599 = vector.broadcast %cst_192 : f32 to vector<18x1xf32>
    %600 = arith.divf %598, %599 : vector<18x1xf32>
    %601 = vector.broadcast %600 : vector<18x1xf32> to vector<18x32xf32>
    %602 = arith.subf %594, %601 : vector<18x32xf32>
    %603 = arith.mulf %602, %602 : vector<18x32xf32>
    %cst_193 = arith.constant dense<0.000000e+00> : vector<18xf32>
    %604 = vector.multi_reduction <add>, %603, %cst_193 [1] : vector<18x32xf32> to vector<18xf32>
    %605 = vector.shape_cast %604 : vector<18xf32> to vector<18x1xf32>
    %cst_194 = arith.constant 3.200000e+01 : f32
    %606 = vector.broadcast %cst_194 : f32 to vector<18x1xf32>
    %607 = arith.divf %605, %606 : vector<18x1xf32>
    %cst_195 = arith.constant 9.99999996E-13 : f32
    %608 = vector.broadcast %cst_195 : f32 to vector<18x1xf32>
    %609 = arith.addf %607, %608 : vector<18x1xf32>
    %610 = math.rsqrt %609 : vector<18x1xf32>
    %611 = vector.broadcast %610 : vector<18x1xf32> to vector<18x32xf32>
    %612 = arith.mulf %602, %611 : vector<18x32xf32>
    %613 = vector.broadcast %595 : vector<1x32xf32> to vector<18x32xf32>
    %614 = arith.mulf %612, %613 : vector<18x32xf32>
    %615 = vector.broadcast %596 : vector<1x32xf32> to vector<18x32xf32>
    %616 = arith.addf %614, %615 : vector<18x32xf32>
    %c0_196 = arith.constant 0 : index
    %c832_197 = arith.constant 832 : index
    %617 = vector.load %arg6[%c0_196, %c832_197] : memref<32x994xbf16, #tpu.memory_space<vmem>>, vector<32x32xbf16>
    %618 = arith.truncf %616 : vector<18x32xf32> to vector<18x32xbf16>
    %cst_198 = arith.constant dense<0.000000e+00> : vector<18x32xf32>
    %619 = tpu.matmul %618, %617, %cst_198 {dimension_numbers = #tpu.dot_dimension_numbers<[1], [0], [0], [1], [0, 0, 1, 1], [], []>} : vector<18x32xbf16>, vector<32x32xbf16>, vector<18x32xf32> -> vector<18x32xf32>
    %c0_199 = arith.constant 0 : index
    %c1632 = arith.constant 1632 : index
    %620 = vector.load %arg8[%c0_199, %c1632] : memref<1x1858xf32, #tpu.memory_space<vmem>>, vector<1x32xf32>
    %621 = vector.broadcast %620 : vector<1x32xf32> to vector<18x32xf32>
    %622 = arith.addf %619, %621 : vector<18x32xf32>
    %623 = arith.mulf %622, %622 : vector<18x32xf32>
    %624 = arith.mulf %622, %623 : vector<18x32xf32>
    %cst_200 = arith.constant 4.471500e-02 : f32
    %625 = vector.broadcast %cst_200 : f32 to vector<18x32xf32>
    %626 = arith.mulf %625, %624 : vector<18x32xf32>
    %627 = arith.addf %622, %626 : vector<18x32xf32>
    %cst_201 = arith.constant 0.797884583 : f32
    %628 = vector.broadcast %cst_201 : f32 to vector<18x32xf32>
    %629 = arith.mulf %628, %627 : vector<18x32xf32>
    %630 = math.tanh %629 : vector<18x32xf32>
    %cst_202 = arith.constant 1.000000e+00 : f32
    %631 = vector.broadcast %cst_202 : f32 to vector<18x32xf32>
    %632 = arith.addf %631, %630 : vector<18x32xf32>
    %cst_203 = arith.constant 5.000000e-01 : f32
    %633 = vector.broadcast %cst_203 : f32 to vector<18x32xf32>
    %634 = arith.mulf %633, %632 : vector<18x32xf32>
    %635 = arith.mulf %622, %634 : vector<18x32xf32>
    %c0_204 = arith.constant 0 : index
    %c1664 = arith.constant 1664 : index
    %636 = vector.load %arg8[%c0_204, %c1664] : memref<1x1858xf32, #tpu.memory_space<vmem>>, vector<1x32xf32>
    %c0_205 = arith.constant 0 : index
    %c1696 = arith.constant 1696 : index
    %637 = vector.load %arg8[%c0_205, %c1696] : memref<1x1858xf32, #tpu.memory_space<vmem>>, vector<1x32xf32>
    %cst_206 = arith.constant dense<0.000000e+00> : vector<18xf32>
    %638 = vector.multi_reduction <add>, %635, %cst_206 [1] : vector<18x32xf32> to vector<18xf32>
    %639 = vector.shape_cast %638 : vector<18xf32> to vector<18x1xf32>
    %cst_207 = arith.constant 3.200000e+01 : f32
    %640 = vector.broadcast %cst_207 : f32 to vector<18x1xf32>
    %641 = arith.divf %639, %640 : vector<18x1xf32>
    %642 = vector.broadcast %641 : vector<18x1xf32> to vector<18x32xf32>
    %643 = arith.subf %635, %642 : vector<18x32xf32>
    %644 = arith.mulf %643, %643 : vector<18x32xf32>
    %cst_208 = arith.constant dense<0.000000e+00> : vector<18xf32>
    %645 = vector.multi_reduction <add>, %644, %cst_208 [1] : vector<18x32xf32> to vector<18xf32>
    %646 = vector.shape_cast %645 : vector<18xf32> to vector<18x1xf32>
    %cst_209 = arith.constant 3.200000e+01 : f32
    %647 = vector.broadcast %cst_209 : f32 to vector<18x1xf32>
    %648 = arith.divf %646, %647 : vector<18x1xf32>
    %cst_210 = arith.constant 9.99999996E-13 : f32
    %649 = vector.broadcast %cst_210 : f32 to vector<18x1xf32>
    %650 = arith.addf %648, %649 : vector<18x1xf32>
    %651 = math.rsqrt %650 : vector<18x1xf32>
    %652 = vector.broadcast %651 : vector<18x1xf32> to vector<18x32xf32>
    %653 = arith.mulf %643, %652 : vector<18x32xf32>
    %654 = vector.broadcast %636 : vector<1x32xf32> to vector<18x32xf32>
    %655 = arith.mulf %653, %654 : vector<18x32xf32>
    %656 = vector.broadcast %637 : vector<1x32xf32> to vector<18x32xf32>
    %657 = arith.addf %655, %656 : vector<18x32xf32>
    %c0_211 = arith.constant 0 : index
    %c864_212 = arith.constant 864 : index
    %658 = vector.load %arg6[%c0_211, %c864_212] : memref<32x994xbf16, #tpu.memory_space<vmem>>, vector<32x130xbf16>
    %659 = arith.truncf %657 : vector<18x32xf32> to vector<18x32xbf16>
    %cst_213 = arith.constant dense<0.000000e+00> : vector<18x130xf32>
    %660 = tpu.matmul %659, %658, %cst_213 {dimension_numbers = #tpu.dot_dimension_numbers<[1], [0], [0], [1], [0, 0, 1, 1], [], []>} : vector<18x32xbf16>, vector<32x130xbf16>, vector<18x130xf32> -> vector<18x130xf32>
    %c0_214 = arith.constant 0 : index
    %c1728 = arith.constant 1728 : index
    %661 = vector.load %arg8[%c0_214, %c1728] : memref<1x1858xf32, #tpu.memory_space<vmem>>, vector<1x130xf32>
    %662 = vector.broadcast %661 : vector<1x130xf32> to vector<18x130xf32>
    %663 = arith.addf %660, %662 : vector<18x130xf32>
    %cst_215 = arith.constant dense<0xFF800000> : vector<18xf32>
    %664 = vector.multi_reduction <maximumf>, %663, %cst_215 [1] : vector<18x130xf32> to vector<18xf32>
    %665 = vector.shape_cast %664 : vector<18xf32> to vector<18x1xf32>
    %666 = vector.broadcast %665 : vector<18x1xf32> to vector<18x130xf32>
    %667 = arith.subf %663, %666 : vector<18x130xf32>
    %668 = math.exp %667 : vector<18x130xf32>
    %cst_216 = arith.constant dense<0.000000e+00> : vector<18xf32>
    %669 = vector.multi_reduction <add>, %668, %cst_216 [1] : vector<18x130xf32> to vector<18xf32>
    %670 = vector.shape_cast %669 : vector<18xf32> to vector<18x1xf32>
    %671 = math.log %670 : vector<18x1xf32>
    %672 = arith.addf %671, %665 : vector<18x1xf32>
    %c0_217 = arith.constant 0 : index
    %c0_218 = arith.constant 0 : index
    %673 = vector.load %arg3[%c0_217, %c0_218] : memref<18x130xf32, #tpu.memory_space<vmem>>, vector<18x130xf32>
    %674 = arith.mulf %663, %673 : vector<18x130xf32>
    %cst_219 = arith.constant dense<0.000000e+00> : vector<18xf32>
    %675 = vector.multi_reduction <add>, %674, %cst_219 [1] : vector<18x130xf32> to vector<18xf32>
    %676 = vector.shape_cast %675 : vector<18xf32> to vector<18x1xf32>
    %cst_220 = arith.constant dense<0.000000e+00> : vector<18xf32>
    %677 = vector.multi_reduction <add>, %673, %cst_220 [1] : vector<18x130xf32> to vector<18xf32>
    %678 = vector.shape_cast %677 : vector<18xf32> to vector<18x1xf32>
    %679 = arith.subf %672, %676 : vector<18x1xf32>
    %680 = arith.mulf %678, %679 : vector<18x1xf32>
    %cst_221 = arith.constant dense<0.000000e+00> : vector<1xf32>
    %681 = vector.multi_reduction <add>, %680, %cst_221 [0] : vector<18x1xf32> to vector<1xf32>
    %682 = vector.shape_cast %681 : vector<1xf32> to vector<1x1xf32>
    %cst_222 = arith.constant 5.000000e-01 : f32
    %683 = vector.broadcast %cst_222 : f32 to vector<1x1xf32>
    %684 = arith.mulf %682, %683 : vector<1x1xf32>
    %c0_223 = arith.constant 0 : index
    %c0_224 = arith.constant 0 : index
    %685 = vector.load %arg9[%c0_223, %c0_224] : memref<1x1xf32, #tpu.memory_space<vmem>>, vector<1x1xf32>
    tpu.vector_store %arg9[%c0_223, %c0_224], %684 {strides = array<i32>} : memref<1x1xf32, #tpu.memory_space<vmem>>, vector<1x1xf32>,
    return
  }
}

</mosaic_0001>

<llo_original>
// kernel: tile.32
$region0: #{tile.32}
  %s0 = inlined_call_operand.vmem [shape: f32[2,5,32], index: 0, kind: input, shape index: {}]
  %s1 = inlined_call_operand.vmem [shape: f32[10,32], index: 1, kind: output, shape index: {}]
  %v2 = vld [vmem:[%s0] sm:$0x1f]
  %vm3 = vcmask 261120
  %4 = vst.msk [vmem:[%s1] sm:$0x1f] %vm3, %v2
  %s5 = scalar_lea.vmem %s0, 8
  %v6 = vld [vmem:[%s5] sm:$0x1f]
  %vm7 = vcmask 261120
  %s8 = scalar_lea.vmem %s1, 5
  %9 = vst.msk [vmem:[%s8] sm:$0x1f] %vm7, %v6

// kernel: blip_vqa_forward_train.1
$region0: #{blip_vqa_forward_train.1}
  #allocation0 [shape = 'u32[]', space=smem, size = 0x4, offset = 0x4, fixed_abs, tag = 'smem constant byte address 0x4 - core index']
  #allocation1 [shape = 'u32[144,128]{1,0:T(1,128)}', space=vmem, size = 0x12000, scoped, tag = 'internal scratch']
  %s0 = inlined_call_operand.vmem [shape: bf16[10,193], index: 0, kind: input, shape index: {}]
  %s1 = inlined_call_operand.vmem [shape: f32[34,32], index: 1, kind: input, shape index: {}]
  %s2 = inlined_call_operand.vmem [shape: f32[72,280], index: 2, kind: input, shape index: {}]
  %s3 = inlined_call_operand.vmem [shape: f32[18,130], index: 3, kind: input, shape index: {}]
  %s4 = inlined_call_operand.vmem [shape: bf16[193,32], index: 4, kind: input, shape index: {}]
  %s5 = inlined_call_operand.vmem [shape: f32[10,32], index: 5, kind: input, shape index: {}]
  %s6 = inlined_call_operand.vmem [shape: bf16[32,994], index: 6, kind: input, shape index: {}]
  %s7 = inlined_call_operand.vmem [shape: bf16[64,96], index: 7, kind: input, shape index: {}]
  %s8 = inlined_call_operand.vmem [shape: f32[1,1858], index: 8, kind: input, shape index: {}]
  %s9 = inlined_call_operand.hbm [shape: f32[1,1], index: 9, kind: output, shape index: {}]
  %s10 = sld [smem:[#allocation0]]
  $region46: #{blip_vqa_forward_train.1} parent=0
    _
  %s12 = ssub.s32 1, %s10
  %s13 = scalar_select 0, %s12, %s10
  $region1: #{blip_vqa_forward_train.1} parent=0
    #allocation2 [shape = 'u8[512]{0}', space=vmem, size = 0x400, scoped, tag = 'output window, operand 0, single buffered']
    #allocation3 [shape = 's32[1]{0}', space=sflag, size = 0x4, scoped, tag = 'scoped memory for blip_vqa_forward_train.1']
    %14 = vsyncpa [#allocation3], 0
    // Predicated region
    $region2: #{blip_vqa_forward_train.1} parent=1 // pred_check
      _
    $region3: #{blip_vqa_forward_train.1} parent=1 // pred_check_branch
      %16 = sbr.rel (0) target = $region5
    $region4: #{blip_vqa_forward_train.1} parent=1 // pred_region
      _
    $region5: #{blip_vqa_forward_train.1} parent=1 // pred_fallthru
      _
    // Predicated region
    $region6: #{blip_vqa_forward_train.1} parent=1 // pred_check
      _
    $region7: #{blip_vqa_forward_train.1} parent=1 // pred_check_branch
      %18 = sbr.rel (0) target = $region9
    $region8: #{blip_vqa_forward_train.1} parent=1 // pred_region
      _
    $region9: #{blip_vqa_forward_train.1} parent=1 // pred_fallthru
      _
    // Predicated region
    $region10: #{blip_vqa_forward_train.1} parent=1 // pred_check
      _
    $region11: #{blip_vqa_forward_train.1} parent=1 // pred_check_branch
      %20 = sbr.rel (0) target = $region13
    $region12: #{blip_vqa_forward_train.1} parent=1 // pred_region
      _
    $region13: #{blip_vqa_forward_train.1} parent=1 // pred_fallthru
      _
    // Predicated region
    $region14: #{blip_vqa_forward_train.1} parent=1 // pred_check
      _
    $region15: #{blip_vqa_forward_train.1} parent=1 // pred_check_branch
      %22 = sbr.rel (0) target = $region17
    $region16: #{blip_vqa_forward_train.1} parent=1 // pred_region
      _
    $region17: #{blip_vqa_forward_train.1} parent=1 // pred_fallthru
      _
    // Predicated region
    $region18: #{blip_vqa_forward_train.1} parent=1 // pred_check
      _
    $region19: #{blip_vqa_forward_train.1} parent=1 // pred_check_branch
      %24 = sbr.rel (0) target = $region21
    $region20: #{blip_vqa_forward_train.1} parent=1 // pred_region
      _
    $region21: #{blip_vqa_forward_train.1} parent=1 // pred_fallthru
      _
    // Predicated region
    $region22: #{blip_vqa_forward_train.1} parent=1 // pred_check
      _
    $region23: #{blip_vqa_forward_train.1} parent=1 // pred_check_branch
      %26 = sbr.rel (0) target = $region25
    $region24: #{blip_vqa_forward_train.1} parent=1 // pred_region
      _
    $region25: #{blip_vqa_forward_train.1} parent=1 // pred_fallthru
      _
    // Predicated region
    $region26: #{blip_vqa_forward_train.1} parent=1 // pred_check
      _
    $region27: #{blip_vqa_forward_train.1} parent=1 // pred_check_branch
      %28 = sbr.rel (0) target = $region29
    $region28: #{blip_vqa_forward_train.1} parent=1 // pred_region
      _
    $region29: #{blip_vqa_forward_train.1} parent=1 // pred_fallthru
      _
    // Predicated region
    $region30: #{blip_vqa_forward_train.1} parent=1 // pred_check
      _
    $region31: #{blip_vqa_forward_train.1} parent=1 // pred_check_branch
      %30 = sbr.rel (0) target = $region33
    $region32: #{blip_vqa_forward_train.1} parent=1 // pred_region
      _
    $region33: #{blip_vqa_forward_train.1} parent=1 // pred_fallthru
      _
    // Predicated region
    $region34: #{blip_vqa_forward_train.1} parent=1 // pred_check
      _
    $region35: #{blip_vqa_forward_train.1} parent=1 // pred_check_branch
      %32 = sbr.rel (0) target = $region37
    $region36: #{blip_vqa_forward_train.1} parent=1 // pred_region
      _
    $region37: #{blip_vqa_forward_train.1} parent=1 // pred_fallthru
      _
    %v34 = vld [vmem:[%s0] sm:$0xff]
    %v35 = vld [vmem:[%s0 + $0x8] sm:$0x11]
    %v36 = vld [vmem:[%s4] sm:$0xf]
    %v37 = vld [vmem:[%s4 + $0x4] sm:$0xf]
    %v38 = vld [vmem:[%s4 + $0x8] sm:$0xf]
    %v39 = vld [vmem:[%s4 + $0xc] sm:$0xf]
    %v40 = vld [vmem:[%s4 + $0x10] sm:$0xf]
    %v41 = vld [vmem:[%s4 + $0x14] sm:$0xf]
    %v42 = vld [vmem:[%s4 + $0x18] sm:$0xf]
    %v43 = vld [vmem:[%s4 + $0x1c] sm:$0xf]
    %v44 = vld [vmem:[%s4 + $0x20] sm:$0xf]
    %v45 = vld [vmem:[%s4 + $0x24] sm:$0xf]
    %v46 = vld [vmem:[%s4 + $0x28] sm:$0xf]
    %v47 = vld [vmem:[%s4 + $0x2c] sm:$0xf]
    %v48 = vld [vmem:[%s4 + $0x30] sm:$0xf]
    %v49 = vld [vmem:[%s4 + $0x34] sm:$0xf]
    %v50 = vld [vmem:[%s4 + $0x38] sm:$0xf]
    %v51 = vld [vmem:[%s4 + $0x3c] sm:$0xf]
    %v52 = vld [vmem:[%s4 + $0x40] sm:$0xf]
    %v53 = vld [vmem:[%s4 + $0x44] sm:$0xf]
    %v54 = vld [vmem:[%s4 + $0x48] sm:$0xf]
    %v55 = vld [vmem:[%s4 + $0x4c] sm:$0xf]
    %v56 = vld [vmem:[%s4 + $0x50] sm:$0xf]
    %v57 = vld [vmem:[%s4 + $0x54] sm:$0xf]
    %v58 = vld [vmem:[%s4 + $0x58] sm:$0xf]
    %v59 = vld [vmem:[%s4 + $0x5c] sm:$0xf]
    %v60 = vld [vmem:[%s4 + $0x60] sm:$0x1]
    %v61 = vld [vmem:[%s5] sm:$0xff]
    %v62 = vld [vmem:[%s5 + $0x8] sm:$0x3]
    %v65 = vunpack.c.l.b16 %v34
    %v66 = vunpack.c.h.b16 %v34
    %v67 = vunpack.c.l.b16 %v35
    %v68 = vunpack.c.h.b16 %v35
    %v69 = vpack.c.b16 %v67, %v65
    %v70 = vpack.c.b16 %v68, %v66
    %v97 = vunpack.c.l.b16 %v36
    %v98 = vunpack.c.l.b16 %v37
    %v99 = vunpack.c.l.b16 %v38
    %v100 = vunpack.c.l.b16 %v39
    %v101 = vunpack.c.l.b16 %v40
    %v102 = vunpack.c.l.b16 %v41
    %v103 = vunpack.c.l.b16 %v42
    %v104 = vunpack.c.l.b16 %v43
    %v105 = vunpack.c.l.b16 %v44
    %v106 = vunpack.c.l.b16 %v45
    %v107 = vunpack.c.l.b16 %v46
    %v108 = vunpack.c.l.b16 %v47
    %v109 = vunpack.c.l.b16 %v48
    %v110 = vunpack.c.l.b16 %v49
    %v111 = vunpack.c.l.b16 %v50
    %v112 = vunpack.c.l.b16 %v51
    %v113 = vunpack.c.l.b16 %v52
    %v114 = vunpack.c.l.b16 %v53
    %v115 = vunpack.c.l.b16 %v54
    %v116 = vunpack.c.l.b16 %v55
    %v117 = vunpack.c.l.b16 %v56
    %v118 = vunpack.c.l.b16 %v57
    %v119 = vunpack.c.l.b16 %v58
    %v120 = vunpack.c.l.b16 %v59
    %v121 = vunpack.c.l.b16 %v60
    %v122 = vpack.c.b16 %v98, %v97
    %v123 = vpack.c.b16 %v100, %v99
    %v124 = vpack.c.b16 %v102, %v101
    %v125 = vpack.c.b16 %v104, %v103
    %v126 = vpack.c.b16 %v106, %v105
    %v127 = vpack.c.b16 %v108, %v107
    %v128 = vpack.c.b16 %v110, %v109
    %v129 = vpack.c.b16 %v112, %v111
    %v130 = vpack.c.b16 %v114, %v113
    %v131 = vpack.c.b16 %v116, %v115
    %v132 = vpack.c.b16 %v118, %v117
    %v133 = vpack.c.b16 %v120, %v119
    %v134 = vpack.c.b16 %v121, %v121
    %vm147 = vcmask 531456
    %v149 = vsel %vm147, %v70, 0
    %vm151 = vcmask 1040384
    %v152 = vsel 0, 4294967295, 65535
    %v153 = vsel %vm151, %v152, 0
    %v155 = vand.u32 %v134, %v153
    %157 = vmatprep.subr.bf16.mxu0 0
    %158 = vmatpush1.bf16.msra.mxu0 %v122
    %159 = vmatprep.subr.bf16.mxu0 0
    %160 = vmatpush1.bf16.msra.mxu0 %v123
    %161 = vmatprep.subr.bf16.mxu0 0
    %162 = vmatpush1.bf16.msra.mxu0 %v124
    %163 = vmatprep.subr.bf16.mxu0 0
    %164 = vmatpush1.bf16.msra.mxu0 %v125
    %165 = vmatprep.subr.bf16.mxu0 0
    %166 = vmatpush1.bf16.msra.mxu0 %v126
    %167 = vmatprep.subr.bf16.mxu0 0
    %168 = vmatpush1.bf16.msra.mxu0 %v127
    %169 = vmatprep.subr.bf16.mxu0 0
    %170 = vmatpush1.bf16.msra.mxu0 %v128
    %171 = vmatprep.subr.bf16.mxu0 0
    %172 = vmatpush1.bf16.msra.mxu0 %v129
    %173 = vmatprep.subr.bf16.mxu0 0
    %174 = vmatpush1.bf16.msra.mxu0 %v130
    %175 = vmatprep.subr.bf16.mxu0 0
    %176 = vmatpush1.bf16.msra.mxu0 %v131
    %177 = vmatprep.subr.bf16.mxu0 0
    %178 = vmatpush1.bf16.msra.mxu0 %v132
    %179 = vmatprep.subr.bf16.mxu0 0
    %180 = vmatpush1.bf16.msra.mxu0 %v133
    %181 = vmatprep.subr.bf16.mxu0 0
    %182 = vmatpush1.bf16.msra.mxu0 %v155
    %183 = vmatprep.subr.bf16.mxu0 0
    %184 = vmatpush1.bf16.msra.mxu0 0
    %185 = vmatprep.subr.bf16.mxu0 0
    %186 = vmatpush1.bf16.msra.mxu0 0
    %187 = vmatprep.subr.bf16.mxu0 0
    %188 = vmatpush1.bf16.msra.mxu0 0
    %189 = vmatprep.mubr.bf16.mxu0 %v149
    %190 = vmatmul.mubr.bf16.gmra.mrb[0].mxu0 %v69
    %v191 = vpop.f32.mrb[0].mxu0
    %v192 = vadd.f32 %v61, %v191
    %v193 = vpop.f32.mrb[0].mxu0
    %v194 = vpop.f32.mrb[0].mxu0
    %v195 = vadd.f32 %v62, %v194
    %v196 = vpop.f32.mrb[0].mxu0
    %197 = vdwg.mxu0
    %v198 = vld [vmem:[%s8] sm:$0x1]
    %vm199 = vcmask 261120
    %v200 = vsel %vm199, %v192, 0.0
    %201 = vadd.xlane.f32.xlu0 %v200
    %v202 = vpop.xlane.xlu0 %201
    %vm203 = vcmask 254976
    %v204 = vsel %vm203, %v195, 0.0
    %205 = vadd.xlane.f32.xlu0 %v204
    %v206 = vpop.xlane.xlu0 %205
    %v207 = vrcp.pop 32.0
    %v208 = vmul.f32 %v202, %v207
    %v209 = vmul.f32 %v206, %v207
    %v210 = vsub.f32 %v192, %v208
    %v211 = vsub.f32 %v195, %v209
    %v212 = vmul.f32 %v210, %v210
    %v213 = vmul.f32 %v211, %v211
    %v214 = vsel %vm199, %v212, 0.0
    %215 = vadd.xlane.f32.xlu0 %v214
    %v216 = vpop.xlane.xlu0 %215
    %v217 = vsel %vm203, %v213, 0.0
    %218 = vadd.xlane.f32.xlu0 %v217
    %v219 = vpop.xlane.xlu0 %218
    %v220 = vmul.f32 %v216, %v207
    %v221 = vmul.f32 %v219, %v207
    %v222 = vadd.f32 %v220, 1e-06
    %v223 = vadd.f32 %v221, 1e-06
    %v224 = vrsqrt.pop %v222
    %v225 = vrsqrt.pop %v223
    %v226 = vmul.f32 %v210, %v224
    %v227 = vmul.f32 %v211, %v225
    %v229 = vlaneseq
    %v230 = vshrl.u32 %v229, 7
    %v231 = vsub.s32 0, %v230
    %v232 = vrot.slane %v198, %v231
    %v234 = vmul.f32 %v226, %v232
    %v235 = vmul.f32 %v227, %v232
    %236 = vrot.lane.b32.xlu0 %v232, 96
    %v237 = vpop.permute.xlu0 %236
    %v239 = vadd.f32 %v234, %v237
    %v240 = vadd.f32 %v235, %v237
    %v241 = vld [vmem:[%s6] sm:$0xf]
    %v242 = vld [vmem:[%s6 + $0x20] sm:$0xf]
    %v243 = vld [vmem:[%s6 + $0x40] sm:$0xf]
    %v244 = vld [vmem:[%s6 + $0x60] sm:$0xf]
    %v245 = vld [vmem:[%s8] sm:$0x3]
    %v246 = vld [vmem:[%s8 + $0x1] sm:$0x1]
    %v247 = vld [vmem:[%s2] sm:$0xff]
    %v248 = vld [vmem:[%s2 + $0x18] sm:$0xff]
    %v249 = vld [vmem:[%s2 + $0x30] sm:$0xff]
    %v250 = vld [vmem:[%s2 + $0x48] sm:$0xff]
    %v251 = vld [vmem:[%s2 + $0x60] sm:$0xff]
    %v252 = vpack.c.bf16 %v240, %v239
    %v254 = vlaneseq
    %v255 = vshrl.u32 %v254, 7
    %v256 = vsub.s32 0, %v255
    %v257 = vrot.slane %v245, %v256
    %v258 = vlaneseq
    %v259 = vshrl.u32 %v258, 7
    %v260 = vsub.s32 1, %v259
    %v261 = vrot.slane %v245, %v260
    %v266 = vunpack.c.l.b16 %v241
    %v267 = vunpack.c.l.b16 %v242
    %v268 = vunpack.c.l.b16 %v243
    %v269 = vunpack.c.l.b16 %v244
    %v270 = vpack.c.b16 %v267, %v266
    %v271 = vpack.c.b16 %v269, %v268
    %274 = vrot.lane.b32.xlu0 %v257, 64
    %v275 = vpop.permute.xlu0 %274
    %276 = vrot.lane.b32.xlu0 %v261, 64
    %v277 = vpop.permute.xlu0 %276
    %vm278 = vcmask 523264
    %v279 = vsel %vm278, %v275, %v277
    %v282 = vsel %vm199, %v252, 0
    %284 = vmatprep.subr.bf16.mxu0 0
    %285 = vmatpush1.bf16.msra.mxu0 %v270
    %286 = vmatprep.subr.bf16.mxu0 0
    %287 = vmatpush1.bf16.msra.mxu0 %v271
    %288 = vmatprep.subr.bf16.mxu0 0
    %289 = vmatpush1.bf16.msra.mxu0 0
    %290 = vmatprep.subr.bf16.mxu0 0
    %291 = vmatpush1.bf16.msra.mxu0 0
    %292 = vmatprep.subr.bf16.mxu0 0
    %293 = vmatpush1.bf16.msra.mxu0 0
    %294 = vmatprep.subr.bf16.mxu0 0
    %295 = vmatpush1.bf16.msra.mxu0 0
    %296 = vmatprep.subr.bf16.mxu0 0
    %297 = vmatpush1.bf16.msra.mxu0 0
    %298 = vmatprep.subr.bf16.mxu0 0
    %299 = vmatpush1.bf16.msra.mxu0 0
    %300 = vmatprep.subr.bf16.mxu0 0
    %301 = vmatpush1.bf16.msra.mxu0 0
    %302 = vmatprep.subr.bf16.mxu0 0
    %303 = vmatpush1.bf16.msra.mxu0 0
    %304 = vmatprep.subr.bf16.mxu0 0
    %305 = vmatpush1.bf16.msra.mxu0 0
    %306 = vmatprep.subr.bf16.mxu0 0
    %307 = vmatpush1.bf16.msra.mxu0 0
    %308 = vmatprep.subr.bf16.mxu0 0
    %309 = vmatpush1.bf16.msra.mxu0 0
    %310 = vmatprep.subr.bf16.mxu0 0
    %311 = vmatpush1.bf16.msra.mxu0 0
    %312 = vmatprep.subr.bf16.mxu0 0
    %313 = vmatpush1.bf16.msra.mxu0 0
    %314 = vmatprep.subr.bf16.mxu0 0
    %315 = vmatpush1.bf16.msra.mxu0 0
    %316 = vmatprep.mubr.bf16.mxu0 0
    %317 = vmatmul.mubr.bf16.gmra.mrb[0].mxu0 %v282
    %v318 = vpop.f32.mrb[0].mxu0
    %v319 = vadd.f32 %v279, %v318
    %v320 = vpop.f32.mrb[0].mxu0
    %v321 = vpop.f32.mrb[0].mxu0
    %v322 = vadd.f32 %v279, %v321
    %v323 = vpop.f32.mrb[0].mxu0
    %324 = vdwg.mxu0
    %vm327 = vcmask 1041408
    %v328 = vrot.slane %v319, 6
    %v329 = vrot.slane %v322, 6
    %v330 = vsel %vm327, %v328, %v329
    %331 = vrot.lane.b32.xlu0 %v328, 120
    %v332 = vpop.permute.xlu0 %331
    %333 = vrot.lane.b32.xlu0 %v330, 120
    %v334 = vpop.permute.xlu0 %333
    %vm337 = vcmask 1043456
    %v338 = vrot.slane %v319, 4
    %v339 = vrot.slane %v322, 4
    %v340 = vsel %vm337, %v338, %v339
    %341 = vrot.lane.b32.xlu0 %v338, 112
    %v342 = vpop.permute.xlu0 %341
    %343 = vrot.lane.b32.xlu0 %v340, 112
    %v344 = vpop.permute.xlu0 %343
    %vm347 = vcmask 1045504
    %v348 = vrot.slane %v319, 2
    %v349 = vrot.slane %v322, 2
    %v350 = vsel %vm347, %v348, %v349
    %351 = vrot.lane.b32.xlu0 %v348, 104
    %v352 = vpop.permute.xlu0 %351
    %353 = vrot.lane.b32.xlu0 %v350, 104
    %v354 = vpop.permute.xlu0 %353
    %v357 = vsel %vm327, %v322, %v332
    %v358 = vsel %vm337, %v334, %v342
    %v359 = vsel %vm347, %v344, %v352
    %v360 = vpack.c.bf16 %v357, %v319
    %v361 = vpack.c.bf16 %v359, %v358
    %v362 = vpack.c.bf16 %v354, %v354
    %366 = vrot.lane.b32.xlu0 %v360, 96
    %v367 = vpop.permute.xlu0 %366
    %368 = vrot.lane.b32.xlu0 %v361, 96
    %v369 = vpop.permute.xlu0 %368
    %370 = vrot.lane.b32.xlu0 %v362, 96
    %v371 = vpop.permute.xlu0 %370
    %vm372 = vcmask 64512
    %v374 = vsel %vm372, %v360, 0
    %v377 = vsel %vm372, %v361, 0
    %v380 = vsel %vm372, %v362, 0
    %v383 = vsel %vm372, %v367, 0
    %v386 = vsel %vm372, %v369, 0
    %v389 = vsel %vm372, %v371, 0
    %391 = vmatprep.subr.bf16.mxu0 0
    %392 = vmatpush1.bf16.xpose.msra.mxu0 %v383
    %393 = vmatprep.subr.bf16.mxu0 0
    %394 = vmatpush1.bf16.xpose.msra.mxu0 %v386
    %395 = vmatprep.subr.bf16.mxu0 0
    %396 = vmatpush1.bf16.xpose.msra.mxu0 %v389
    %397 = vmatprep.subr.bf16.mxu0 0
    %398 = vmatpush1.bf16.xpose.msra.mxu0 0
    %399 = vmatprep.subr.bf16.mxu0 0
    %400 = vmatpush1.bf16.xpose.msra.mxu0 0
    %401 = vmatprep.subr.bf16.mxu0 0
    %402 = vmatpush1.bf16.xpose.msra.mxu0 0
    %403 = vmatprep.subr.bf16.mxu0 0
    %404 = vmatpush1.bf16.xpose.msra.mxu0 0
    %405 = vmatprep.subr.bf16.mxu0 0
    %406 = vmatpush1.bf16.xpose.msra.mxu0 0
    %407 = vmatprep.subr.bf16.mxu0 0
    %408 = vmatpush1.bf16.xpose.msra.mxu0 0
    %409 = vmatprep.subr.bf16.mxu0 0
    %410 = vmatpush1.bf16.xpose.msra.mxu0 0
    %411 = vmatprep.subr.bf16.mxu0 0
    %412 = vmatpush1.bf16.xpose.msra.mxu0 0
    %413 = vmatprep.subr.bf16.mxu0 0
    %414 = vmatpush1.bf16.xpose.msra.mxu0 0
    %415 = vmatprep.subr.bf16.mxu0 0
    %416 = vmatpush1.bf16.xpose.msra.mxu0 0
    %417 = vmatprep.subr.bf16.mxu0 0
    %418 = vmatpush1.bf16.xpose.msra.mxu0 0
    %419 = vmatprep.subr.bf16.mxu0 0
    %420 = vmatpush1.bf16.xpose.msra.mxu0 0
    %421 = vmatprep.subr.bf16.mxu0 0
    %422 = vmatpush1.bf16.xpose.msra.mxu0 0
    %423 = vmatprep.mubr.bf16.mxu0 0
    %424 = vmatmul.mubr.bf16.gmra.mrb[0].mxu0 %v374
    %v425 = vpop.f32.mrb[0].mxu0
    %v426 = vadd.f32 0.0, %v425
    %v427 = vpop.f32.mrb[0].mxu0
    %v428 = vpop.f32.mrb[0].mxu0
    %v429 = vadd.f32 0.0, %v428
    %v430 = vpop.f32.mrb[0].mxu0
    %431 = vmatprep.mubr.bf16.mxu0 0
    %432 = vmatmul.mubr.bf16.gmra.mrb[0].mxu0 %v377
    %v433 = vpop.f32.mrb[0].mxu0
    %v434 = vadd.f32 0.0, %v433
    %v435 = vpop.f32.mrb[0].mxu0
    %v436 = vpop.f32.mrb[0].mxu0
    %v437 = vadd.f32 0.0, %v436
    %v438 = vpop.f32.mrb[0].mxu0
    %439 = vmatprep.mubr.bf16.mxu0 0
    %440 = vmatmul.mubr.bf16.gmra.mrb[0].mxu0 %v380
    %v441 = vpop.f32.mrb[0].mxu0
    %v442 = vadd.f32 0.0, %v441
    %v443 = vpop.f32.mrb[0].mxu0
    %v444 = vpop.f32.mrb[0].mxu0
    %v445 = vpop.f32.mrb[0].mxu0
    %446 = vdwg.mxu0
    %v447 = vmul.f32 %v426, 0.35355338
    %v448 = vmul.f32 %v429, 0.35355338
    %v449 = vmul.f32 %v434, 0.35355338
    %v450 = vmul.f32 %v437, 0.35355338
    %v451 = vmul.f32 %v442, 0.35355338
    %v452 = vadd.f32 %v447, %v247
    %v453 = vadd.f32 %v448, %v248
    %v454 = vadd.f32 %v449, %v249
    %v455 = vadd.f32 %v450, %v250
    %v456 = vadd.f32 %v451, %v251
    %vm457 = vcmask 326656
    %v458 = vsel %vm457, %v452, -inf
    %459 = vmax.xlane.f32.xlu0 %v458
    %v460 = vpop.xlane.xlu0 %459
    %v461 = vsel %vm457, %v453, -inf
    %462 = vmax.xlane.f32.xlu0 %v461
    %v463 = vpop.xlane.xlu0 %462
    %v464 = vsel %vm457, %v454, -inf
    %465 = vmax.xlane.f32.xlu0 %v464
    %v466 = vpop.xlane.xlu0 %465
    %v467 = vsel %vm457, %v455, -inf
    %468 = vmax.xlane.f32.xlu0 %v467
    %v469 = vpop.xlane.xlu0 %468
    %v470 = vsel %vm457, %v456, -inf
    %471 = vmax.xlane.f32.xlu0 %v470
    %v472 = vpop.xlane.xlu0 %471
    %v473 = vsub.f32 %v452, %v460
    %v474 = vsub.f32 %v453, %v463
    %v475 = vsub.f32 %v454, %v466
    %v476 = vsub.f32 %v455, %v469
    %v477 = vsub.f32 %v456, %v472
    %v478 = vmul.f32 %v473, 1.442695
    %v479 = vpow.pop %v478
    %v480 = vmul.f32 %v474, 1.442695
    %v481 = vpow.pop %v480
    %v482 = vmul.f32 %v475, 1.442695
    %v483 = vpow.pop %v482
    %v484 = vmul.f32 %v476, 1.442695
    %v485 = vpow.pop %v484
    %v486 = vmul.f32 %v477, 1.442695
    %v487 = vpow.pop %v486
    %v488 = vsel %vm457, %v479, 0.0
    %489 = vadd.xlane.f32.xlu0 %v488
    %v490 = vpop.xlane.xlu0 %489
    %v491 = vsel %vm457, %v481, 0.0
    %492 = vadd.xlane.f32.xlu0 %v491
    %v493 = vpop.xlane.xlu0 %492
    %v494 = vsel %vm457, %v483, 0.0
    %495 = vadd.xlane.f32.xlu0 %v494
    %v496 = vpop.xlane.xlu0 %495
    %v497 = vsel %vm457, %v485, 0.0
    %498 = vadd.xlane.f32.xlu0 %v497
    %v499 = vpop.xlane.xlu0 %498
    %v500 = vsel %vm457, %v487, 0.0
    %501 = vadd.xlane.f32.xlu0 %v500
    %v502 = vpop.xlane.xlu0 %501
    %v503 = vrcp.pop %v490
    %v504 = vrcp.pop %v493
    %v505 = vrcp.pop %v496
    %v506 = vrcp.pop %v499
    %v507 = vrcp.pop %v502
    %v508 = vmul.f32 %v479, %v503
    %v509 = vmul.f32 %v481, %v504
    %v510 = vmul.f32 %v483, %v505
    %v511 = vmul.f32 %v485, %v506
    %v512 = vmul.f32 %v487, %v507
    %v513 = vpack.c.bf16 %v509, %v508
    %v514 = vpack.c.bf16 %v511, %v510
    %v515 = vpack.c.bf16 %v512, %v512
    %516 = vrot.lane.b32.xlu0 %v360, 64
    %v517 = vpop.permute.xlu0 %516
    %518 = vrot.lane.b32.xlu0 %v361, 64
    %v519 = vpop.permute.xlu0 %518
    %520 = vrot.lane.b32.xlu0 %v362, 64
    %v521 = vpop.permute.xlu0 %520
    %v525 = vsel %vm457, %v513, 0
    %v528 = vsel %vm457, %v514, 0
    %v531 = vsel %vm457, %v515, 0
    %v534 = vsel %vm337, %v521, 0
    %536 = vmatprep.subr.bf16.mxu0 0
    %537 = vmatpush1.bf16.msra.mxu0 %v517
    %538 = vmatprep.subr.bf16.mxu0 0
    %539 = vmatpush1.bf16.msra.mxu0 %v519
    %540 = vmatprep.subr.bf16.mxu0 0
    %541 = vmatpush1.bf16.msra.mxu0 %v534
    %542 = vmatprep.subr.bf16.mxu0 0
    %543 = vmatpush1.bf16.msra.mxu0 0
    %544 = vmatprep.subr.bf16.mxu0 0
    %545 = vmatpush1.bf16.msra.mxu0 0
    %546 = vmatprep.subr.bf16.mxu0 0
    %547 = vmatpush1.bf16.msra.mxu0 0
    %548 = vmatprep.subr.bf16.mxu0 0
    %549 = vmatpush1.bf16.msra.mxu0 0
    %550 = vmatprep.subr.bf16.mxu0 0
    %551 = vmatpush1.bf16.msra.mxu0 0
    %552 = vmatprep.subr.bf16.mxu0 0
    %553 = vmatpush1.bf16.msra.mxu0 0
    %554 = vmatprep.subr.bf16.mxu0 0
    %555 = vmatpush1.bf16.msra.mxu0 0
    %556 = vmatprep.subr.bf16.mxu0 0
    %557 = vmatpush1.bf16.msra.mxu0 0
    %558 = vmatprep.subr.bf16.mxu0 0
    %559 = vmatpush1.bf16.msra.mxu0 0
    %560 = vmatprep.subr.bf16.mxu0 0
    %561 = vmatpush1.bf16.msra.mxu0 0
    %562 = vmatprep.subr.bf16.mxu0 0
    %563 = vmatpush1.bf16.msra.mxu0 0
    %564 = vmatprep.subr.bf16.mxu0 0
    %565 = vmatpush1.bf16.msra.mxu0 0
    %566 = vmatprep.subr.bf16.mxu0 0
    %567 = vmatpush1.bf16.msra.mxu0 0
    %568 = vmatprep.mubr.bf16.mxu0 0
    %569 = vmatmul.mubr.bf16.gmra.mrb[0].mxu0 %v525
    %v570 = vpop.f32.mrb[0].mxu0
    %v571 = vadd.f32 0.0, %v570
    %v572 = vpop.f32.mrb[0].mxu0
    %v573 = vpop.f32.mrb[0].mxu0
    %v574 = vadd.f32 0.0, %v573
    %v575 = vpop.f32.mrb[0].mxu0
    %576 = vmatprep.mubr.bf16.mxu0 0
    %577 = vmatmul.mubr.bf16.gmra.mrb[0].mxu0 %v528
    %v578 = vpop.f32.mrb[0].mxu0
    %v579 = vadd.f32 0.0, %v578
    %v580 = vpop.f32.mrb[0].mxu0
    %v581 = vpop.f32.mrb[0].mxu0
    %v582 = vadd.f32 0.0, %v581
    %v583 = vpop.f32.mrb[0].mxu0
    %584 = vmatprep.mubr.bf16.mxu0 0
    %585 = vmatmul.mubr.bf16.gmra.mrb[0].mxu0 %v531
    %v586 = vpop.f32.mrb[0].mxu0
    %v587 = vadd.f32 0.0, %v586
    %v588 = vpop.f32.mrb[0].mxu0
    %v589 = vpop.f32.mrb[0].mxu0
    %v590 = vpop.f32.mrb[0].mxu0
    %591 = vdwg.mxu0
    %v594 = vrot.slane %v574, 2
    %v595 = vrot.slane %v579, 2
    %v596 = vsel %vm347, %v594, %v595
    %597 = vrot.lane.b32.xlu0 %v596, 8
    %v598 = vpop.permute.xlu0 %597
    %599 = vrot.lane.b32.xlu0 %v595, 8
    %v600 = vpop.permute.xlu0 %599
    %v604 = vrot.slane %v579, 4
    %v605 = vrot.slane %v582, 4
    %v606 = vsel %vm337, %v604, %v605
    %607 = vrot.lane.b32.xlu0 %v606, 16
    %v608 = vpop.permute.xlu0 %607
    %609 = vrot.lane.b32.xlu0 %v605, 16
    %v610 = vpop.permute.xlu0 %609
    %v614 = vrot.slane %v582, 6
    %v615 = vrot.slane %v587, 6
    %v616 = vsel %vm327, %v614, %v615
    %617 = vrot.lane.b32.xlu0 %v616, 24
    %v618 = vpop.permute.xlu0 %617
    %619 = vrot.lane.b32.xlu0 %v615, 24
    %v620 = vpop.permute.xlu0 %619
    %v623 = vsel %vm372, %v571, %v598
    %v624 = vsel %vm372, %v574, %v600
    %vm625 = vcmask 130048
    %v626 = vsel %vm625, %v623, %v608
    %v627 = vsel %vm625, %v624, %v610
    %vm628 = vcmask 195584
    %v629 = vsel %vm628, %v626, %v618
    %v630 = vsel %vm628, %v627, %v620
    %v631 = vpack.c.bf16 %v630, %v629
    %v633 = vlaneseq
    %v634 = vshrl.u32 %v633, 7
    %v635 = vsub.s32 0, %v634
    %v636 = vrot.slane %v246, %v635
    %637 = vrot.lane.b32.xlu0 %v270, 32
    %v638 = vpop.permute.xlu0 %637
    %639 = vrot.lane.b32.xlu0 %v271, 32
    %v640 = vpop.permute.xlu0 %639
    %643 = vrot.lane.b32.xlu0 %v636, 96
    %v644 = vpop.permute.xlu0 %643
    %v647 = vsel %vm199, %v631, 0
    %649 = vmatprep.subr.bf16.mxu0 0
    %650 = vmatpush1.bf16.msra.mxu0 %v638
    %651 = vmatprep.subr.bf16.mxu0 0
    %652 = vmatpush1.bf16.msra.mxu0 %v640
    %653 = vmatprep.subr.bf16.mxu0 0
    %654 = vmatpush1.bf16.msra.mxu0 0
    %655 = vmatprep.subr.bf16.mxu0 0
    %656 = vmatpush1.bf16.msra.mxu0 0
    %657 = vmatprep.subr.bf16.mxu0 0
    %658 = vmatpush1.bf16.msra.mxu0 0
    %659 = vmatprep.subr.bf16.mxu0 0
    %660 = vmatpush1.bf16.msra.mxu0 0
    %661 = vmatprep.subr.bf16.mxu0 0
    %662 = vmatpush1.bf16.msra.mxu0 0
    %663 = vmatprep.subr.bf16.mxu0 0
    %664 = vmatpush1.bf16.msra.mxu0 0
    %665 = vmatprep.subr.bf16.mxu0 0
    %666 = vmatpush1.bf16.msra.mxu0 0
    %667 = vmatprep.subr.bf16.mxu0 0
    %668 = vmatpush1.bf16.msra.mxu0 0
    %669 = vmatprep.subr.bf16.mxu0 0
    %670 = vmatpush1.bf16.msra.mxu0 0
    %671 = vmatprep.subr.bf16.mxu0 0
    %672 = vmatpush1.bf16.msra.mxu0 0
    %673 = vmatprep.subr.bf16.mxu0 0
    %674 = vmatpush1.bf16.msra.mxu0 0
    %675 = vmatprep.subr.bf16.mxu0 0
    %676 = vmatpush1.bf16.msra.mxu0 0
    %677 = vmatprep.subr.bf16.mxu0 0
    %678 = vmatpush1.bf16.msra.mxu0 0
    %679 = vmatprep.subr.bf16.mxu0 0
    %680 = vmatpush1.bf16.msra.mxu0 0
    %681 = vmatprep.mubr.bf16.mxu0 0
    %682 = vmatmul.mubr.bf16.gmra.mrb[0].mxu0 %v647
    %v683 = vpop.f32.mrb[0].mxu0
    %v684 = vadd.f32 %v644, %v683
    %v685 = vpop.f32.mrb[0].mxu0
    %v686 = vpop.f32.mrb[0].mxu0
    %v687 = vadd.f32 %v644, %v686
    %v688 = vpop.f32.mrb[0].mxu0
    %689 = vdwg.mxu0
    %v690 = vadd.f32 %v192, %v684
    %v691 = vadd.f32 %v195, %v687
    %v692 = vsel %vm199, %v690, 0.0
    %693 = vadd.xlane.f32.xlu0 %v692
    %v694 = vpop.xlane.xlu0 %693
    %v695 = vsel %vm203, %v691, 0.0
    %696 = vadd.xlane.f32.xlu0 %v695
    %v697 = vpop.xlane.xlu0 %696
    %v698 = vmul.f32 %v694, %v207
    %v699 = vmul.f32 %v697, %v207
    %v700 = vsub.f32 %v690, %v698
    %v701 = vsub.f32 %v691, %v699
    %v702 = vmul.f32 %v700, %v700
    %v703 = vmul.f32 %v701, %v701
    %v704 = vsel %vm199, %v702, 0.0
    %705 = vadd.xlane.f32.xlu0 %v704
    %v706 = vpop.xlane.xlu0 %705
    %v707 = vsel %vm203, %v703, 0.0
    %708 = vadd.xlane.f32.xlu0 %v707
    %v709 = vpop.xlane.xlu0 %708
    %v710 = vmul.f32 %v706, %v207
    %v711 = vmul.f32 %v709, %v207
    %v712 = vadd.f32 %v710, 1e-06
    %v713 = vadd.f32 %v711, 1e-06
    %v714 = vrsqrt.pop %v712
    %v715 = vrsqrt.pop %v713
    %v716 = vmul.f32 %v700, %v714
    %v717 = vmul.f32 %v701, %v715
    %718 = vrot.lane.b32.xlu0 %v636, 64
    %v719 = vpop.permute.xlu0 %718
    %v721 = vmul.f32 %v716, %v719
    %v722 = vmul.f32 %v717, %v719
    %723 = vrot.lane.b32.xlu0 %v636, 32
    %v724 = vpop.permute.xlu0 %723
    %v726 = vadd.f32 %v721, %v724
    %v727 = vadd.f32 %v722, %v724
    %v728 = vld [vmem:[%s6 + $0x4] sm:$0xf]
    %v729 = vld [vmem:[%s6 + $0x24] sm:$0xf]
    %v730 = vld [vmem:[%s6 + $0x44] sm:$0xf]
    %v731 = vld [vmem:[%s6 + $0x64] sm:$0xf]
    %v732 = vpack.c.bf16 %v727, %v726
    %v733 = vld [vmem:[%s8 + $0x2] sm:$0x1]
    %v735 = vlaneseq
    %v736 = vshrl.u32 %v735, 7
    %v737 = vsub.s32 0, %v736
    %v738 = vrot.slane %v733, %v737
    %v744 = vunpack.c.l.b16 %v728
    %v745 = vunpack.c.l.b16 %v729
    %v746 = vunpack.c.l.b16 %v730
    %v747 = vunpack.c.l.b16 %v731
    %v748 = vpack.c.b16 %v745, %v744
    %v749 = vpack.c.b16 %v747, %v746
    %v753 = vsel %vm199, %v732, 0
    %755 = vmatprep.subr.bf16.mxu0 0
    %756 = vmatpush1.bf16.msra.mxu0 %v748
    %757 = vmatprep.subr.bf16.mxu0 0
    %758 = vmatpush1.bf16.msra.mxu0 %v749
    %759 = vmatprep.subr.bf16.mxu0 0
    %760 = vmatpush1.bf16.msra.mxu0 0
    %761 = vmatprep.subr.bf16.mxu0 0
    %762 = vmatpush1.bf16.msra.mxu0 0
    %763 = vmatprep.subr.bf16.mxu0 0
    %764 = vmatpush1.bf16.msra.mxu0 0
    %765 = vmatprep.subr.bf16.mxu0 0
    %766 = vmatpush1.bf16.msra.mxu0 0
    %767 = vmatprep.subr.bf16.mxu0 0
    %768 = vmatpush1.bf16.msra.mxu0 0
    %769 = vmatprep.subr.bf16.mxu0 0
    %770 = vmatpush1.bf16.msra.mxu0 0
    %771 = vmatprep.subr.bf16.mxu0 0
    %772 = vmatpush1.bf16.msra.mxu0 0
    %773 = vmatprep.subr.bf16.mxu0 0
    %774 = vmatpush1.bf16.msra.mxu0 0
    %775 = vmatprep.subr.bf16.mxu0 0
    %776 = vmatpush1.bf16.msra.mxu0 0
    %777 = vmatprep.subr.bf16.mxu0 0
    %778 = vmatpush1.bf16.msra.mxu0 0
    %779 = vmatprep.subr.bf16.mxu0 0
    %780 = vmatpush1.bf16.msra.mxu0 0
    %781 = vmatprep.subr.bf16.mxu0 0
    %782 = vmatpush1.bf16.msra.mxu0 0
    %783 = vmatprep.subr.bf16.mxu0 0
    %784 = vmatpush1.bf16.msra.mxu0 0
    %785 = vmatprep.subr.bf16.mxu0 0
    %786 = vmatpush1.bf16.msra.mxu0 0
    %787 = vmatprep.mubr.bf16.mxu0 0
    %788 = vmatmul.mubr.bf16.gmra.mrb[0].mxu0 %v753
    %v789 = vpop.f32.mrb[0].mxu0
    %v790 = vadd.f32 %v738, %v789
    %v791 = vpop.f32.mrb[0].mxu0
    %v792 = vpop.f32.mrb[0].mxu0
    %v793 = vadd.f32 %v738, %v792
    %v794 = vpop.f32.mrb[0].mxu0
    %795 = vdwg.mxu0
    %v796 = vmul.f32 %v790, %v790
    %v797 = vmul.f32 %v793, %v793
    %v798 = vmul.f32 %v790, %v796
    %v799 = vmul.f32 %v793, %v797
    %v800 = vmul.f32 %v798, 0.044715
    %v801 = vmul.f32 %v799, 0.044715
    %v802 = vadd.f32 %v790, %v800
    %v803 = vadd.f32 %v793, %v801
    %v804 = vmul.f32 %v802, 0.7978846
    %v805 = vmul.f32 %v803, 0.7978846
    %v806 = vtanh.pop %v804
    %v807 = vtanh.pop %v805
    %v808 = vadd.f32 %v806, 1.0
    %v809 = vadd.f32 %v807, 1.0
    %v810 = vmul.f32 %v808, 0.5
    %v811 = vmul.f32 %v809, 0.5
    %v812 = vmul.f32 %v790, %v810
    %v813 = vmul.f32 %v793, %v811
    %v814 = vld [vmem:[%s7] sm:$0xf]
    %v815 = vld [vmem:[%s7 + $0x4] sm:$0xf]
    %v816 = vld [vmem:[%s7 + $0x8] sm:$0xf]
    %v817 = vld [vmem:[%s7 + $0xc] sm:$0xf]
    %v818 = vld [vmem:[%s7 + $0x10] sm:$0xf]
    %v819 = vld [vmem:[%s7 + $0x14] sm:$0xf]
    %v820 = vld [vmem:[%s7 + $0x18] sm:$0xf]
    %v821 = vld [vmem:[%s7 + $0x1c] sm:$0xf]
    %v822 = vpack.c.bf16 %v813, %v812
    %v831 = vunpack.c.l.b16 %v814
    %v832 = vunpack.c.l.b16 %v815
    %v833 = vunpack.c.l.b16 %v816
    %v834 = vunpack.c.l.b16 %v817
    %v835 = vunpack.c.l.b16 %v818
    %v836 = vunpack.c.l.b16 %v819
    %v837 = vunpack.c.l.b16 %v820
    %v838 = vunpack.c.l.b16 %v821
    %v839 = vpack.c.b16 %v832, %v831
    %v840 = vpack.c.b16 %v834, %v833
    %v841 = vpack.c.b16 %v836, %v835
    %v842 = vpack.c.b16 %v838, %v837
    %v848 = vsel %vm278, %v822, 0
    %850 = vmatprep.subr.bf16.mxu0 0
    %851 = vmatpush1.bf16.msra.mxu0 %v839
    %852 = vmatprep.subr.bf16.mxu0 0
    %853 = vmatpush1.bf16.msra.mxu0 %v840
    %854 = vmatprep.subr.bf16.mxu0 0
    %855 = vmatpush1.bf16.msra.mxu0 %v841
    %856 = vmatprep.subr.bf16.mxu0 0
    %857 = vmatpush1.bf16.msra.mxu0 %v842
    %858 = vmatprep.subr.bf16.mxu0 0
    %859 = vmatpush1.bf16.msra.mxu0 0
    %860 = vmatprep.subr.bf16.mxu0 0
    %861 = vmatpush1.bf16.msra.mxu0 0
    %862 = vmatprep.subr.bf16.mxu0 0
    %863 = vmatpush1.bf16.msra.mxu0 0
    %864 = vmatprep.subr.bf16.mxu0 0
    %865 = vmatpush1.bf16.msra.mxu0 0
    %866 = vmatprep.subr.bf16.mxu0 0
    %867 = vmatpush1.bf16.msra.mxu0 0
    %868 = vmatprep.subr.bf16.mxu0 0
    %869 = vmatpush1.bf16.msra.mxu0 0
    %870 = vmatprep.subr.bf16.mxu0 0
    %871 = vmatpush1.bf16.msra.mxu0 0
    %872 = vmatprep.subr.bf16.mxu0 0
    %873 = vmatpush1.bf16.msra.mxu0 0
    %874 = vmatprep.subr.bf16.mxu0 0
    %875 = vmatpush1.bf16.msra.mxu0 0
    %876 = vmatprep.subr.bf16.mxu0 0
    %877 = vmatpush1.bf16.msra.mxu0 0
    %878 = vmatprep.subr.bf16.mxu0 0
    %879 = vmatpush1.bf16.msra.mxu0 0
    %880 = vmatprep.subr.bf16.mxu0 0
    %881 = vmatpush1.bf16.msra.mxu0 0
    %882 = vmatprep.mubr.bf16.mxu0 0
    %883 = vmatmul.mubr.bf16.gmra.mrb[0].mxu0 %v848
    %v884 = vpop.f32.mrb[0].mxu0
    %v885 = vadd.f32 0.0, %v884
    %v886 = vpop.f32.mrb[0].mxu0
    %v887 = vpop.f32.mrb[0].mxu0
    %v888 = vadd.f32 0.0, %v887
    %v889 = vpop.f32.mrb[0].mxu0
    %890 = vdwg.mxu0
    %v891 = vadd.f32 %v690, %v885
    %v892 = vadd.f32 %v691, %v888
    %893 = vrot.lane.b32.xlu0 %v738, 64
    %v894 = vpop.permute.xlu0 %893
    %v896 = vadd.f32 %v891, %v894
    %v897 = vadd.f32 %v892, %v894
    %v898 = vld [vmem:[%s8 + $0x3] sm:$0x1]
    %v899 = vsel %vm199, %v896, 0.0
    %900 = vadd.xlane.f32.xlu0 %v899
    %v901 = vpop.xlane.xlu0 %900
    %v902 = vsel %vm203, %v897, 0.0
    %903 = vadd.xlane.f32.xlu0 %v902
    %v904 = vpop.xlane.xlu0 %903
    %v905 = vmul.f32 %v901, %v207
    %v906 = vmul.f32 %v904, %v207
    %v907 = vsub.f32 %v896, %v905
    %v908 = vsub.f32 %v897, %v906
    %v909 = vmul.f32 %v907, %v907
    %v910 = vmul.f32 %v908, %v908
    %v911 = vsel %vm199, %v909, 0.0
    %912 = vadd.xlane.f32.xlu0 %v911
    %v913 = vpop.xlane.xlu0 %912
    %v914 = vsel %vm203, %v910, 0.0
    %915 = vadd.xlane.f32.xlu0 %v914
    %v916 = vpop.xlane.xlu0 %915
    %v917 = vmul.f32 %v913, %v207
    %v918 = vmul.f32 %v916, %v207
    %v919 = vadd.f32 %v917, 1e-06
    %v920 = vadd.f32 %v918, 1e-06
    %v921 = vrsqrt.pop %v919
    %v922 = vrsqrt.pop %v920
    %v923 = vmul.f32 %v907, %v921
    %v924 = vmul.f32 %v908, %v922
    %925 = vrot.lane.b32.xlu0 %v738, 32
    %v926 = vpop.permute.xlu0 %925
    %v928 = vmul.f32 %v923, %v926
    %v929 = vmul.f32 %v924, %v926
    %v931 = vlaneseq
    %v932 = vshrl.u32 %v931, 7
    %v933 = vsub.s32 0, %v932
    %v934 = vrot.slane %v898, %v933
    %v936 = vadd.f32 %v928, %v934
    %v937 = vadd.f32 %v929, %v934
    %v938 = vld [vmem:[%s1] sm:$0xff]
    %v939 = vld [vmem:[%s1 + $0x8] sm:$0xff]
    %v940 = vsel %vm199, %v938, 0.0
    %941 = vadd.xlane.f32.xlu0 %v940
    %v942 = vpop.xlane.xlu0 %941
    %v943 = vsel %vm199, %v939, 0.0
    %944 = vadd.xlane.f32.xlu0 %v943
    %v945 = vpop.xlane.xlu0 %944
    %v946 = vmul.f32 %v942, %v207
    %v947 = vmul.f32 %v945, %v207
    %v948 = vsub.f32 %v938, %v946
    %v949 = vsub.f32 %v939, %v947
    %v950 = vmul.f32 %v948, %v948
    %v951 = vmul.f32 %v949, %v949
    %v952 = vsel %vm199, %v950, 0.0
    %953 = vadd.xlane.f32.xlu0 %v952
    %v954 = vpop.xlane.xlu0 %953
    %v955 = vsel %vm199, %v951, 0.0
    %956 = vadd.xlane.f32.xlu0 %v955
    %v957 = vpop.xlane.xlu0 %956
    %v958 = vmul.f32 %v954, %v207
    %v959 = vmul.f32 %v957, %v207
    %v960 = vadd.f32 %v958, 1e-12
    %v961 = vadd.f32 %v959, 1e-12
    %v962 = vrsqrt.pop %v960
    %v963 = vrsqrt.pop %v961
    %v964 = vmul.f32 %v948, %v962
    %v965 = vmul.f32 %v949, %v963
    %966 = vrot.lane.b32.xlu0 %v934, 96
    %v967 = vpop.permute.xlu0 %966
    %v969 = vmul.f32 %v964, %v967
    %v970 = vmul.f32 %v965, %v967
    %971 = vrot.lane.b32.xlu0 %v934, 64
    %v972 = vpop.permute.xlu0 %971
    %v974 = vadd.f32 %v969, %v972
    %v975 = vadd.f32 %v970, %v972
    %v976 = vld [vmem:[%s2] sm:$0xff]
    %v977 = vld [vmem:[%s2 + $0x18] sm:$0xff]
    %v978 = vld [vmem:[%s2 + $0x30] sm:$0xff]
    %v979 = vld [vmem:[%s2 + $0x48] sm:$0xff]
    %v980 = vld [vmem:[%s2 + $0x60] sm:$0xff]
    %v981 = vld [vmem:[%s2 + $0x78] sm:$0xff]
    %v982 = vld [vmem:[%s2 + $0x90] sm:$0xff]
    %v983 = vld [vmem:[%s2 + $0xa8] sm:$0xff]
    %v984 = vld [vmem:[%s6 + $0x4] sm:$0xff]
    %v985 = vld [vmem:[%s6 + $0x24] sm:$0xff]
    %v986 = vld [vmem:[%s6 + $0x44] sm:$0xff]
    %v987 = vld [vmem:[%s6 + $0x64] sm:$0xff]
    %v988 = vld [vmem:[%s8 + $0x3] sm:$0x3]
    %v989 = vld [vmem:[%s6 + $0x8] sm:$0xf]
    %v990 = vld [vmem:[%s6 + $0x28] sm:$0xf]
    %v991 = vld [vmem:[%s6 + $0x48] sm:$0xf]
    %v992 = vld [vmem:[%s6 + $0x68] sm:$0xf]
    %v993 = vld [vmem:[%s8 + $0x4] sm:$0x1]
    %v994 = vpack.c.bf16 %v975, %v974
    %v996 = vlaneseq
    %v997 = vshrl.u32 %v996, 7
    %v998 = vsub.s32 0, %v997
    %v999 = vrot.slane %v988, %v998
    %v1000 = vlaneseq
    %v1001 = vshrl.u32 %v1000, 7
    %v1002 = vsub.s32 1, %v1001
    %v1003 = vrot.slane %v988, %v1002
    %v1008 = vunpack.c.l.b16 %v984
    %v1009 = vunpack.c.h.b16 %v984
    %v1010 = vunpack.c.l.b16 %v985
    %v1011 = vunpack.c.h.b16 %v985
    %v1012 = vunpack.c.l.b16 %v986
    %v1013 = vunpack.c.h.b16 %v986
    %v1014 = vunpack.c.l.b16 %v987
    %v1015 = vunpack.c.h.b16 %v987
    %v1016 = vpack.c.b16 %v1010, %v1008
    %v1017 = vpack.c.b16 %v1011, %v1009
    %v1018 = vpack.c.b16 %v1014, %v1012
    %v1019 = vpack.c.b16 %v1015, %v1013
    %1020 = vrot.lane.b32.xlu0 %v1016, 64
    %v1021 = vpop.permute.xlu0 %1020
    %1022 = vrot.lane.b32.xlu0 %v1017, 64
    %v1023 = vpop.permute.xlu0 %1022
    %1024 = vrot.lane.b32.xlu0 %v1018, 64
    %v1025 = vpop.permute.xlu0 %1024
    %1026 = vrot.lane.b32.xlu0 %v1019, 64
    %v1027 = vpop.permute.xlu0 %1026
    %vm1028 = vcmask 523264
    %v1029 = vsel %vm1028, %v1021, %v1023
    %v1030 = vsel %vm1028, %v1025, %v1027
    %1033 = vrot.lane.b32.xlu0 %v999, 32
    %v1034 = vpop.permute.xlu0 %1033
    %1035 = vrot.lane.b32.xlu0 %v1003, 32
    %v1036 = vpop.permute.xlu0 %1035
    %v1037 = vsel %vm199, %v1034, %v1036
    %v1040 = vsel %vm199, %v994, 0
    %1042 = vmatprep.subr.bf16.mxu0 0
    %1043 = vmatpush1.bf16.msra.mxu0 %v1029
    %1044 = vmatprep.subr.bf16.mxu0 0
    %1045 = vmatpush1.bf16.msra.mxu0 %v1030
    %1046 = vmatprep.subr.bf16.mxu0 0
    %1047 = vmatpush1.bf16.msra.mxu0 0
    %1048 = vmatprep.subr.bf16.mxu0 0
    %1049 = vmatpush1.bf16.msra.mxu0 0
    %1050 = vmatprep.subr.bf16.mxu0 0
    %1051 = vmatpush1.bf16.msra.mxu0 0
    %1052 = vmatprep.subr.bf16.mxu0 0
    %1053 = vmatpush1.bf16.msra.mxu0 0
    %1054 = vmatprep.subr.bf16.mxu0 0
    %1055 = vmatpush1.bf16.msra.mxu0 0
    %1056 = vmatprep.subr.bf16.mxu0 0
    %1057 = vmatpush1.bf16.msra.mxu0 0
    %1058 = vmatprep.subr.bf16.mxu0 0
    %1059 = vmatpush1.bf16.msra.mxu0 0
    %1060 = vmatprep.subr.bf16.mxu0 0
    %1061 = vmatpush1.bf16.msra.mxu0 0
    %1062 = vmatprep.subr.bf16.mxu0 0
    %1063 = vmatpush1.bf16.msra.mxu0 0
    %1064 = vmatprep.subr.bf16.mxu0 0
    %1065 = vmatpush1.bf16.msra.mxu0 0
    %1066 = vmatprep.subr.bf16.mxu0 0
    %1067 = vmatpush1.bf16.msra.mxu0 0
    %1068 = vmatprep.subr.bf16.mxu0 0
    %1069 = vmatpush1.bf16.msra.mxu0 0
    %1070 = vmatprep.subr.bf16.mxu0 0
    %1071 = vmatpush1.bf16.msra.mxu0 0
    %1072 = vmatprep.subr.bf16.mxu0 0
    %1073 = vmatpush1.bf16.msra.mxu0 0
    %1074 = vmatprep.mubr.bf16.mxu0 0
    %1075 = vmatmul.mubr.bf16.gmra.mrb[0].mxu0 %v1040
    %v1076 = vpop.f32.mrb[0].mxu0
    %v1077 = vadd.f32 %v1037, %v1076
    %v1078 = vpop.f32.mrb[0].mxu0
    %v1079 = vpop.f32.mrb[0].mxu0
    %v1080 = vadd.f32 %v1037, %v1079
    %v1081 = vpop.f32.mrb[0].mxu0
    %1082 = vdwg.mxu0
    %1085 = vrot.lane.b32.xlu0 %v1077, 120
    %v1086 = vpop.permute.xlu0 %1085
    %1087 = vrot.lane.b32.xlu0 %v1080, 120
    %v1088 = vpop.permute.xlu0 %1087
    %1091 = vrot.lane.b32.xlu0 %v1077, 112
    %v1092 = vpop.permute.xlu0 %1091
    %1093 = vrot.lane.b32.xlu0 %v1080, 112
    %v1094 = vpop.permute.xlu0 %1093
    %1097 = vrot.lane.b32.xlu0 %v1077, 104
    %v1098 = vpop.permute.xlu0 %1097
    %1099 = vrot.lane.b32.xlu0 %v1080, 104
    %v1100 = vpop.permute.xlu0 %1099
    %v1103 = vpack.c.bf16 %v1080, %v1077
    %v1104 = vpack.c.bf16 %v1088, %v1086
    %v1105 = vpack.c.bf16 %v1094, %v1092
    %v1106 = vpack.c.bf16 %v1100, %v1098
    %1111 = vrot.lane.b32.xlu0 %v1103, 96
    %v1112 = vpop.permute.xlu0 %1111
    %1113 = vrot.lane.b32.xlu0 %v1104, 96
    %v1114 = vpop.permute.xlu0 %1113
    %1115 = vrot.lane.b32.xlu0 %v1105, 96
    %v1116 = vpop.permute.xlu0 %1115
    %1117 = vrot.lane.b32.xlu0 %v1106, 96
    %v1118 = vpop.permute.xlu0 %1117
    %v1120 = vsel %vm372, %v1103, 0
    %v1123 = vsel %vm372, %v1104, 0
    %v1126 = vsel %vm372, %v1105, 0
    %v1129 = vsel %vm372, %v1106, 0
    %v1132 = vsel %vm372, %v1112, 0
    %v1135 = vsel %vm372, %v1114, 0
    %v1138 = vsel %vm372, %v1116, 0
    %v1141 = vsel %vm372, %v1118, 0
    %1143 = vmatprep.subr.bf16.mxu0 0
    %1144 = vmatpush1.bf16.xpose.msra.mxu0 %v1132
    %1145 = vmatprep.subr.bf16.mxu0 0
    %1146 = vmatpush1.bf16.xpose.msra.mxu0 %v1135
    %1147 = vmatprep.subr.bf16.mxu0 0
    %1148 = vmatpush1.bf16.xpose.msra.mxu0 %v1138
    %1149 = vmatprep.subr.bf16.mxu0 0
    %1150 = vmatpush1.bf16.xpose.msra.mxu0 %v1141
    %1151 = vmatprep.subr.bf16.mxu0 0
    %1152 = vmatpush1.bf16.xpose.msra.mxu0 0
    %1153 = vmatprep.subr.bf16.mxu0 0
    %1154 = vmatpush1.bf16.xpose.msra.mxu0 0
    %1155 = vmatprep.subr.bf16.mxu0 0
    %1156 = vmatpush1.bf16.xpose.msra.mxu0 0
    %1157 = vmatprep.subr.bf16.mxu0 0
    %1158 = vmatpush1.bf16.xpose.msra.mxu0 0
    %1159 = vmatprep.subr.bf16.mxu0 0
    %1160 = vmatpush1.bf16.xpose.msra.mxu0 0
    %1161 = vmatprep.subr.bf16.mxu0 0
    %1162 = vmatpush1.bf16.xpose.msra.mxu0 0
    %1163 = vmatprep.subr.bf16.mxu0 0
    %1164 = vmatpush1.bf16.xpose.msra.mxu0 0
    %1165 = vmatprep.subr.bf16.mxu0 0
    %1166 = vmatpush1.bf16.xpose.msra.mxu0 0
    %1167 = vmatprep.subr.bf16.mxu0 0
    %1168 = vmatpush1.bf16.xpose.msra.mxu0 0
    %1169 = vmatprep.subr.bf16.mxu0 0
    %1170 = vmatpush1.bf16.xpose.msra.mxu0 0
    %1171 = vmatprep.subr.bf16.mxu0 0
    %1172 = vmatpush1.bf16.xpose.msra.mxu0 0
    %1173 = vmatprep.subr.bf16.mxu0 0
    %1174 = vmatpush1.bf16.xpose.msra.mxu0 0
    %1175 = vmatprep.mubr.bf16.mxu0 0
    %1176 = vmatmul.mubr.bf16.gmra.mrb[0].mxu0 %v1120
    %v1177 = vpop.f32.mrb[0].mxu0
    %v1178 = vadd.f32 0.0, %v1177
    %v1179 = vpop.f32.mrb[0].mxu0
    %v1180 = vpop.f32.mrb[0].mxu0
    %v1181 = vadd.f32 0.0, %v1180
    %v1182 = vpop.f32.mrb[0].mxu0
    %1183 = vmatprep.mubr.bf16.mxu0 0
    %1184 = vmatmul.mubr.bf16.gmra.mrb[0].mxu0 %v1123
    %v1185 = vpop.f32.mrb[0].mxu0
    %v1186 = vadd.f32 0.0, %v1185
    %v1187 = vpop.f32.mrb[0].mxu0
    %v1188 = vpop.f32.mrb[0].mxu0
    %v1189 = vadd.f32 0.0, %v1188
    %v1190 = vpop.f32.mrb[0].mxu0
    %1191 = vmatprep.mubr.bf16.mxu0 0
    %1192 = vmatmul.mubr.bf16.gmra.mrb[0].mxu0 %v1126
    %v1193 = vpop.f32.mrb[0].mxu0
    %v1194 = vadd.f32 0.0, %v1193
    %v1195 = vpop.f32.mrb[0].mxu0
    %v1196 = vpop.f32.mrb[0].mxu0
    %v1197 = vadd.f32 0.0, %v1196
    %v1198 = vpop.f32.mrb[0].mxu0
    %1199 = vmatprep.mubr.bf16.mxu0 0
    %1200 = vmatmul.mubr.bf16.gmra.mrb[0].mxu0 %v1129
    %v1201 = vpop.f32.mrb[0].mxu0
    %v1202 = vadd.f32 0.0, %v1201
    %v1203 = vpop.f32.mrb[0].mxu0
    %v1204 = vpop.f32.mrb[0].mxu0
    %v1205 = vadd.f32 0.0, %v1204
    %v1206 = vpop.f32.mrb[0].mxu0
    %1207 = vdwg.mxu0
    %v1208 = vmul.f32 %v1178, 0.35355338
    %v1209 = vmul.f32 %v1181, 0.35355338
    %v1210 = vmul.f32 %v1186, 0.35355338
    %v1211 = vmul.f32 %v1189, 0.35355338
    %v1212 = vmul.f32 %v1194, 0.35355338
    %v1213 = vmul.f32 %v1197, 0.35355338
    %v1214 = vmul.f32 %v1202, 0.35355338
    %v1215 = vmul.f32 %v1205, 0.35355338
    %1224 = vrot.lane.b32.xlu0 %v976, 88
    %v1225 = vpop.permute.xlu0 %1224
    %1226 = vrot.lane.b32.xlu0 %v977, 88
    %v1227 = vpop.permute.xlu0 %1226
    %1228 = vrot.lane.b32.xlu0 %v978, 88
    %v1229 = vpop.permute.xlu0 %1228
    %1230 = vrot.lane.b32.xlu0 %v979, 88
    %v1231 = vpop.permute.xlu0 %1230
    %1232 = vrot.lane.b32.xlu0 %v980, 88
    %v1233 = vpop.permute.xlu0 %1232
    %1234 = vrot.lane.b32.xlu0 %v981, 88
    %v1235 = vpop.permute.xlu0 %1234
    %1236 = vrot.lane.b32.xlu0 %v982, 88
    %v1237 = vpop.permute.xlu0 %1236
    %1238 = vrot.lane.b32.xlu0 %v983, 88
    %v1239 = vpop.permute.xlu0 %1238
    %v1248 = vadd.f32 %v1208, %v1225
    %v1249 = vadd.f32 %v1209, %v1227
    %v1250 = vadd.f32 %v1210, %v1229
    %v1251 = vadd.f32 %v1211, %v1231
    %v1252 = vadd.f32 %v1212, %v1233
    %v1253 = vadd.f32 %v1213, %v1235
    %v1254 = vadd.f32 %v1214, %v1237
    %v1255 = vadd.f32 %v1215, %v1239
    %v1256 = vsel %vm278, %v1248, -inf
    %1257 = vmax.xlane.f32.xlu0 %v1256
    %v1258 = vpop.xlane.xlu0 %1257
    %v1259 = vsel %vm278, %v1249, -inf
    %1260 = vmax.xlane.f32.xlu0 %v1259
    %v1261 = vpop.xlane.xlu0 %1260
    %v1262 = vsel %vm278, %v1250, -inf
    %1263 = vmax.xlane.f32.xlu0 %v1262
    %v1264 = vpop.xlane.xlu0 %1263
    %v1265 = vsel %vm278, %v1251, -inf
    %1266 = vmax.xlane.f32.xlu0 %v1265
    %v1267 = vpop.xlane.xlu0 %1266
    %v1268 = vsel %vm278, %v1252, -inf
    %1269 = vmax.xlane.f32.xlu0 %v1268
    %v1270 = vpop.xlane.xlu0 %1269
    %v1271 = vsel %vm278, %v1253, -inf
    %1272 = vmax.xlane.f32.xlu0 %v1271
    %v1273 = vpop.xlane.xlu0 %1272
    %v1274 = vsel %vm278, %v1254, -inf
    %1275 = vmax.xlane.f32.xlu0 %v1274
    %v1276 = vpop.xlane.xlu0 %1275
    %v1277 = vsel %vm278, %v1255, -inf
    %1278 = vmax.xlane.f32.xlu0 %v1277
    %v1279 = vpop.xlane.xlu0 %1278
    %v1280 = vsub.f32 %v1248, %v1258
    %v1281 = vsub.f32 %v1249, %v1261
    %v1282 = vsub.f32 %v1250, %v1264
    %v1283 = vsub.f32 %v1251, %v1267
    %v1284 = vsub.f32 %v1252, %v1270
    %v1285 = vsub.f32 %v1253, %v1273
    %v1286 = vsub.f32 %v1254, %v1276
    %v1287 = vsub.f32 %v1255, %v1279
    %v1288 = vmul.f32 %v1280, 1.442695
    %v1289 = vpow.pop %v1288
    %v1290 = vmul.f32 %v1281, 1.442695
    %v1291 = vpow.pop %v1290
    %v1292 = vmul.f32 %v1282, 1.442695
    %v1293 = vpow.pop %v1292
    %v1294 = vmul.f32 %v1283, 1.442695
    %v1295 = vpow.pop %v1294
    %v1296 = vmul.f32 %v1284, 1.442695
    %v1297 = vpow.pop %v1296
    %v1298 = vmul.f32 %v1285, 1.442695
    %v1299 = vpow.pop %v1298
    %v1300 = vmul.f32 %v1286, 1.442695
    %v1301 = vpow.pop %v1300
    %v1302 = vmul.f32 %v1287, 1.442695
    %v1303 = vpow.pop %v1302
    %v1304 = vsel %vm278, %v1289, 0.0
    %1305 = vadd.xlane.f32.xlu0 %v1304
    %v1306 = vpop.xlane.xlu0 %1305
    %v1307 = vsel %vm278, %v1291, 0.0
    %1308 = vadd.xlane.f32.xlu0 %v1307
    %v1309 = vpop.xlane.xlu0 %1308
    %v1310 = vsel %vm278, %v1293, 0.0
    %1311 = vadd.xlane.f32.xlu0 %v1310
    %v1312 = vpop.xlane.xlu0 %1311
    %v1313 = vsel %vm278, %v1295, 0.0
    %1314 = vadd.xlane.f32.xlu0 %v1313
    %v1315 = vpop.xlane.xlu0 %1314
    %v1316 = vsel %vm278, %v1297, 0.0
    %1317 = vadd.xlane.f32.xlu0 %v1316
    %v1318 = vpop.xlane.xlu0 %1317
    %v1319 = vsel %vm278, %v1299, 0.0
    %1320 = vadd.xlane.f32.xlu0 %v1319
    %v1321 = vpop.xlane.xlu0 %1320
    %v1322 = vsel %vm278, %v1301, 0.0
    %1323 = vadd.xlane.f32.xlu0 %v1322
    %v1324 = vpop.xlane.xlu0 %1323
    %v1325 = vsel %vm278, %v1303, 0.0
    %1326 = vadd.xlane.f32.xlu0 %v1325
    %v1327 = vpop.xlane.xlu0 %1326
    %v1328 = vrcp.pop %v1306
    %v1329 = vrcp.pop %v1309
    %v1330 = vrcp.pop %v1312
    %v1331 = vrcp.pop %v1315
    %v1332 = vrcp.pop %v1318
    %v1333 = vrcp.pop %v1321
    %v1334 = vrcp.pop %v1324
    %v1335 = vrcp.pop %v1327
    %v1336 = vmul.f32 %v1289, %v1328
    %v1337 = vmul.f32 %v1291, %v1329
    %v1338 = vmul.f32 %v1293, %v1330
    %v1339 = vmul.f32 %v1295, %v1331
    %v1340 = vmul.f32 %v1297, %v1332
    %v1341 = vmul.f32 %v1299, %v1333
    %v1342 = vmul.f32 %v1301, %v1334
    %v1343 = vmul.f32 %v1303, %v1335
    %v1344 = vpack.c.bf16 %v1337, %v1336
    %v1345 = vpack.c.bf16 %v1339, %v1338
    %v1346 = vpack.c.bf16 %v1341, %v1340
    %v1347 = vpack.c.bf16 %v1343, %v1342
    %1348 = vrot.lane.b32.xlu0 %v1103, 64
    %v1349 = vpop.permute.xlu0 %1348
    %1350 = vrot.lane.b32.xlu0 %v1104, 64
    %v1351 = vpop.permute.xlu0 %1350
    %1352 = vrot.lane.b32.xlu0 %v1105, 64
    %v1353 = vpop.permute.xlu0 %1352
    %1354 = vrot.lane.b32.xlu0 %v1106, 64
    %v1355 = vpop.permute.xlu0 %1354
    %v1361 = vsel %vm278, %v1344, 0
    %v1364 = vsel %vm278, %v1345, 0
    %v1367 = vsel %vm278, %v1346, 0
    %v1370 = vsel %vm278, %v1347, 0
    %1372 = vmatprep.subr.bf16.mxu0 0
    %1373 = vmatpush1.bf16.msra.mxu0 %v1349
    %1374 = vmatprep.subr.bf16.mxu0 0
    %1375 = vmatpush1.bf16.msra.mxu0 %v1351
    %1376 = vmatprep.subr.bf16.mxu0 0
    %1377 = vmatpush1.bf16.msra.mxu0 %v1353
    %1378 = vmatprep.subr.bf16.mxu0 0
    %1379 = vmatpush1.bf16.msra.mxu0 %v1355
    %1380 = vmatprep.subr.bf16.mxu0 0
    %1381 = vmatpush1.bf16.msra.mxu0 0
    %1382 = vmatprep.subr.bf16.mxu0 0
    %1383 = vmatpush1.bf16.msra.mxu0 0
    %1384 = vmatprep.subr.bf16.mxu0 0
    %1385 = vmatpush1.bf16.msra.mxu0 0
    %1386 = vmatprep.subr.bf16.mxu0 0
    %1387 = vmatpush1.bf16.msra.mxu0 0
    %1388 = vmatprep.subr.bf16.mxu0 0
    %1389 = vmatpush1.bf16.msra.mxu0 0
    %1390 = vmatprep.subr.bf16.mxu0 0
    %1391 = vmatpush1.bf16.msra.mxu0 0
    %1392 = vmatprep.subr.bf16.mxu0 0
    %1393 = vmatpush1.bf16.msra.mxu0 0
    %1394 = vmatprep.subr.bf16.mxu0 0
    %1395 = vmatpush1.bf16.msra.mxu0 0
    %1396 = vmatprep.subr.bf16.mxu0 0
    %1397 = vmatpush1.bf16.msra.mxu0 0
    %1398 = vmatprep.subr.bf16.mxu0 0
    %1399 = vmatpush1.bf16.msra.mxu0 0
    %1400 = vmatprep.subr.bf16.mxu0 0
    %1401 = vmatpush1.bf16.msra.mxu0 0
    %1402 = vmatprep.subr.bf16.mxu0 0
    %1403 = vmatpush1.bf16.msra.mxu0 0
    %1404 = vmatprep.mubr.bf16.mxu0 0
    %1405 = vmatmul.mubr.bf16.gmra.mrb[0].mxu0 %v1361
    %v1406 = vpop.f32.mrb[0].mxu0
    %v1407 = vadd.f32 0.0, %v1406
    %v1408 = vpop.f32.mrb[0].mxu0
    %v1409 = vpop.f32.mrb[0].mxu0
    %v1410 = vadd.f32 0.0, %v1409
    %v1411 = vpop.f32.mrb[0].mxu0
    %1412 = vmatprep.mubr.bf16.mxu0 0
    %1413 = vmatmul.mubr.bf16.gmra.mrb[0].mxu0 %v1364
    %v1414 = vpop.f32.mrb[0].mxu0
    %v1415 = vadd.f32 0.0, %v1414
    %v1416 = vpop.f32.mrb[0].mxu0
    %v1417 = vpop.f32.mrb[0].mxu0
    %v1418 = vadd.f32 0.0, %v1417
    %v1419 = vpop.f32.mrb[0].mxu0
    %1420 = vmatprep.mubr.bf16.mxu0 0
    %1421 = vmatmul.mubr.bf16.gmra.mrb[0].mxu0 %v1367
    %v1422 = vpop.f32.mrb[0].mxu0
    %v1423 = vadd.f32 0.0, %v1422
    %v1424 = vpop.f32.mrb[0].mxu0
    %v1425 = vpop.f32.mrb[0].mxu0
    %v1426 = vadd.f32 0.0, %v1425
    %v1427 = vpop.f32.mrb[0].mxu0
    %1428 = vmatprep.mubr.bf16.mxu0 0
    %1429 = vmatmul.mubr.bf16.gmra.mrb[0].mxu0 %v1370
    %v1430 = vpop.f32.mrb[0].mxu0
    %v1431 = vadd.f32 0.0, %v1430
    %v1432 = vpop.f32.mrb[0].mxu0
    %v1433 = vpop.f32.mrb[0].mxu0
    %v1434 = vadd.f32 0.0, %v1433
    %v1435 = vpop.f32.mrb[0].mxu0
    %1436 = vdwg.mxu0
    %1439 = vrot.lane.b32.xlu0 %v1415, 8
    %v1440 = vpop.permute.xlu0 %1439
    %1441 = vrot.lane.b32.xlu0 %v1418, 8
    %v1442 = vpop.permute.xlu0 %1441
    %1447 = vrot.lane.b32.xlu0 %v1423, 16
    %v1448 = vpop.permute.xlu0 %1447
    %1449 = vrot.lane.b32.xlu0 %v1426, 16
    %v1450 = vpop.permute.xlu0 %1449
    %1455 = vrot.lane.b32.xlu0 %v1431, 24
    %v1456 = vpop.permute.xlu0 %1455
    %1457 = vrot.lane.b32.xlu0 %v1434, 24
    %v1458 = vpop.permute.xlu0 %1457
    %v1461 = vsel %vm372, %v1407, %v1440
    %v1462 = vsel %vm372, %v1410, %v1442
    %v1463 = vsel %vm625, %v1461, %v1448
    %v1464 = vsel %vm625, %v1462, %v1450
    %v1465 = vsel %vm628, %v1463, %v1456
    %v1466 = vsel %vm628, %v1464, %v1458
    %v1467 = vpack.c.bf16 %v1466, %v1465
    %v1469 = vlaneseq
    %v1470 = vshrl.u32 %v1469, 7
    %v1471 = vsub.s32 0, %v1470
    %v1472 = vrot.slane %v993, %v1471
    %v1477 = vunpack.c.l.b16 %v989
    %v1478 = vunpack.c.l.b16 %v990
    %v1479 = vunpack.c.l.b16 %v991
    %v1480 = vunpack.c.l.b16 %v992
    %v1481 = vpack.c.b16 %v1478, %v1477
    %v1482 = vpack.c.b16 %v1480, %v1479
    %1483 = vrot.lane.b32.xlu0 %v1481, 96
    %v1484 = vpop.permute.xlu0 %1483
    %1485 = vrot.lane.b32.xlu0 %v1482, 96
    %v1486 = vpop.permute.xlu0 %1485
    %1489 = vrot.lane.b32.xlu0 %v1472, 64
    %v1490 = vpop.permute.xlu0 %1489
    %v1493 = vsel %vm199, %v1467, 0
    %1495 = vmatprep.subr.bf16.mxu0 0
    %1496 = vmatpush1.bf16.msra.mxu0 %v1484
    %1497 = vmatprep.subr.bf16.mxu0 0
    %1498 = vmatpush1.bf16.msra.mxu0 %v1486
    %1499 = vmatprep.subr.bf16.mxu0 0
    %1500 = vmatpush1.bf16.msra.mxu0 0
    %1501 = vmatprep.subr.bf16.mxu0 0
    %1502 = vmatpush1.bf16.msra.mxu0 0
    %1503 = vmatprep.subr.bf16.mxu0 0
    %1504 = vmatpush1.bf16.msra.mxu0 0
    %1505 = vmatprep.subr.bf16.mxu0 0
    %1506 = vmatpush1.bf16.msra.mxu0 0
    %1507 = vmatprep.subr.bf16.mxu0 0
    %1508 = vmatpush1.bf16.msra.mxu0 0
    %1509 = vmatprep.subr.bf16.mxu0 0
    %1510 = vmatpush1.bf16.msra.mxu0 0
    %1511 = vmatprep.subr.bf16.mxu0 0
    %1512 = vmatpush1.bf16.msra.mxu0 0
    %1513 = vmatprep.subr.bf16.mxu0 0
    %1514 = vmatpush1.bf16.msra.mxu0 0
    %1515 = vmatprep.subr.bf16.mxu0 0
    %1516 = vmatpush1.bf16.msra.mxu0 0
    %1517 = vmatprep.subr.bf16.mxu0 0
    %1518 = vmatpush1.bf16.msra.mxu0 0
    %1519 = vmatprep.subr.bf16.mxu0 0
    %1520 = vmatpush1.bf16.msra.mxu0 0
    %1521 = vmatprep.subr.bf16.mxu0 0
    %1522 = vmatpush1.bf16.msra.mxu0 0
    %1523 = vmatprep.subr.bf16.mxu0 0
    %1524 = vmatpush1.bf16.msra.mxu0 0
    %1525 = vmatprep.subr.bf16.mxu0 0
    %1526 = vmatpush1.bf16.msra.mxu0 0
    %1527 = vmatprep.mubr.bf16.mxu0 0
    %1528 = vmatmul.mubr.bf16.gmra.mrb[0].mxu0 %v1493
    %v1529 = vpop.f32.mrb[0].mxu0
    %v1530 = vadd.f32 %v1490, %v1529
    %v1531 = vpop.f32.mrb[0].mxu0
    %v1532 = vpop.f32.mrb[0].mxu0
    %v1533 = vadd.f32 %v1490, %v1532
    %v1534 = vpop.f32.mrb[0].mxu0
    %1535 = vdwg.mxu0
    %v1536 = vadd.f32 %v1530, %v974
    %v1537 = vadd.f32 %v1533, %v975
    %v1538 = vld [vmem:[%s8 + $0x5] sm:$0x1]
    %v1539 = vsel %vm199, %v1536, 0.0
    %1540 = vadd.xlane.f32.xlu0 %v1539
    %v1541 = vpop.xlane.xlu0 %1540
    %v1542 = vsel %vm199, %v1537, 0.0
    %1543 = vadd.xlane.f32.xlu0 %v1542
    %v1544 = vpop.xlane.xlu0 %1543
    %v1545 = vmul.f32 %v1541, %v207
    %v1546 = vmul.f32 %v1544, %v207
    %v1547 = vsub.f32 %v1536, %v1545
    %v1548 = vsub.f32 %v1537, %v1546
    %v1549 = vmul.f32 %v1547, %v1547
    %v1550 = vmul.f32 %v1548, %v1548
    %v1551 = vsel %vm199, %v1549, 0.0
    %1552 = vadd.xlane.f32.xlu0 %v1551
    %v1553 = vpop.xlane.xlu0 %1552
    %v1554 = vsel %vm199, %v1550, 0.0
    %1555 = vadd.xlane.f32.xlu0 %v1554
    %v1556 = vpop.xlane.xlu0 %1555
    %v1557 = vmul.f32 %v1553, %v207
    %v1558 = vmul.f32 %v1556, %v207
    %v1559 = vadd.f32 %v1557, 1e-12
    %v1560 = vadd.f32 %v1558, 1e-12
    %v1561 = vrsqrt.pop %v1559
    %v1562 = vrsqrt.pop %v1560
    %v1563 = vmul.f32 %v1547, %v1561
    %v1564 = vmul.f32 %v1548, %v1562
    %1565 = vrot.lane.b32.xlu0 %v1472, 32
    %v1566 = vpop.permute.xlu0 %1565
    %v1568 = vmul.f32 %v1563, %v1566
    %v1569 = vmul.f32 %v1564, %v1566
    %v1571 = vlaneseq
    %v1572 = vshrl.u32 %v1571, 7
    %v1573 = vsub.s32 0, %v1572
    %v1574 = vrot.slane %v1538, %v1573
    %v1576 = vadd.f32 %v1568, %v1574
    %v1577 = vadd.f32 %v1569, %v1574
    %v1578 = vld [vmem:[%s2] sm:$0xff]
    %v1579 = vld [vmem:[%s2 + $0x8] sm:$0xff]
    %v1580 = vld [vmem:[%s2 + $0x18] sm:$0xff]
    %v1581 = vld [vmem:[%s2 + $0x20] sm:$0xff]
    %v1582 = vld [vmem:[%s2 + $0x30] sm:$0xff]
    %v1583 = vld [vmem:[%s2 + $0x38] sm:$0xff]
    %v1584 = vld [vmem:[%s2 + $0x48] sm:$0xff]
    %v1585 = vld [vmem:[%s2 + $0x50] sm:$0xff]
    %v1586 = vld [vmem:[%s2 + $0x60] sm:$0xff]
    %v1587 = vld [vmem:[%s2 + $0x68] sm:$0xff]
    %v1588 = vld [vmem:[%s2 + $0x78] sm:$0xff]
    %v1589 = vld [vmem:[%s2 + $0x80] sm:$0xff]
    %v1590 = vld [vmem:[%s2 + $0x90] sm:$0xff]
    %v1591 = vld [vmem:[%s2 + $0x98] sm:$0xff]
    %v1592 = vld [vmem:[%s2 + $0xa8] sm:$0xff]
    %v1593 = vld [vmem:[%s2 + $0xb0] sm:$0xff]
    %v1594 = vld [vmem:[%s6 + $0x8] sm:$0xff]
    %v1595 = vld [vmem:[%s6 + $0x28] sm:$0xff]
    %v1596 = vld [vmem:[%s6 + $0x48] sm:$0xff]
    %v1597 = vld [vmem:[%s6 + $0x68] sm:$0xff]
    %v1598 = vld [vmem:[%s6 + $0xc] sm:$0xf]
    %v1599 = vld [vmem:[%s6 + $0x2c] sm:$0xf]
    %v1600 = vld [vmem:[%s6 + $0x4c] sm:$0xf]
    %v1601 = vld [vmem:[%s6 + $0x6c] sm:$0xf]
    %v1602 = vld [vmem:[%s8 + $0x6] sm:$0x1]
    %v1603 = vpack.c.bf16 %v1577, %v1576
    %1604 = vrot.lane.b32.xlu0 %v1481, 64
    %v1605 = vpop.permute.xlu0 %1604
    %1606 = vrot.lane.b32.xlu0 %v1482, 64
    %v1607 = vpop.permute.xlu0 %1606
    %1610 = vrot.lane.b32.xlu0 %v1574, 96
    %v1611 = vpop.permute.xlu0 %1610
    %v1614 = vsel %vm199, %v1603, 0
    %1616 = vmatprep.subr.bf16.mxu0 0
    %1617 = vmatpush1.bf16.msra.mxu0 %v1605
    %1618 = vmatprep.subr.bf16.mxu0 0
    %1619 = vmatpush1.bf16.msra.mxu0 %v1607
    %1620 = vmatprep.subr.bf16.mxu0 0
    %1621 = vmatpush1.bf16.msra.mxu0 0
    %1622 = vmatprep.subr.bf16.mxu0 0
    %1623 = vmatpush1.bf16.msra.mxu0 0
    %1624 = vmatprep.subr.bf16.mxu0 0
    %1625 = vmatpush1.bf16.msra.mxu0 0
    %1626 = vmatprep.subr.bf16.mxu0 0
    %1627 = vmatpush1.bf16.msra.mxu0 0
    %1628 = vmatprep.subr.bf16.mxu0 0
    %1629 = vmatpush1.bf16.msra.mxu0 0
    %1630 = vmatprep.subr.bf16.mxu0 0
    %1631 = vmatpush1.bf16.msra.mxu0 0
    %1632 = vmatprep.subr.bf16.mxu0 0
    %1633 = vmatpush1.bf16.msra.mxu0 0
    %1634 = vmatprep.subr.bf16.mxu0 0
    %1635 = vmatpush1.bf16.msra.mxu0 0
    %1636 = vmatprep.subr.bf16.mxu0 0
    %1637 = vmatpush1.bf16.msra.mxu0 0
    %1638 = vmatprep.subr.bf16.mxu0 0
    %1639 = vmatpush1.bf16.msra.mxu0 0
    %1640 = vmatprep.subr.bf16.mxu0 0
    %1641 = vmatpush1.bf16.msra.mxu0 0
    %1642 = vmatprep.subr.bf16.mxu0 0
    %1643 = vmatpush1.bf16.msra.mxu0 0
    %1644 = vmatprep.subr.bf16.mxu0 0
    %1645 = vmatpush1.bf16.msra.mxu0 0
    %1646 = vmatprep.subr.bf16.mxu0 0
    %1647 = vmatpush1.bf16.msra.mxu0 0
    %1648 = vmatprep.mubr.bf16.mxu0 0
    %1649 = vmatmul.mubr.bf16.gmra.mrb[0].mxu0 %v1614
    %v1650 = vpop.f32.mrb[0].mxu0
    %v1651 = vadd.f32 %v1611, %v1650
    %v1652 = vpop.f32.mrb[0].mxu0
    %v1653 = vpop.f32.mrb[0].mxu0
    %v1654 = vadd.f32 %v1611, %v1653
    %v1655 = vpop.f32.mrb[0].mxu0
    %1656 = vdwg.mxu0
    %v1657 = vpack.c.bf16 %v937, %v936
    %v1662 = vunpack.c.l.b16 %v1594
    %v1663 = vunpack.c.h.b16 %v1594
    %v1664 = vunpack.c.l.b16 %v1595
    %v1665 = vunpack.c.h.b16 %v1595
    %v1666 = vunpack.c.l.b16 %v1596
    %v1667 = vunpack.c.h.b16 %v1596
    %v1668 = vunpack.c.l.b16 %v1597
    %v1669 = vunpack.c.h.b16 %v1597
    %v1670 = vpack.c.b16 %v1664, %v1662
    %v1671 = vpack.c.b16 %v1665, %v1663
    %v1672 = vpack.c.b16 %v1668, %v1666
    %v1673 = vpack.c.b16 %v1669, %v1667
    %1674 = vrot.lane.b32.xlu0 %v1670, 32
    %v1675 = vpop.permute.xlu0 %1674
    %1676 = vrot.lane.b32.xlu0 %v1671, 32
    %v1677 = vpop.permute.xlu0 %1676
    %1678 = vrot.lane.b32.xlu0 %v1672, 32
    %v1679 = vpop.permute.xlu0 %1678
    %1680 = vrot.lane.b32.xlu0 %v1673, 32
    %v1681 = vpop.permute.xlu0 %1680
    %vm1682 = vcmask 261120
    %v1683 = vsel %vm1682, %v1675, %v1677
    %v1684 = vsel %vm1682, %v1679, %v1681
    %1687 = vrot.lane.b32.xlu0 %v1574, 64
    %v1688 = vpop.permute.xlu0 %1687
    %v1691 = vsel %vm199, %v1657, 0
    %1693 = vmatprep.subr.bf16.mxu0 0
    %1694 = vmatpush1.bf16.msra.mxu0 %v1683
    %1695 = vmatprep.subr.bf16.mxu0 0
    %1696 = vmatpush1.bf16.msra.mxu0 %v1684
    %1697 = vmatprep.subr.bf16.mxu0 0
    %1698 = vmatpush1.bf16.msra.mxu0 0
    %1699 = vmatprep.subr.bf16.mxu0 0
    %1700 = vmatpush1.bf16.msra.mxu0 0
    %1701 = vmatprep.subr.bf16.mxu0 0
    %1702 = vmatpush1.bf16.msra.mxu0 0
    %1703 = vmatprep.subr.bf16.mxu0 0
    %1704 = vmatpush1.bf16.msra.mxu0 0
    %1705 = vmatprep.subr.bf16.mxu0 0
    %1706 = vmatpush1.bf16.msra.mxu0 0
    %1707 = vmatprep.subr.bf16.mxu0 0
    %1708 = vmatpush1.bf16.msra.mxu0 0
    %1709 = vmatprep.subr.bf16.mxu0 0
    %1710 = vmatpush1.bf16.msra.mxu0 0
    %1711 = vmatprep.subr.bf16.mxu0 0
    %1712 = vmatpush1.bf16.msra.mxu0 0
    %1713 = vmatprep.subr.bf16.mxu0 0
    %1714 = vmatpush1.bf16.msra.mxu0 0
    %1715 = vmatprep.subr.bf16.mxu0 0
    %1716 = vmatpush1.bf16.msra.mxu0 0
    %1717 = vmatprep.subr.bf16.mxu0 0
    %1718 = vmatpush1.bf16.msra.mxu0 0
    %1719 = vmatprep.subr.bf16.mxu0 0
    %1720 = vmatpush1.bf16.msra.mxu0 0
    %1721 = vmatprep.subr.bf16.mxu0 0
    %1722 = vmatpush1.bf16.msra.mxu0 0
    %1723 = vmatprep.subr.bf16.mxu0 0
    %1724 = vmatpush1.bf16.msra.mxu0 0
    %1725 = vmatprep.mubr.bf16.mxu0 0
    %1726 = vmatmul.mubr.bf16.gmra.mrb[0].mxu0 %v1691
    %v1727 = vpop.f32.mrb[0].mxu0
    %v1728 = vadd.f32 %v1688, %v1727
    %v1729 = vpop.f32.mrb[0].mxu0
    %v1730 = vpop.f32.mrb[0].mxu0
    %v1731 = vadd.f32 %v1688, %v1730
    %v1732 = vpop.f32.mrb[0].mxu0
    %1733 = vdwg.mxu0
    %1736 = vrot.lane.b32.xlu0 %v1651, 120
    %v1737 = vpop.permute.xlu0 %1736
    %1738 = vrot.lane.b32.xlu0 %v1654, 120
    %v1739 = vpop.permute.xlu0 %1738
    %1742 = vrot.lane.b32.xlu0 %v1651, 112
    %v1743 = vpop.permute.xlu0 %1742
    %1744 = vrot.lane.b32.xlu0 %v1654, 112
    %v1745 = vpop.permute.xlu0 %1744
    %1748 = vrot.lane.b32.xlu0 %v1651, 104
    %v1749 = vpop.permute.xlu0 %1748
    %1750 = vrot.lane.b32.xlu0 %v1654, 104
    %v1751 = vpop.permute.xlu0 %1750
    %v1756 = vrot.slane %v1728, 6
    %v1757 = vrot.slane %v1731, 6
    %v1758 = vsel %vm327, %v1756, %v1757
    %1759 = vrot.lane.b32.xlu0 %v1756, 120
    %v1760 = vpop.permute.xlu0 %1759
    %1761 = vrot.lane.b32.xlu0 %v1758, 120
    %v1762 = vpop.permute.xlu0 %1761
    %v1765 = vrot.slane %v1728, 4
    %v1766 = vrot.slane %v1731, 4
    %v1767 = vsel %vm337, %v1765, %v1766
    %1768 = vrot.lane.b32.xlu0 %v1765, 112
    %v1769 = vpop.permute.xlu0 %1768
    %1770 = vrot.lane.b32.xlu0 %v1767, 112
    %v1771 = vpop.permute.xlu0 %1770
    %v1774 = vrot.slane %v1728, 2
    %v1775 = vrot.slane %v1731, 2
    %v1776 = vsel %vm347, %v1774, %v1775
    %1777 = vrot.lane.b32.xlu0 %v1774, 104
    %v1778 = vpop.permute.xlu0 %1777
    %1779 = vrot.lane.b32.xlu0 %v1776, 104
    %v1780 = vpop.permute.xlu0 %1779
    %v1783 = vsel %vm327, %v1731, %v1760
    %v1784 = vsel %vm337, %v1762, %v1769
    %v1785 = vsel %vm347, %v1771, %v1778
    %v1786 = vpack.c.bf16 %v1654, %v1651
    %v1787 = vpack.c.bf16 %v1739, %v1737
    %v1788 = vpack.c.bf16 %v1745, %v1743
    %v1789 = vpack.c.bf16 %v1751, %v1749
    %v1790 = vpack.c.bf16 %v1783, %v1728
    %v1791 = vpack.c.bf16 %v1785, %v1784
    %v1792 = vpack.c.bf16 %v1780, %v1780
    %v1794 = vsel %vm372, %v1786, 0
    %v1797 = vsel %vm372, %v1787, 0
    %v1800 = vsel %vm372, %v1788, 0
    %v1803 = vsel %vm372, %v1789, 0
    %v1806 = vsel %vm372, %v1790, 0
    %v1809 = vsel %vm372, %v1791, 0
    %v1812 = vsel %vm372, %v1792, 0
    %1814 = vmatprep.subr.bf16.mxu0 0
    %1815 = vmatpush1.bf16.xpose.msra.mxu0 %v1806
    %1816 = vmatprep.subr.bf16.mxu0 0
    %1817 = vmatpush1.bf16.xpose.msra.mxu0 %v1809
    %1818 = vmatprep.subr.bf16.mxu0 0
    %1819 = vmatpush1.bf16.xpose.msra.mxu0 %v1812
    %1820 = vmatprep.subr.bf16.mxu0 0
    %1821 = vmatpush1.bf16.xpose.msra.mxu0 0
    %1822 = vmatprep.subr.bf16.mxu0 0
    %1823 = vmatpush1.bf16.xpose.msra.mxu0 0
    %1824 = vmatprep.subr.bf16.mxu0 0
    %1825 = vmatpush1.bf16.xpose.msra.mxu0 0
    %1826 = vmatprep.subr.bf16.mxu0 0
    %1827 = vmatpush1.bf16.xpose.msra.mxu0 0
    %1828 = vmatprep.subr.bf16.mxu0 0
    %1829 = vmatpush1.bf16.xpose.msra.mxu0 0
    %1830 = vmatprep.subr.bf16.mxu0 0
    %1831 = vmatpush1.bf16.xpose.msra.mxu0 0
    %1832 = vmatprep.subr.bf16.mxu0 0
    %1833 = vmatpush1.bf16.xpose.msra.mxu0 0
    %1834 = vmatprep.subr.bf16.mxu0 0
    %1835 = vmatpush1.bf16.xpose.msra.mxu0 0
    %1836 = vmatprep.subr.bf16.mxu0 0
    %1837 = vmatpush1.bf16.xpose.msra.mxu0 0
    %1838 = vmatprep.subr.bf16.mxu0 0
    %1839 = vmatpush1.bf16.xpose.msra.mxu0 0
    %1840 = vmatprep.subr.bf16.mxu0 0
    %1841 = vmatpush1.bf16.xpose.msra.mxu0 0
    %1842 = vmatprep.subr.bf16.mxu0 0
    %1843 = vmatpush1.bf16.xpose.msra.mxu0 0
    %1844 = vmatprep.subr.bf16.mxu0 0
    %1845 = vmatpush1.bf16.xpose.msra.mxu0 0
    %1846 = vmatprep.mubr.bf16.mxu0 0
    %1847 = vmatmul.mubr.bf16.gmra.mrb[0].mxu0 %v1794
    %v1848 = vpop.f32.mrb[0].mxu0
    %v1849 = vadd.f32 0.0, %v1848
    %v1850 = vpop.f32.mrb[0].mxu0
    %v1851 = vpop.f32.mrb[0].mxu0
    %v1852 = vadd.f32 0.0, %v1851
    %v1853 = vpop.f32.mrb[0].mxu0
    %1854 = vmatprep.mubr.bf16.mxu0 0
    %1855 = vmatmul.mubr.bf16.gmra.mrb[0].mxu0 %v1797
    %v1856 = vpop.f32.mrb[0].mxu0
    %v1857 = vadd.f32 0.0, %v1856
    %v1858 = vpop.f32.mrb[0].mxu0
    %v1859 = vpop.f32.mrb[0].mxu0
    %v1860 = vadd.f32 0.0, %v1859
    %v1861 = vpop.f32.mrb[0].mxu0
    %1862 = vmatprep.mubr.bf16.mxu0 0
    %1863 = vmatmul.mubr.bf16.gmra.mrb[0].mxu0 %v1800
    %v1864 = vpop.f32.mrb[0].mxu0
    %v1865 = vadd.f32 0.0, %v1864
    %v1866 = vpop.f32.mrb[0].mxu0
    %v1867 = vpop.f32.mrb[0].mxu0
    %v1868 = vadd.f32 0.0, %v1867
    %v1869 = vpop.f32.mrb[0].mxu0
    %1870 = vmatprep.mubr.bf16.mxu0 0
    %1871 = vmatmul.mubr.bf16.gmra.mrb[0].mxu0 %v1803
    %v1872 = vpop.f32.mrb[0].mxu0
    %v1873 = vadd.f32 0.0, %v1872
    %v1874 = vpop.f32.mrb[0].mxu0
    %v1875 = vpop.f32.mrb[0].mxu0
    %v1876 = vadd.f32 0.0, %v1875
    %v1877 = vpop.f32.mrb[0].mxu0
    %1878 = vdwg.mxu0
    %v1879 = vmul.f32 %v1849, 0.35355338
    %v1880 = vmul.f32 %v1852, 0.35355338
    %v1881 = vmul.f32 %v1857, 0.35355338
    %v1882 = vmul.f32 %v1860, 0.35355338
    %v1883 = vmul.f32 %v1865, 0.35355338
    %v1884 = vmul.f32 %v1868, 0.35355338
    %v1885 = vmul.f32 %v1873, 0.35355338
    %v1886 = vmul.f32 %v1876, 0.35355338
    %1903 = vrot.lane.b32.xlu0 %v1578, 24
    %v1904 = vpop.permute.xlu0 %1903
    %1905 = vrot.lane.b32.xlu0 %v1579, 24
    %v1906 = vpop.permute.xlu0 %1905
    %1907 = vrot.lane.b32.xlu0 %v1580, 24
    %v1908 = vpop.permute.xlu0 %1907
    %1909 = vrot.lane.b32.xlu0 %v1581, 24
    %v1910 = vpop.permute.xlu0 %1909
    %1911 = vrot.lane.b32.xlu0 %v1582, 24
    %v1912 = vpop.permute.xlu0 %1911
    %1913 = vrot.lane.b32.xlu0 %v1583, 24
    %v1914 = vpop.permute.xlu0 %1913
    %1915 = vrot.lane.b32.xlu0 %v1584, 24
    %v1916 = vpop.permute.xlu0 %1915
    %1917 = vrot.lane.b32.xlu0 %v1585, 24
    %v1918 = vpop.permute.xlu0 %1917
    %1919 = vrot.lane.b32.xlu0 %v1586, 24
    %v1920 = vpop.permute.xlu0 %1919
    %1921 = vrot.lane.b32.xlu0 %v1587, 24
    %v1922 = vpop.permute.xlu0 %1921
    %1923 = vrot.lane.b32.xlu0 %v1588, 24
    %v1924 = vpop.permute.xlu0 %1923
    %1925 = vrot.lane.b32.xlu0 %v1589, 24
    %v1926 = vpop.permute.xlu0 %1925
    %1927 = vrot.lane.b32.xlu0 %v1590, 24
    %v1928 = vpop.permute.xlu0 %1927
    %1929 = vrot.lane.b32.xlu0 %v1591, 24
    %v1930 = vpop.permute.xlu0 %1929
    %1931 = vrot.lane.b32.xlu0 %v1592, 24
    %v1932 = vpop.permute.xlu0 %1931
    %1933 = vrot.lane.b32.xlu0 %v1593, 24
    %v1934 = vpop.permute.xlu0 %1933
    %v1935 = vsel %vm628, %v1904, %v1906
    %v1936 = vsel %vm628, %v1908, %v1910
    %v1937 = vsel %vm628, %v1912, %v1914
    %v1938 = vsel %vm628, %v1916, %v1918
    %v1939 = vsel %vm628, %v1920, %v1922
    %v1940 = vsel %vm628, %v1924, %v1926
    %v1941 = vsel %vm628, %v1928, %v1930
    %v1942 = vsel %vm628, %v1932, %v1934
    %v1951 = vadd.f32 %v1879, %v1935
    %v1952 = vadd.f32 %v1880, %v1936
    %v1953 = vadd.f32 %v1881, %v1937
    %v1954 = vadd.f32 %v1882, %v1938
    %v1955 = vadd.f32 %v1883, %v1939
    %v1956 = vadd.f32 %v1884, %v1940
    %v1957 = vadd.f32 %v1885, %v1941
    %v1958 = vadd.f32 %v1886, %v1942
    %v1959 = vsel %vm457, %v1951, -inf
    %1960 = vmax.xlane.f32.xlu0 %v1959
    %v1961 = vpop.xlane.xlu0 %1960
    %v1962 = vsel %vm457, %v1952, -inf
    %1963 = vmax.xlane.f32.xlu0 %v1962
    %v1964 = vpop.xlane.xlu0 %1963
    %v1965 = vsel %vm457, %v1953, -inf
    %1966 = vmax.xlane.f32.xlu0 %v1965
    %v1967 = vpop.xlane.xlu0 %1966
    %v1968 = vsel %vm457, %v1954, -inf
    %1969 = vmax.xlane.f32.xlu0 %v1968
    %v1970 = vpop.xlane.xlu0 %1969
    %v1971 = vsel %vm457, %v1955, -inf
    %1972 = vmax.xlane.f32.xlu0 %v1971
    %v1973 = vpop.xlane.xlu0 %1972
    %v1974 = vsel %vm457, %v1956, -inf
    %1975 = vmax.xlane.f32.xlu0 %v1974
    %v1976 = vpop.xlane.xlu0 %1975
    %v1977 = vsel %vm457, %v1957, -inf
    %1978 = vmax.xlane.f32.xlu0 %v1977
    %v1979 = vpop.xlane.xlu0 %1978
    %v1980 = vsel %vm457, %v1958, -inf
    %1981 = vmax.xlane.f32.xlu0 %v1980
    %v1982 = vpop.xlane.xlu0 %1981
    %v1983 = vsub.f32 %v1951, %v1961
    %v1984 = vsub.f32 %v1952, %v1964
    %v1985 = vsub.f32 %v1953, %v1967
    %v1986 = vsub.f32 %v1954, %v1970
    %v1987 = vsub.f32 %v1955, %v1973
    %v1988 = vsub.f32 %v1956, %v1976
    %v1989 = vsub.f32 %v1957, %v1979
    %v1990 = vsub.f32 %v1958, %v1982
    %v1991 = vmul.f32 %v1983, 1.442695
    %v1992 = vpow.pop %v1991
    %v1993 = vmul.f32 %v1984, 1.442695
    %v1994 = vpow.pop %v1993
    %v1995 = vmul.f32 %v1985, 1.442695
    %v1996 = vpow.pop %v1995
    %v1997 = vmul.f32 %v1986, 1.442695
    %v1998 = vpow.pop %v1997
    %v1999 = vmul.f32 %v1987, 1.442695
    %v2000 = vpow.pop %v1999
    %v2001 = vmul.f32 %v1988, 1.442695
    %v2002 = vpow.pop %v2001
    %v2003 = vmul.f32 %v1989, 1.442695
    %v2004 = vpow.pop %v2003
    %v2005 = vmul.f32 %v1990, 1.442695
    %v2006 = vpow.pop %v2005
    %v2007 = vsel %vm457, %v1992, 0.0
    %2008 = vadd.xlane.f32.xlu0 %v2007
    %v2009 = vpop.xlane.xlu0 %2008
    %v2010 = vsel %vm457, %v1994, 0.0
    %2011 = vadd.xlane.f32.xlu0 %v2010
    %v2012 = vpop.xlane.xlu0 %2011
    %v2013 = vsel %vm457, %v1996, 0.0
    %2014 = vadd.xlane.f32.xlu0 %v2013
    %v2015 = vpop.xlane.xlu0 %2014
    %v2016 = vsel %vm457, %v1998, 0.0
    %2017 = vadd.xlane.f32.xlu0 %v2016
    %v2018 = vpop.xlane.xlu0 %2017
    %v2019 = vsel %vm457, %v2000, 0.0
    %2020 = vadd.xlane.f32.xlu0 %v2019
    %v2021 = vpop.xlane.xlu0 %2020
    %v2022 = vsel %vm457, %v2002, 0.0
    %2023 = vadd.xlane.f32.xlu0 %v2022
    %v2024 = vpop.xlane.xlu0 %2023
    %v2025 = vsel %vm457, %v2004, 0.0
    %2026 = vadd.xlane.f32.xlu0 %v2025
    %v2027 = vpop.xlane.xlu0 %2026
    %v2028 = vsel %vm457, %v2006, 0.0
    %2029 = vadd.xlane.f32.xlu0 %v2028
    %v2030 = vpop.xlane.xlu0 %2029
    %v2031 = vrcp.pop %v2009
    %v2032 = vrcp.pop %v2012
    %v2033 = vrcp.pop %v2015
    %v2034 = vrcp.pop %v2018
    %v2035 = vrcp.pop %v2021
    %v2036 = vrcp.pop %v2024
    %v2037 = vrcp.pop %v2027
    %v2038 = vrcp.pop %v2030
    %v2039 = vmul.f32 %v1992, %v2031
    %v2040 = vmul.f32 %v1994, %v2032
    %v2041 = vmul.f32 %v1996, %v2033
    %v2042 = vmul.f32 %v1998, %v2034
    %v2043 = vmul.f32 %v2000, %v2035
    %v2044 = vmul.f32 %v2002, %v2036
    %v2045 = vmul.f32 %v2004, %v2037
    %v2046 = vmul.f32 %v2006, %v2038
    %v2047 = vpack.c.bf16 %v2040, %v2039
    %v2048 = vpack.c.bf16 %v2042, %v2041
    %v2049 = vpack.c.bf16 %v2044, %v2043
    %v2050 = vpack.c.bf16 %v2046, %v2045
    %2054 = vrot.lane.b32.xlu0 %v1790, 96
    %v2055 = vpop.permute.xlu0 %2054
    %2056 = vrot.lane.b32.xlu0 %v1791, 96
    %v2057 = vpop.permute.xlu0 %2056
    %2058 = vrot.lane.b32.xlu0 %v1792, 96
    %v2059 = vpop.permute.xlu0 %2058
    %v2063 = vsel %vm457, %v2047, 0
    %v2066 = vsel %vm457, %v2048, 0
    %v2069 = vsel %vm457, %v2049, 0
    %v2072 = vsel %vm457, %v2050, 0
    %v2075 = vsel %vm337, %v2059, 0
    %2077 = vmatprep.subr.bf16.mxu0 0
    %2078 = vmatpush1.bf16.msra.mxu0 %v2055
    %2079 = vmatprep.subr.bf16.mxu0 0
    %2080 = vmatpush1.bf16.msra.mxu0 %v2057
    %2081 = vmatprep.subr.bf16.mxu0 0
    %2082 = vmatpush1.bf16.msra.mxu0 %v2075
    %2083 = vmatprep.subr.bf16.mxu0 0
    %2084 = vmatpush1.bf16.msra.mxu0 0
    %2085 = vmatprep.subr.bf16.mxu0 0
    %2086 = vmatpush1.bf16.msra.mxu0 0
    %2087 = vmatprep.subr.bf16.mxu0 0
    %2088 = vmatpush1.bf16.msra.mxu0 0
    %2089 = vmatprep.subr.bf16.mxu0 0
    %2090 = vmatpush1.bf16.msra.mxu0 0
    %2091 = vmatprep.subr.bf16.mxu0 0
    %2092 = vmatpush1.bf16.msra.mxu0 0
    %2093 = vmatprep.subr.bf16.mxu0 0
    %2094 = vmatpush1.bf16.msra.mxu0 0
    %2095 = vmatprep.subr.bf16.mxu0 0
    %2096 = vmatpush1.bf16.msra.mxu0 0
    %2097 = vmatprep.subr.bf16.mxu0 0
    %2098 = vmatpush1.bf16.msra.mxu0 0
    %2099 = vmatprep.subr.bf16.mxu0 0
    %2100 = vmatpush1.bf16.msra.mxu0 0
    %2101 = vmatprep.subr.bf16.mxu0 0
    %2102 = vmatpush1.bf16.msra.mxu0 0
    %2103 = vmatprep.subr.bf16.mxu0 0
    %2104 = vmatpush1.bf16.msra.mxu0 0
    %2105 = vmatprep.subr.bf16.mxu0 0
    %2106 = vmatpush1.bf16.msra.mxu0 0
    %2107 = vmatprep.subr.bf16.mxu0 0
    %2108 = vmatpush1.bf16.msra.mxu0 0
    %2109 = vmatprep.mubr.bf16.mxu0 0
    %2110 = vmatmul.mubr.bf16.gmra.mrb[0].mxu0 %v2063
    %v2111 = vpop.f32.mrb[0].mxu0
    %v2112 = vadd.f32 0.0, %v2111
    %v2113 = vpop.f32.mrb[0].mxu0
    %v2114 = vpop.f32.mrb[0].mxu0
    %v2115 = vadd.f32 0.0, %v2114
    %v2116 = vpop.f32.mrb[0].mxu0
    %2117 = vmatprep.mubr.bf16.mxu0 0
    %2118 = vmatmul.mubr.bf16.gmra.mrb[0].mxu0 %v2066
    %v2119 = vpop.f32.mrb[0].mxu0
    %v2120 = vadd.f32 0.0, %v2119
    %v2121 = vpop.f32.mrb[0].mxu0
    %v2122 = vpop.f32.mrb[0].mxu0
    %v2123 = vadd.f32 0.0, %v2122
    %v2124 = vpop.f32.mrb[0].mxu0
    %2125 = vmatprep.mubr.bf16.mxu0 0
    %2126 = vmatmul.mubr.bf16.gmra.mrb[0].mxu0 %v2069
    %v2127 = vpop.f32.mrb[0].mxu0
    %v2128 = vadd.f32 0.0, %v2127
    %v2129 = vpop.f32.mrb[0].mxu0
    %v2130 = vpop.f32.mrb[0].mxu0
    %v2131 = vadd.f32 0.0, %v2130
    %v2132 = vpop.f32.mrb[0].mxu0
    %2133 = vmatprep.mubr.bf16.mxu0 0
    %2134 = vmatmul.mubr.bf16.gmra.mrb[0].mxu0 %v2072
    %v2135 = vpop.f32.mrb[0].mxu0
    %v2136 = vadd.f32 0.0, %v2135
    %v2137 = vpop.f32.mrb[0].mxu0
    %v2138 = vpop.f32.mrb[0].mxu0
    %v2139 = vadd.f32 0.0, %v2138
    %v2140 = vpop.f32.mrb[0].mxu0
    %2141 = vdwg.mxu0
    %2144 = vrot.lane.b32.xlu0 %v2120, 8
    %v2145 = vpop.permute.xlu0 %2144
    %2146 = vrot.lane.b32.xlu0 %v2123, 8
    %v2147 = vpop.permute.xlu0 %2146
    %2152 = vrot.lane.b32.xlu0 %v2128, 16
    %v2153 = vpop.permute.xlu0 %2152
    %2154 = vrot.lane.b32.xlu0 %v2131, 16
    %v2155 = vpop.permute.xlu0 %2154
    %2160 = vrot.lane.b32.xlu0 %v2136, 24
    %v2161 = vpop.permute.xlu0 %2160
    %2162 = vrot.lane.b32.xlu0 %v2139, 24
    %v2163 = vpop.permute.xlu0 %2162
    %v2166 = vsel %vm372, %v2112, %v2145
    %v2167 = vsel %vm372, %v2115, %v2147
    %v2168 = vsel %vm625, %v2166, %v2153
    %v2169 = vsel %vm625, %v2167, %v2155
    %v2170 = vsel %vm628, %v2168, %v2161
    %v2171 = vsel %vm628, %v2169, %v2163
    %v2172 = vpack.c.bf16 %v2171, %v2170
    %v2174 = vlaneseq
    %v2175 = vshrl.u32 %v2174, 7
    %v2176 = vsub.s32 0, %v2175
    %v2177 = vrot.slane %v1602, %v2176
    %v2183 = vunpack.c.l.b16 %v1598
    %v2184 = vunpack.c.l.b16 %v1599
    %v2185 = vunpack.c.l.b16 %v1600
    %v2186 = vunpack.c.l.b16 %v1601
    %v2187 = vpack.c.b16 %v2184, %v2183
    %v2188 = vpack.c.b16 %v2186, %v2185
    %2189 = vrot.lane.b32.xlu0 %v2187, 96
    %v2190 = vpop.permute.xlu0 %2189
    %2191 = vrot.lane.b32.xlu0 %v2188, 96
    %v2192 = vpop.permute.xlu0 %2191
    %v2196 = vsel %vm199, %v2172, 0
    %2198 = vmatprep.subr.bf16.mxu0 0
    %2199 = vmatpush1.bf16.msra.mxu0 %v2190
    %2200 = vmatprep.subr.bf16.mxu0 0
    %2201 = vmatpush1.bf16.msra.mxu0 %v2192
    %2202 = vmatprep.subr.bf16.mxu0 0
    %2203 = vmatpush1.bf16.msra.mxu0 0
    %2204 = vmatprep.subr.bf16.mxu0 0
    %2205 = vmatpush1.bf16.msra.mxu0 0
    %2206 = vmatprep.subr.bf16.mxu0 0
    %2207 = vmatpush1.bf16.msra.mxu0 0
    %2208 = vmatprep.subr.bf16.mxu0 0
    %2209 = vmatpush1.bf16.msra.mxu0 0
    %2210 = vmatprep.subr.bf16.mxu0 0
    %2211 = vmatpush1.bf16.msra.mxu0 0
    %2212 = vmatprep.subr.bf16.mxu0 0
    %2213 = vmatpush1.bf16.msra.mxu0 0
    %2214 = vmatprep.subr.bf16.mxu0 0
    %2215 = vmatpush1.bf16.msra.mxu0 0
    %2216 = vmatprep.subr.bf16.mxu0 0
    %2217 = vmatpush1.bf16.msra.mxu0 0
    %2218 = vmatprep.subr.bf16.mxu0 0
    %2219 = vmatpush1.bf16.msra.mxu0 0
    %2220 = vmatprep.subr.bf16.mxu0 0
    %2221 = vmatpush1.bf16.msra.mxu0 0
    %2222 = vmatprep.subr.bf16.mxu0 0
    %2223 = vmatpush1.bf16.msra.mxu0 0
    %2224 = vmatprep.subr.bf16.mxu0 0
    %2225 = vmatpush1.bf16.msra.mxu0 0
    %2226 = vmatprep.subr.bf16.mxu0 0
    %2227 = vmatpush1.bf16.msra.mxu0 0
    %2228 = vmatprep.subr.bf16.mxu0 0
    %2229 = vmatpush1.bf16.msra.mxu0 0
    %2230 = vmatprep.mubr.bf16.mxu0 0
    %2231 = vmatmul.mubr.bf16.gmra.mrb[0].mxu0 %v2196
    %v2232 = vpop.f32.mrb[0].mxu0
    %v2233 = vadd.f32 %v2177, %v2232
    %v2234 = vpop.f32.mrb[0].mxu0
    %v2235 = vpop.f32.mrb[0].mxu0
    %v2236 = vadd.f32 %v2177, %v2235
    %v2237 = vpop.f32.mrb[0].mxu0
    %2238 = vdwg.mxu0
    %v2239 = vadd.f32 %v2233, %v1576
    %v2240 = vadd.f32 %v2236, %v1577
    %v2241 = vsel %vm199, %v2239, 0.0
    %2242 = vadd.xlane.f32.xlu0 %v2241
    %v2243 = vpop.xlane.xlu0 %2242
    %v2244 = vsel %vm199, %v2240, 0.0
    %2245 = vadd.xlane.f32.xlu0 %v2244
    %v2246 = vpop.xlane.xlu0 %2245
    %v2247 = vmul.f32 %v2243, %v207
    %v2248 = vmul.f32 %v2246, %v207
    %v2249 = vsub.f32 %v2239, %v2247
    %v2250 = vsub.f32 %v2240, %v2248
    %v2251 = vmul.f32 %v2249, %v2249
    %v2252 = vmul.f32 %v2250, %v2250
    %v2253 = vsel %vm199, %v2251, 0.0
    %2254 = vadd.xlane.f32.xlu0 %v2253
    %v2255 = vpop.xlane.xlu0 %2254
    %v2256 = vsel %vm199, %v2252, 0.0
    %2257 = vadd.xlane.f32.xlu0 %v2256
    %v2258 = vpop.xlane.xlu0 %2257
    %v2259 = vmul.f32 %v2255, %v207
    %v2260 = vmul.f32 %v2258, %v207
    %v2261 = vadd.f32 %v2259, 1e-12
    %v2262 = vadd.f32 %v2260, 1e-12
    %v2263 = vrsqrt.pop %v2261
    %v2264 = vrsqrt.pop %v2262
    %v2265 = vmul.f32 %v2249, %v2263
    %v2266 = vmul.f32 %v2250, %v2264
    %2267 = vrot.lane.b32.xlu0 %v2177, 96
    %v2268 = vpop.permute.xlu0 %2267
    %v2270 = vmul.f32 %v2265, %v2268
    %v2271 = vmul.f32 %v2266, %v2268
    %2272 = vrot.lane.b32.xlu0 %v2177, 64
    %v2273 = vpop.permute.xlu0 %2272
    %v2275 = vadd.f32 %v2270, %v2273
    %v2276 = vadd.f32 %v2271, %v2273
    %v2277 = vpack.c.bf16 %v2276, %v2275
    %v2278 = vld [vmem:[%s8 + $0x6] sm:$0x3]
    %v2280 = vlaneseq
    %v2281 = vshrl.u32 %v2280, 7
    %v2282 = vsub.s32 0, %v2281
    %v2283 = vrot.slane %v2278, %v2282
    %v2284 = vlaneseq
    %v2285 = vshrl.u32 %v2284, 7
    %v2286 = vsub.s32 1, %v2285
    %v2287 = vrot.slane %v2278, %v2286
    %2288 = vrot.lane.b32.xlu0 %v2187, 64
    %v2289 = vpop.permute.xlu0 %2288
    %2290 = vrot.lane.b32.xlu0 %v2188, 64
    %v2291 = vpop.permute.xlu0 %2290
    %2294 = vrot.lane.b32.xlu0 %v2283, 32
    %v2295 = vpop.permute.xlu0 %2294
    %2296 = vrot.lane.b32.xlu0 %v2287, 32
    %v2297 = vpop.permute.xlu0 %2296
    %v2298 = vsel %vm199, %v2295, %v2297
    %v2301 = vsel %vm199, %v2277, 0
    %2303 = vmatprep.subr.bf16.mxu0 0
    %2304 = vmatpush1.bf16.msra.mxu0 %v2289
    %2305 = vmatprep.subr.bf16.mxu0 0
    %2306 = vmatpush1.bf16.msra.mxu0 %v2291
    %2307 = vmatprep.subr.bf16.mxu0 0
    %2308 = vmatpush1.bf16.msra.mxu0 0
    %2309 = vmatprep.subr.bf16.mxu0 0
    %2310 = vmatpush1.bf16.msra.mxu0 0
    %2311 = vmatprep.subr.bf16.mxu0 0
    %2312 = vmatpush1.bf16.msra.mxu0 0
    %2313 = vmatprep.subr.bf16.mxu0 0
    %2314 = vmatpush1.bf16.msra.mxu0 0
    %2315 = vmatprep.subr.bf16.mxu0 0
    %2316 = vmatpush1.bf16.msra.mxu0 0
    %2317 = vmatprep.subr.bf16.mxu0 0
    %2318 = vmatpush1.bf16.msra.mxu0 0
    %2319 = vmatprep.subr.bf16.mxu0 0
    %2320 = vmatpush1.bf16.msra.mxu0 0
    %2321 = vmatprep.subr.bf16.mxu0 0
    %2322 = vmatpush1.bf16.msra.mxu0 0
    %2323 = vmatprep.subr.bf16.mxu0 0
    %2324 = vmatpush1.bf16.msra.mxu0 0
    %2325 = vmatprep.subr.bf16.mxu0 0
    %2326 = vmatpush1.bf16.msra.mxu0 0
    %2327 = vmatprep.subr.bf16.mxu0 0
    %2328 = vmatpush1.bf16.msra.mxu0 0
    %2329 = vmatprep.subr.bf16.mxu0 0
    %2330 = vmatpush1.bf16.msra.mxu0 0
    %2331 = vmatprep.subr.bf16.mxu0 0
    %2332 = vmatpush1.bf16.msra.mxu0 0
    %2333 = vmatprep.subr.bf16.mxu0 0
    %2334 = vmatpush1.bf16.msra.mxu0 0
    %2335 = vmatprep.mubr.bf16.mxu0 0
    %2336 = vmatmul.mubr.bf16.gmra.mrb[0].mxu0 %v2301
    %v2337 = vpop.f32.mrb[0].mxu0
    %v2338 = vadd.f32 %v2298, %v2337
    %v2339 = vpop.f32.mrb[0].mxu0
    %v2340 = vpop.f32.mrb[0].mxu0
    %v2341 = vadd.f32 %v2298, %v2340
    %v2342 = vpop.f32.mrb[0].mxu0
    %2343 = vdwg.mxu0
    %v2344 = vmul.f32 %v2338, %v2338
    %v2345 = vmul.f32 %v2341, %v2341
    %v2346 = vmul.f32 %v2338, %v2344
    %v2347 = vmul.f32 %v2341, %v2345
    %v2348 = vmul.f32 %v2346, 0.044715
    %v2349 = vmul.f32 %v2347, 0.044715
    %v2350 = vadd.f32 %v2338, %v2348
    %v2351 = vadd.f32 %v2341, %v2349
    %v2352 = vmul.f32 %v2350, 0.7978846
    %v2353 = vmul.f32 %v2351, 0.7978846
    %v2354 = vtanh.pop %v2352
    %v2355 = vtanh.pop %v2353
    %v2356 = vadd.f32 %v2354, 1.0
    %v2357 = vadd.f32 %v2355, 1.0
    %v2358 = vmul.f32 %v2356, 0.5
    %v2359 = vmul.f32 %v2357, 0.5
    %v2360 = vmul.f32 %v2338, %v2358
    %v2361 = vmul.f32 %v2341, %v2359
    %v2362 = vpack.c.bf16 %v2361, %v2360
    %v2363 = vld [vmem:[%s8 + $0x7] sm:$0x1]
    %v2365 = vlaneseq
    %v2366 = vshrl.u32 %v2365, 7
    %v2367 = vsub.s32 0, %v2366
    %v2368 = vrot.slane %v2363, %v2367
    %2369 = vrot.lane.b32.xlu0 %v839, 96
    %v2370 = vpop.permute.xlu0 %2369
    %2371 = vrot.lane.b32.xlu0 %v840, 96
    %v2372 = vpop.permute.xlu0 %2371
    %2373 = vrot.lane.b32.xlu0 %v841, 96
    %v2374 = vpop.permute.xlu0 %2373
    %2375 = vrot.lane.b32.xlu0 %v842, 96
    %v2376 = vpop.permute.xlu0 %2375
    %2381 = vrot.lane.b32.xlu0 %v2368, 96
    %v2382 = vpop.permute.xlu0 %2381
    %v2385 = vsel %vm278, %v2362, 0
    %2387 = vmatprep.subr.bf16.mxu0 0
    %2388 = vmatpush1.bf16.msra.mxu0 %v2370
    %2389 = vmatprep.subr.bf16.mxu0 0
    %2390 = vmatpush1.bf16.msra.mxu0 %v2372
    %2391 = vmatprep.subr.bf16.mxu0 0
    %2392 = vmatpush1.bf16.msra.mxu0 %v2374
    %2393 = vmatprep.subr.bf16.mxu0 0
    %2394 = vmatpush1.bf16.msra.mxu0 %v2376
    %2395 = vmatprep.subr.bf16.mxu0 0
    %2396 = vmatpush1.bf16.msra.mxu0 0
    %2397 = vmatprep.subr.bf16.mxu0 0
    %2398 = vmatpush1.bf16.msra.mxu0 0
    %2399 = vmatprep.subr.bf16.mxu0 0
    %2400 = vmatpush1.bf16.msra.mxu0 0
    %2401 = vmatprep.subr.bf16.mxu0 0
    %2402 = vmatpush1.bf16.msra.mxu0 0
    %2403 = vmatprep.subr.bf16.mxu0 0
    %2404 = vmatpush1.bf16.msra.mxu0 0
    %2405 = vmatprep.subr.bf16.mxu0 0
    %2406 = vmatpush1.bf16.msra.mxu0 0
    %2407 = vmatprep.subr.bf16.mxu0 0
    %2408 = vmatpush1.bf16.msra.mxu0 0
    %2409 = vmatprep.subr.bf16.mxu0 0
    %2410 = vmatpush1.bf16.msra.mxu0 0
    %2411 = vmatprep.subr.bf16.mxu0 0
    %2412 = vmatpush1.bf16.msra.mxu0 0
    %2413 = vmatprep.subr.bf16.mxu0 0
    %2414 = vmatpush1.bf16.msra.mxu0 0
    %2415 = vmatprep.subr.bf16.mxu0 0
    %2416 = vmatpush1.bf16.msra.mxu0 0
    %2417 = vmatprep.subr.bf16.mxu0 0
    %2418 = vmatpush1.bf16.msra.mxu0 0
    %2419 = vmatprep.mubr.bf16.mxu0 0
    %2420 = vmatmul.mubr.bf16.gmra.mrb[0].mxu0 %v2385
    %v2421 = vpop.f32.mrb[0].mxu0
    %v2422 = vadd.f32 %v2382, %v2421
    %v2423 = vpop.f32.mrb[0].mxu0
    %v2424 = vpop.f32.mrb[0].mxu0
    %v2425 = vadd.f32 %v2382, %v2424
    %v2426 = vpop.f32.mrb[0].mxu0
    %2427 = vdwg.mxu0
    %v2428 = vadd.f32 %v2422, %v2275
    %v2429 = vadd.f32 %v2425, %v2276
    %v2430 = vsel %vm199, %v2428, 0.0
    %2431 = vadd.xlane.f32.xlu0 %v2430
    %v2432 = vpop.xlane.xlu0 %2431
    %v2433 = vsel %vm199, %v2429, 0.0
    %2434 = vadd.xlane.f32.xlu0 %v2433
    %v2435 = vpop.xlane.xlu0 %2434
    %v2436 = vmul.f32 %v2432, %v207
    %v2437 = vmul.f32 %v2435, %v207
    %v2438 = vsub.f32 %v2428, %v2436
    %v2439 = vsub.f32 %v2429, %v2437
    %v2440 = vmul.f32 %v2438, %v2438
    %v2441 = vmul.f32 %v2439, %v2439
    %v2442 = vsel %vm199, %v2440, 0.0
    %2443 = vadd.xlane.f32.xlu0 %v2442
    %v2444 = vpop.xlane.xlu0 %2443
    %v2445 = vsel %vm199, %v2441, 0.0
    %2446 = vadd.xlane.f32.xlu0 %v2445
    %v2447 = vpop.xlane.xlu0 %2446
    %v2448 = vmul.f32 %v2444, %v207
    %v2449 = vmul.f32 %v2447, %v207
    %v2450 = vadd.f32 %v2448, 1e-12
    %v2451 = vadd.f32 %v2449, 1e-12
    %v2452 = vrsqrt.pop %v2450
    %v2453 = vrsqrt.pop %v2451
    %v2454 = vmul.f32 %v2438, %v2452
    %v2455 = vmul.f32 %v2439, %v2453
    %2456 = vrot.lane.b32.xlu0 %v2368, 64
    %v2457 = vpop.permute.xlu0 %2456
    %v2459 = vmul.f32 %v2454, %v2457
    %v2460 = vmul.f32 %v2455, %v2457
    %2461 = vrot.lane.b32.xlu0 %v2368, 32
    %v2462 = vpop.permute.xlu0 %2461
    %v2464 = vadd.f32 %v2459, %v2462
    %v2465 = vadd.f32 %v2460, %v2462
    %v2466 = vld [vmem:[%s1 + $0x10] sm:$0xff]
    %v2467 = vld [vmem:[%s1 + $0x18] sm:$0xff]
    %v2468 = vld [vmem:[%s1 + $0x20] sm:$0x3]
    %v2469 = vld [vmem:[%s8 + $0x8] sm:$0x1]
    %v2470 = vsel %vm199, %v2466, 0.0
    %2471 = vadd.xlane.f32.xlu0 %v2470
    %v2472 = vpop.xlane.xlu0 %2471
    %v2473 = vsel %vm199, %v2467, 0.0
    %2474 = vadd.xlane.f32.xlu0 %v2473
    %v2475 = vpop.xlane.xlu0 %2474
    %v2476 = vsel %vm203, %v2468, 0.0
    %2477 = vadd.xlane.f32.xlu0 %v2476
    %v2478 = vpop.xlane.xlu0 %2477
    %v2479 = vmul.f32 %v2472, %v207
    %v2480 = vmul.f32 %v2475, %v207
    %v2481 = vmul.f32 %v2478, %v207
    %v2482 = vsub.f32 %v2466, %v2479
    %v2483 = vsub.f32 %v2467, %v2480
    %v2484 = vsub.f32 %v2468, %v2481
    %v2485 = vmul.f32 %v2482, %v2482
    %v2486 = vmul.f32 %v2483, %v2483
    %v2487 = vmul.f32 %v2484, %v2484
    %v2488 = vsel %vm199, %v2485, 0.0
    %2489 = vadd.xlane.f32.xlu0 %v2488
    %v2490 = vpop.xlane.xlu0 %2489
    %v2491 = vsel %vm199, %v2486, 0.0
    %2492 = vadd.xlane.f32.xlu0 %v2491
    %v2493 = vpop.xlane.xlu0 %2492
    %v2494 = vsel %vm203, %v2487, 0.0
    %2495 = vadd.xlane.f32.xlu0 %v2494
    %v2496 = vpop.xlane.xlu0 %2495
    %v2497 = vmul.f32 %v2490, %v207
    %v2498 = vmul.f32 %v2493, %v207
    %v2499 = vmul.f32 %v2496, %v207
    %v2500 = vadd.f32 %v2497, 1e-12
    %v2501 = vadd.f32 %v2498, 1e-12
    %v2502 = vadd.f32 %v2499, 1e-12
    %v2503 = vrsqrt.pop %v2500
    %v2504 = vrsqrt.pop %v2501
    %v2505 = vrsqrt.pop %v2502
    %v2506 = vmul.f32 %v2482, %v2503
    %v2507 = vmul.f32 %v2483, %v2504
    %v2508 = vmul.f32 %v2484, %v2505
    %v2510 = vlaneseq
    %v2511 = vshrl.u32 %v2510, 7
    %v2512 = vsub.s32 0, %v2511
    %v2513 = vrot.slane %v2469, %v2512
    %v2515 = vmul.f32 %v2506, %v2513
    %v2516 = vmul.f32 %v2507, %v2513
    %v2517 = vmul.f32 %v2508, %v2513
    %2518 = vrot.lane.b32.xlu0 %v2513, 96
    %v2519 = vpop.permute.xlu0 %2518
    %v2521 = vadd.f32 %v2515, %v2519
    %v2522 = vadd.f32 %v2516, %v2519
    %v2523 = vadd.f32 %v2517, %v2519
    %v2524 = vld [vmem:[%s2 + $0x8] sm:$0xff]
    %v2525 = vld [vmem:[%s2 + $0x20] sm:$0xff]
    %v2526 = vld [vmem:[%s2 + $0x38] sm:$0xff]
    %v2527 = vld [vmem:[%s2 + $0x50] sm:$0xff]
    %v2528 = vld [vmem:[%s2 + $0x68] sm:$0xff]
    %v2529 = vld [vmem:[%s2 + $0x80] sm:$0xff]
    %v2530 = vld [vmem:[%s2 + $0x98] sm:$0xff]
    %v2531 = vld [vmem:[%s2 + $0xb0] sm:$0xff]
    %v2532 = vld [vmem:[%s2 + $0xc8] sm:$0xff]
    %v2533 = vld [vmem:[%s6 + $0x10] sm:$0xf]
    %v2534 = vld [vmem:[%s6 + $0x30] sm:$0xf]
    %v2535 = vld [vmem:[%s6 + $0x50] sm:$0xf]
    %v2536 = vld [vmem:[%s6 + $0x70] sm:$0xf]
    %v2537 = vld [vmem:[%s8 + $0x8] sm:$0x3]
    %v2538 = vld [vmem:[%s8 + $0x9] sm:$0x1]
    %v2539 = vpack.c.bf16 %v2522, %v2521
    %v2540 = vpack.c.bf16 %v2523, %v2523
    %v2542 = vlaneseq
    %v2543 = vshrl.u32 %v2542, 7
    %v2544 = vsub.s32 0, %v2543
    %v2545 = vrot.slane %v2537, %v2544
    %v2546 = vlaneseq
    %v2547 = vshrl.u32 %v2546, 7
    %v2548 = vsub.s32 1, %v2547
    %v2549 = vrot.slane %v2537, %v2548
    %v2554 = vunpack.c.l.b16 %v2533
    %v2555 = vunpack.c.l.b16 %v2534
    %v2556 = vunpack.c.l.b16 %v2535
    %v2557 = vunpack.c.l.b16 %v2536
    %v2558 = vpack.c.b16 %v2555, %v2554
    %v2559 = vpack.c.b16 %v2557, %v2556
    %2562 = vrot.lane.b32.xlu0 %v2545, 64
    %v2563 = vpop.permute.xlu0 %2562
    %2564 = vrot.lane.b32.xlu0 %v2549, 64
    %v2565 = vpop.permute.xlu0 %2564
    %v2566 = vsel %vm278, %v2563, %v2565
    %v2569 = vsel %vm199, %v2539, 0
    %v2572 = vsel %vm199, %v2540, 0
    %2574 = vmatprep.subr.bf16.mxu0 0
    %2575 = vmatpush1.bf16.msra.mxu0 %v2558
    %2576 = vmatprep.subr.bf16.mxu0 0
    %2577 = vmatpush1.bf16.msra.mxu0 %v2559
    %2578 = vmatprep.subr.bf16.mxu0 0
    %2579 = vmatpush1.bf16.msra.mxu0 0
    %2580 = vmatprep.subr.bf16.mxu0 0
    %2581 = vmatpush1.bf16.msra.mxu0 0
    %2582 = vmatprep.subr.bf16.mxu0 0
    %2583 = vmatpush1.bf16.msra.mxu0 0
    %2584 = vmatprep.subr.bf16.mxu0 0
    %2585 = vmatpush1.bf16.msra.mxu0 0
    %2586 = vmatprep.subr.bf16.mxu0 0
    %2587 = vmatpush1.bf16.msra.mxu0 0
    %2588 = vmatprep.subr.bf16.mxu0 0
    %2589 = vmatpush1.bf16.msra.mxu0 0
    %2590 = vmatprep.subr.bf16.mxu0 0
    %2591 = vmatpush1.bf16.msra.mxu0 0
    %2592 = vmatprep.subr.bf16.mxu0 0
    %2593 = vmatpush1.bf16.msra.mxu0 0
    %2594 = vmatprep.subr.bf16.mxu0 0
    %2595 = vmatpush1.bf16.msra.mxu0 0
    %2596 = vmatprep.subr.bf16.mxu0 0
    %2597 = vmatpush1.bf16.msra.mxu0 0
    %2598 = vmatprep.subr.bf16.mxu0 0
    %2599 = vmatpush1.bf16.msra.mxu0 0
    %2600 = vmatprep.subr.bf16.mxu0 0
    %2601 = vmatpush1.bf16.msra.mxu0 0
    %2602 = vmatprep.subr.bf16.mxu0 0
    %2603 = vmatpush1.bf16.msra.mxu0 0
    %2604 = vmatprep.subr.bf16.mxu0 0
    %2605 = vmatpush1.bf16.msra.mxu0 0
    %2606 = vmatprep.mubr.bf16.mxu0 0
    %2607 = vmatmul.mubr.bf16.gmra.mrb[0].mxu0 %v2569
    %v2608 = vpop.f32.mrb[0].mxu0
    %v2609 = vadd.f32 %v2566, %v2608
    %v2610 = vpop.f32.mrb[0].mxu0
    %v2611 = vpop.f32.mrb[0].mxu0
    %v2612 = vadd.f32 %v2566, %v2611
    %v2613 = vpop.f32.mrb[0].mxu0
    %2614 = vmatprep.mubr.bf16.mxu0 0
    %2615 = vmatmul.mubr.bf16.gmra.mrb[0].mxu0 %v2572
    %v2616 = vpop.f32.mrb[0].mxu0
    %v2617 = vadd.f32 %v2566, %v2616
    %v2618 = vpop.f32.mrb[0].mxu0
    %v2619 = vpop.f32.mrb[0].mxu0
    %v2620 = vpop.f32.mrb[0].mxu0
    %2621 = vdwg.mxu0
    %v2625 = vrot.slane %v2609, 6
    %v2626 = vrot.slane %v2612, 6
    %v2627 = vsel %vm327, %v2625, %v2626
    %v2628 = vrot.slane %v2617, 6
    %v2629 = vsel %vm327, %v2626, %v2628
    %2630 = vrot.lane.b32.xlu0 %v2625, 120
    %v2631 = vpop.permute.xlu0 %2630
    %2632 = vrot.lane.b32.xlu0 %v2627, 120
    %v2633 = vpop.permute.xlu0 %2632
    %2634 = vrot.lane.b32.xlu0 %v2629, 120
    %v2635 = vpop.permute.xlu0 %2634
    %v2639 = vrot.slane %v2609, 4
    %v2640 = vrot.slane %v2612, 4
    %v2641 = vsel %vm337, %v2639, %v2640
    %v2642 = vrot.slane %v2617, 4
    %v2643 = vsel %vm337, %v2640, %v2642
    %2644 = vrot.lane.b32.xlu0 %v2639, 112
    %v2645 = vpop.permute.xlu0 %2644
    %2646 = vrot.lane.b32.xlu0 %v2641, 112
    %v2647 = vpop.permute.xlu0 %2646
    %2648 = vrot.lane.b32.xlu0 %v2643, 112
    %v2649 = vpop.permute.xlu0 %2648
    %v2653 = vrot.slane %v2609, 2
    %v2654 = vrot.slane %v2612, 2
    %v2655 = vsel %vm347, %v2653, %v2654
    %v2656 = vrot.slane %v2617, 2
    %v2657 = vsel %vm347, %v2654, %v2656
    %2658 = vrot.lane.b32.xlu0 %v2653, 104
    %v2659 = vpop.permute.xlu0 %2658
    %2660 = vrot.lane.b32.xlu0 %v2655, 104
    %v2661 = vpop.permute.xlu0 %2660
    %2662 = vrot.lane.b32.xlu0 %v2657, 104
    %v2663 = vpop.permute.xlu0 %2662
    %v2667 = vsel %vm327, %v2617, %v2631
    %v2668 = vsel %vm337, %v2635, %v2645
    %v2669 = vsel %vm347, %v2649, %v2659
    %v2670 = vpack.c.bf16 %v2612, %v2609
    %v2671 = vpack.c.bf16 %v2633, %v2667
    %v2672 = vpack.c.bf16 %v2647, %v2668
    %v2673 = vpack.c.bf16 %v2661, %v2669
    %v2674 = vpack.c.bf16 %v2663, %v2663
    %2680 = vrot.lane.b32.xlu0 %v2670, 96
    %v2681 = vpop.permute.xlu0 %2680
    %2682 = vrot.lane.b32.xlu0 %v2671, 96
    %v2683 = vpop.permute.xlu0 %2682
    %2684 = vrot.lane.b32.xlu0 %v2672, 96
    %v2685 = vpop.permute.xlu0 %2684
    %2686 = vrot.lane.b32.xlu0 %v2673, 96
    %v2687 = vpop.permute.xlu0 %2686
    %2688 = vrot.lane.b32.xlu0 %v2674, 96
    %v2689 = vpop.permute.xlu0 %2688
    %v2691 = vsel %vm372, %v2670, 0
    %v2694 = vsel %vm372, %v2671, 0
    %v2697 = vsel %vm372, %v2672, 0
    %v2700 = vsel %vm372, %v2673, 0
    %v2703 = vsel %vm372, %v2674, 0
    %v2706 = vsel %vm372, %v2681, 0
    %v2709 = vsel %vm372, %v2683, 0
    %v2712 = vsel %vm372, %v2685, 0
    %v2715 = vsel %vm372, %v2687, 0
    %v2718 = vsel %vm372, %v2689, 0
    %2720 = vmatprep.subr.bf16.mxu0 0
    %2721 = vmatpush1.bf16.xpose.msra.mxu0 %v2706
    %2722 = vmatprep.subr.bf16.mxu0 0
    %2723 = vmatpush1.bf16.xpose.msra.mxu0 %v2709
    %2724 = vmatprep.subr.bf16.mxu0 0
    %2725 = vmatpush1.bf16.xpose.msra.mxu0 %v2712
    %2726 = vmatprep.subr.bf16.mxu0 0
    %2727 = vmatpush1.bf16.xpose.msra.mxu0 %v2715
    %2728 = vmatprep.subr.bf16.mxu0 0
    %2729 = vmatpush1.bf16.xpose.msra.mxu0 %v2718
    %2730 = vmatprep.subr.bf16.mxu0 0
    %2731 = vmatpush1.bf16.xpose.msra.mxu0 0
    %2732 = vmatprep.subr.bf16.mxu0 0
    %2733 = vmatpush1.bf16.xpose.msra.mxu0 0
    %2734 = vmatprep.subr.bf16.mxu0 0
    %2735 = vmatpush1.bf16.xpose.msra.mxu0 0
    %2736 = vmatprep.subr.bf16.mxu0 0
    %2737 = vmatpush1.bf16.xpose.msra.mxu0 0
    %2738 = vmatprep.subr.bf16.mxu0 0
    %2739 = vmatpush1.bf16.xpose.msra.mxu0 0
    %2740 = vmatprep.subr.bf16.mxu0 0
    %2741 = vmatpush1.bf16.xpose.msra.mxu0 0
    %2742 = vmatprep.subr.bf16.mxu0 0
    %2743 = vmatpush1.bf16.xpose.msra.mxu0 0
    %2744 = vmatprep.subr.bf16.mxu0 0
    %2745 = vmatpush1.bf16.xpose.msra.mxu0 0
    %2746 = vmatprep.subr.bf16.mxu0 0
    %2747 = vmatpush1.bf16.xpose.msra.mxu0 0
    %2748 = vmatprep.subr.bf16.mxu0 0
    %2749 = vmatpush1.bf16.xpose.msra.mxu0 0
    %2750 = vmatprep.subr.bf16.mxu0 0
    %2751 = vmatpush1.bf16.xpose.msra.mxu0 0
    %2752 = vmatprep.mubr.bf16.mxu0 0
    %2753 = vmatmul.mubr.bf16.gmra.mrb[0].mxu0 %v2691
    %v2754 = vpop.f32.mrb[0].mxu0
    %v2755 = vadd.f32 0.0, %v2754
    %v2756 = vpop.f32.mrb[0].mxu0
    %v2757 = vpop.f32.mrb[0].mxu0
    %v2758 = vadd.f32 0.0, %v2757
    %v2759 = vpop.f32.mrb[0].mxu0
    %2760 = vmatprep.mubr.bf16.mxu0 0
    %2761 = vmatmul.mubr.bf16.gmra.mrb[0].mxu0 %v2694
    %v2762 = vpop.f32.mrb[0].mxu0
    %v2763 = vadd.f32 0.0, %v2762
    %v2764 = vpop.f32.mrb[0].mxu0
    %v2765 = vpop.f32.mrb[0].mxu0
    %v2766 = vadd.f32 0.0, %v2765
    %v2767 = vpop.f32.mrb[0].mxu0
    %2768 = vmatprep.mubr.bf16.mxu0 0
    %2769 = vmatmul.mubr.bf16.gmra.mrb[0].mxu0 %v2697
    %v2770 = vpop.f32.mrb[0].mxu0
    %v2771 = vadd.f32 0.0, %v2770
    %v2772 = vpop.f32.mrb[0].mxu0
    %v2773 = vpop.f32.mrb[0].mxu0
    %v2774 = vadd.f32 0.0, %v2773
    %v2775 = vpop.f32.mrb[0].mxu0
    %2776 = vmatprep.mubr.bf16.mxu0 0
    %2777 = vmatmul.mubr.bf16.gmra.mrb[0].mxu0 %v2700
    %v2778 = vpop.f32.mrb[0].mxu0
    %v2779 = vadd.f32 0.0, %v2778
    %v2780 = vpop.f32.mrb[0].mxu0
    %v2781 = vpop.f32.mrb[0].mxu0
    %v2782 = vadd.f32 0.0, %v2781
    %v2783 = vpop.f32.mrb[0].mxu0
    %2784 = vmatprep.mubr.bf16.mxu0 0
    %2785 = vmatmul.mubr.bf16.gmra.mrb[0].mxu0 %v2703
    %v2786 = vpop.f32.mrb[0].mxu0
    %v2787 = vadd.f32 0.0, %v2786
    %v2788 = vpop.f32.mrb[0].mxu0
    %v2789 = vpop.f32.mrb[0].mxu0
    %v2790 = vpop.f32.mrb[0].mxu0
    %2791 = vdwg.mxu0
    %v2792 = vmul.f32 %v2755, 0.35355338
    %v2793 = vmul.f32 %v2758, 0.35355338
    %v2794 = vmul.f32 %v2763, 0.35355338
    %v2795 = vmul.f32 %v2766, 0.35355338
    %v2796 = vmul.f32 %v2771, 0.35355338
    %v2797 = vmul.f32 %v2774, 0.35355338
    %v2798 = vmul.f32 %v2779, 0.35355338
    %v2799 = vmul.f32 %v2782, 0.35355338
    %v2800 = vmul.f32 %v2787, 0.35355338
    %2810 = vrot.lane.b32.xlu0 %v2524, 112
    %v2811 = vpop.permute.xlu0 %2810
    %2812 = vrot.lane.b32.xlu0 %v2525, 112
    %v2813 = vpop.permute.xlu0 %2812
    %2814 = vrot.lane.b32.xlu0 %v2526, 112
    %v2815 = vpop.permute.xlu0 %2814
    %2816 = vrot.lane.b32.xlu0 %v2527, 112
    %v2817 = vpop.permute.xlu0 %2816
    %2818 = vrot.lane.b32.xlu0 %v2528, 112
    %v2819 = vpop.permute.xlu0 %2818
    %2820 = vrot.lane.b32.xlu0 %v2529, 112
    %v2821 = vpop.permute.xlu0 %2820
    %2822 = vrot.lane.b32.xlu0 %v2530, 112
    %v2823 = vpop.permute.xlu0 %2822
    %2824 = vrot.lane.b32.xlu0 %v2531, 112
    %v2825 = vpop.permute.xlu0 %2824
    %2826 = vrot.lane.b32.xlu0 %v2532, 112
    %v2827 = vpop.permute.xlu0 %2826
    %v2837 = vadd.f32 %v2792, %v2811
    %v2838 = vadd.f32 %v2793, %v2813
    %v2839 = vadd.f32 %v2794, %v2815
    %v2840 = vadd.f32 %v2795, %v2817
    %v2841 = vadd.f32 %v2796, %v2819
    %v2842 = vadd.f32 %v2797, %v2821
    %v2843 = vadd.f32 %v2798, %v2823
    %v2844 = vadd.f32 %v2799, %v2825
    %v2845 = vadd.f32 %v2800, %v2827
    %vm2846 = vcmask 588800
    %v2847 = vsel %vm2846, %v2837, -inf
    %2848 = vmax.xlane.f32.xlu0 %v2847
    %v2849 = vpop.xlane.xlu0 %2848
    %v2850 = vsel %vm2846, %v2838, -inf
    %2851 = vmax.xlane.f32.xlu0 %v2850
    %v2852 = vpop.xlane.xlu0 %2851
    %v2853 = vsel %vm2846, %v2839, -inf
    %2854 = vmax.xlane.f32.xlu0 %v2853
    %v2855 = vpop.xlane.xlu0 %2854
    %v2856 = vsel %vm2846, %v2840, -inf
    %2857 = vmax.xlane.f32.xlu0 %v2856
    %v2858 = vpop.xlane.xlu0 %2857
    %v2859 = vsel %vm2846, %v2841, -inf
    %2860 = vmax.xlane.f32.xlu0 %v2859
    %v2861 = vpop.xlane.xlu0 %2860
    %v2862 = vsel %vm2846, %v2842, -inf
    %2863 = vmax.xlane.f32.xlu0 %v2862
    %v2864 = vpop.xlane.xlu0 %2863
    %v2865 = vsel %vm2846, %v2843, -inf
    %2866 = vmax.xlane.f32.xlu0 %v2865
    %v2867 = vpop.xlane.xlu0 %2866
    %v2868 = vsel %vm2846, %v2844, -inf
    %2869 = vmax.xlane.f32.xlu0 %v2868
    %v2870 = vpop.xlane.xlu0 %2869
    %v2871 = vsel %vm2846, %v2845, -inf
    %2872 = vmax.xlane.f32.xlu0 %v2871
    %v2873 = vpop.xlane.xlu0 %2872
    %v2874 = vsub.f32 %v2837, %v2849
    %v2875 = vsub.f32 %v2838, %v2852
    %v2876 = vsub.f32 %v2839, %v2855
    %v2877 = vsub.f32 %v2840, %v2858
    %v2878 = vsub.f32 %v2841, %v2861
    %v2879 = vsub.f32 %v2842, %v2864
    %v2880 = vsub.f32 %v2843, %v2867
    %v2881 = vsub.f32 %v2844, %v2870
    %v2882 = vsub.f32 %v2845, %v2873
    %v2883 = vmul.f32 %v2874, 1.442695
    %v2884 = vpow.pop %v2883
    %v2885 = vmul.f32 %v2875, 1.442695
    %v2886 = vpow.pop %v2885
    %v2887 = vmul.f32 %v2876, 1.442695
    %v2888 = vpow.pop %v2887
    %v2889 = vmul.f32 %v2877, 1.442695
    %v2890 = vpow.pop %v2889
    %v2891 = vmul.f32 %v2878, 1.442695
    %v2892 = vpow.pop %v2891
    %v2893 = vmul.f32 %v2879, 1.442695
    %v2894 = vpow.pop %v2893
    %v2895 = vmul.f32 %v2880, 1.442695
    %v2896 = vpow.pop %v2895
    %v2897 = vmul.f32 %v2881, 1.442695
    %v2898 = vpow.pop %v2897
    %v2899 = vmul.f32 %v2882, 1.442695
    %v2900 = vpow.pop %v2899
    %v2901 = vsel %vm2846, %v2884, 0.0
    %2902 = vadd.xlane.f32.xlu0 %v2901
    %v2903 = vpop.xlane.xlu0 %2902
    %v2904 = vsel %vm2846, %v2886, 0.0
    %2905 = vadd.xlane.f32.xlu0 %v2904
    %v2906 = vpop.xlane.xlu0 %2905
    %v2907 = vsel %vm2846, %v2888, 0.0
    %2908 = vadd.xlane.f32.xlu0 %v2907
    %v2909 = vpop.xlane.xlu0 %2908
    %v2910 = vsel %vm2846, %v2890, 0.0
    %2911 = vadd.xlane.f32.xlu0 %v2910
    %v2912 = vpop.xlane.xlu0 %2911
    %v2913 = vsel %vm2846, %v2892, 0.0
    %2914 = vadd.xlane.f32.xlu0 %v2913
    %v2915 = vpop.xlane.xlu0 %2914
    %v2916 = vsel %vm2846, %v2894, 0.0
    %2917 = vadd.xlane.f32.xlu0 %v2916
    %v2918 = vpop.xlane.xlu0 %2917
    %v2919 = vsel %vm2846, %v2896, 0.0
    %2920 = vadd.xlane.f32.xlu0 %v2919
    %v2921 = vpop.xlane.xlu0 %2920
    %v2922 = vsel %vm2846, %v2898, 0.0
    %2923 = vadd.xlane.f32.xlu0 %v2922
    %v2924 = vpop.xlane.xlu0 %2923
    %v2925 = vsel %vm2846, %v2900, 0.0
    %2926 = vadd.xlane.f32.xlu0 %v2925
    %v2927 = vpop.xlane.xlu0 %2926
    %v2928 = vrcp.pop %v2903
    %v2929 = vrcp.pop %v2906
    %v2930 = vrcp.pop %v2909
    %v2931 = vrcp.pop %v2912
    %v2932 = vrcp.pop %v2915
    %v2933 = vrcp.pop %v2918
    %v2934 = vrcp.pop %v2921
    %v2935 = vrcp.pop %v2924
    %v2936 = vrcp.pop %v2927
    %v2937 = vmul.f32 %v2884, %v2928
    %v2938 = vmul.f32 %v2886, %v2929
    %v2939 = vmul.f32 %v2888, %v2930
    %v2940 = vmul.f32 %v2890, %v2931
    %v2941 = vmul.f32 %v2892, %v2932
    %v2942 = vmul.f32 %v2894, %v2933
    %v2943 = vmul.f32 %v2896, %v2934
    %v2944 = vmul.f32 %v2898, %v2935
    %v2945 = vmul.f32 %v2900, %v2936
    %v2946 = vpack.c.bf16 %v2938, %v2937
    %v2947 = vpack.c.bf16 %v2940, %v2939
    %v2948 = vpack.c.bf16 %v2942, %v2941
    %v2949 = vpack.c.bf16 %v2944, %v2943
    %v2950 = vpack.c.bf16 %v2945, %v2945
    %2951 = vrot.lane.b32.xlu0 %v2670, 64
    %v2952 = vpop.permute.xlu0 %2951
    %2953 = vrot.lane.b32.xlu0 %v2671, 64
    %v2954 = vpop.permute.xlu0 %2953
    %2955 = vrot.lane.b32.xlu0 %v2672, 64
    %v2956 = vpop.permute.xlu0 %2955
    %2957 = vrot.lane.b32.xlu0 %v2673, 64
    %v2958 = vpop.permute.xlu0 %2957
    %2959 = vrot.lane.b32.xlu0 %v2674, 64
    %v2960 = vpop.permute.xlu0 %2959
    %v2966 = vsel %vm2846, %v2946, 0
    %v2969 = vsel %vm2846, %v2947, 0
    %v2972 = vsel %vm2846, %v2948, 0
    %v2975 = vsel %vm2846, %v2949, 0
    %v2978 = vsel %vm2846, %v2950, 0
    %v2981 = vsel %vm337, %v2960, 0
    %2983 = vmatprep.subr.bf16.mxu0 0
    %2984 = vmatpush1.bf16.msra.mxu0 %v2952
    %2985 = vmatprep.subr.bf16.mxu0 0
    %2986 = vmatpush1.bf16.msra.mxu0 %v2954
    %2987 = vmatprep.subr.bf16.mxu0 0
    %2988 = vmatpush1.bf16.msra.mxu0 %v2956
    %2989 = vmatprep.subr.bf16.mxu0 0
    %2990 = vmatpush1.bf16.msra.mxu0 %v2958
    %2991 = vmatprep.subr.bf16.mxu0 0
    %2992 = vmatpush1.bf16.msra.mxu0 %v2981
    %2993 = vmatprep.subr.bf16.mxu0 0
    %2994 = vmatpush1.bf16.msra.mxu0 0
    %2995 = vmatprep.subr.bf16.mxu0 0
    %2996 = vmatpush1.bf16.msra.mxu0 0
    %2997 = vmatprep.subr.bf16.mxu0 0
    %2998 = vmatpush1.bf16.msra.mxu0 0
    %2999 = vmatprep.subr.bf16.mxu0 0
    %3000 = vmatpush1.bf16.msra.mxu0 0
    %3001 = vmatprep.subr.bf16.mxu0 0
    %3002 = vmatpush1.bf16.msra.mxu0 0
    %3003 = vmatprep.subr.bf16.mxu0 0
    %3004 = vmatpush1.bf16.msra.mxu0 0
    %3005 = vmatprep.subr.bf16.mxu0 0
    %3006 = vmatpush1.bf16.msra.mxu0 0
    %3007 = vmatprep.subr.bf16.mxu0 0
    %3008 = vmatpush1.bf16.msra.mxu0 0
    %3009 = vmatprep.subr.bf16.mxu0 0
    %3010 = vmatpush1.bf16.msra.mxu0 0
    %3011 = vmatprep.subr.bf16.mxu0 0
    %3012 = vmatpush1.bf16.msra.mxu0 0
    %3013 = vmatprep.subr.bf16.mxu0 0
    %3014 = vmatpush1.bf16.msra.mxu0 0
    %3015 = vmatprep.mubr.bf16.mxu0 0
    %3016 = vmatmul.mubr.bf16.gmra.mrb[0].mxu0 %v2966
    %v3017 = vpop.f32.mrb[0].mxu0
    %v3018 = vadd.f32 0.0, %v3017
    %v3019 = vpop.f32.mrb[0].mxu0
    %v3020 = vpop.f32.mrb[0].mxu0
    %v3021 = vadd.f32 0.0, %v3020
    %v3022 = vpop.f32.mrb[0].mxu0
    %3023 = vmatprep.mubr.bf16.mxu0 0
    %3024 = vmatmul.mubr.bf16.gmra.mrb[0].mxu0 %v2969
    %v3025 = vpop.f32.mrb[0].mxu0
    %v3026 = vadd.f32 0.0, %v3025
    %v3027 = vpop.f32.mrb[0].mxu0
    %v3028 = vpop.f32.mrb[0].mxu0
    %v3029 = vadd.f32 0.0, %v3028
    %v3030 = vpop.f32.mrb[0].mxu0
    %3031 = vmatprep.mubr.bf16.mxu0 0
    %3032 = vmatmul.mubr.bf16.gmra.mrb[0].mxu0 %v2972
    %v3033 = vpop.f32.mrb[0].mxu0
    %v3034 = vadd.f32 0.0, %v3033
    %v3035 = vpop.f32.mrb[0].mxu0
    %v3036 = vpop.f32.mrb[0].mxu0
    %v3037 = vadd.f32 0.0, %v3036
    %v3038 = vpop.f32.mrb[0].mxu0
    %3039 = vmatprep.mubr.bf16.mxu0 0
    %3040 = vmatmul.mubr.bf16.gmra.mrb[0].mxu0 %v2975
    %v3041 = vpop.f32.mrb[0].mxu0
    %v3042 = vadd.f32 0.0, %v3041
    %v3043 = vpop.f32.mrb[0].mxu0
    %v3044 = vpop.f32.mrb[0].mxu0
    %v3045 = vadd.f32 0.0, %v3044
    %v3046 = vpop.f32.mrb[0].mxu0
    %3047 = vmatprep.mubr.bf16.mxu0 0
    %3048 = vmatmul.mubr.bf16.gmra.mrb[0].mxu0 %v2978
    %v3049 = vpop.f32.mrb[0].mxu0
    %v3050 = vadd.f32 0.0, %v3049
    %v3051 = vpop.f32.mrb[0].mxu0
    %v3052 = vpop.f32.mrb[0].mxu0
    %v3053 = vpop.f32.mrb[0].mxu0
    %3054 = vdwg.mxu0
    %v3058 = vrot.slane %v3026, 2
    %v3059 = vrot.slane %v3029, 2
    %v3060 = vsel %vm347, %v3058, %v3059
    %v3061 = vrot.slane %v3034, 2
    %v3062 = vsel %vm347, %v3059, %v3061
    %3063 = vrot.lane.b32.xlu0 %v3060, 8
    %v3064 = vpop.permute.xlu0 %3063
    %3065 = vrot.lane.b32.xlu0 %v3062, 8
    %v3066 = vpop.permute.xlu0 %3065
    %3067 = vrot.lane.b32.xlu0 %v3061, 8
    %v3068 = vpop.permute.xlu0 %3067
    %v3074 = vrot.slane %v3034, 4
    %v3075 = vrot.slane %v3037, 4
    %v3076 = vsel %vm337, %v3074, %v3075
    %v3077 = vrot.slane %v3042, 4
    %v3078 = vsel %vm337, %v3075, %v3077
    %3079 = vrot.lane.b32.xlu0 %v3076, 16
    %v3080 = vpop.permute.xlu0 %3079
    %3081 = vrot.lane.b32.xlu0 %v3078, 16
    %v3082 = vpop.permute.xlu0 %3081
    %3083 = vrot.lane.b32.xlu0 %v3077, 16
    %v3084 = vpop.permute.xlu0 %3083
    %v3090 = vrot.slane %v3042, 6
    %v3091 = vrot.slane %v3045, 6
    %v3092 = vsel %vm327, %v3090, %v3091
    %v3093 = vrot.slane %v3050, 6
    %v3094 = vsel %vm327, %v3091, %v3093
    %3095 = vrot.lane.b32.xlu0 %v3092, 24
    %v3096 = vpop.permute.xlu0 %3095
    %3097 = vrot.lane.b32.xlu0 %v3094, 24
    %v3098 = vpop.permute.xlu0 %3097
    %3099 = vrot.lane.b32.xlu0 %v3093, 24
    %v3100 = vpop.permute.xlu0 %3099
    %v3104 = vsel %vm372, %v3018, %v3064
    %v3105 = vsel %vm372, %v3021, %v3066
    %v3106 = vsel %vm372, %v3026, %v3068
    %v3107 = vsel %vm625, %v3104, %v3080
    %v3108 = vsel %vm625, %v3105, %v3082
    %v3109 = vsel %vm625, %v3106, %v3084
    %v3110 = vsel %vm628, %v3107, %v3096
    %v3111 = vsel %vm628, %v3108, %v3098
    %v3112 = vsel %vm628, %v3109, %v3100
    %v3113 = vpack.c.bf16 %v3111, %v3110
    %v3114 = vpack.c.bf16 %v3112, %v3112
    %v3116 = vlaneseq
    %v3117 = vshrl.u32 %v3116, 7
    %v3118 = vsub.s32 0, %v3117
    %v3119 = vrot.slane %v2538, %v3118
    %3120 = vrot.lane.b32.xlu0 %v2558, 32
    %v3121 = vpop.permute.xlu0 %3120
    %3122 = vrot.lane.b32.xlu0 %v2559, 32
    %v3123 = vpop.permute.xlu0 %3122
    %3126 = vrot.lane.b32.xlu0 %v3119, 96
    %v3127 = vpop.permute.xlu0 %3126
    %v3130 = vsel %vm199, %v3113, 0
    %v3133 = vsel %vm199, %v3114, 0
    %3135 = vmatprep.subr.bf16.mxu0 0
    %3136 = vmatpush1.bf16.msra.mxu0 %v3121
    %3137 = vmatprep.subr.bf16.mxu0 0
    %3138 = vmatpush1.bf16.msra.mxu0 %v3123
    %3139 = vmatprep.subr.bf16.mxu0 0
    %3140 = vmatpush1.bf16.msra.mxu0 0
    %3141 = vmatprep.subr.bf16.mxu0 0
    %3142 = vmatpush1.bf16.msra.mxu0 0
    %3143 = vmatprep.subr.bf16.mxu0 0
    %3144 = vmatpush1.bf16.msra.mxu0 0
    %3145 = vmatprep.subr.bf16.mxu0 0
    %3146 = vmatpush1.bf16.msra.mxu0 0
    %3147 = vmatprep.subr.bf16.mxu0 0
    %3148 = vmatpush1.bf16.msra.mxu0 0
    %3149 = vmatprep.subr.bf16.mxu0 0
    %3150 = vmatpush1.bf16.msra.mxu0 0
    %3151 = vmatprep.subr.bf16.mxu0 0
    %3152 = vmatpush1.bf16.msra.mxu0 0
    %3153 = vmatprep.subr.bf16.mxu0 0
    %3154 = vmatpush1.bf16.msra.mxu0 0
    %3155 = vmatprep.subr.bf16.mxu0 0
    %3156 = vmatpush1.bf16.msra.mxu0 0
    %3157 = vmatprep.subr.bf16.mxu0 0
    %3158 = vmatpush1.bf16.msra.mxu0 0
    %3159 = vmatprep.subr.bf16.mxu0 0
    %3160 = vmatpush1.bf16.msra.mxu0 0
    %3161 = vmatprep.subr.bf16.mxu0 0
    %3162 = vmatpush1.bf16.msra.mxu0 0
    %3163 = vmatprep.subr.bf16.mxu0 0
    %3164 = vmatpush1.bf16.msra.mxu0 0
    %3165 = vmatprep.subr.bf16.mxu0 0
    %3166 = vmatpush1.bf16.msra.mxu0 0
    %3167 = vmatprep.mubr.bf16.mxu0 0
    %3168 = vmatmul.mubr.bf16.gmra.mrb[0].mxu0 %v3130
    %v3169 = vpop.f32.mrb[0].mxu0
    %v3170 = vadd.f32 %v3127, %v3169
    %v3171 = vpop.f32.mrb[0].mxu0
    %v3172 = vpop.f32.mrb[0].mxu0
    %v3173 = vadd.f32 %v3127, %v3172
    %v3174 = vpop.f32.mrb[0].mxu0
    %3175 = vmatprep.mubr.bf16.mxu0 0
    %3176 = vmatmul.mubr.bf16.gmra.mrb[0].mxu0 %v3133
    %v3177 = vpop.f32.mrb[0].mxu0
    %v3178 = vadd.f32 %v3127, %v3177
    %v3179 = vpop.f32.mrb[0].mxu0
    %v3180 = vpop.f32.mrb[0].mxu0
    %v3181 = vpop.f32.mrb[0].mxu0
    %3182 = vdwg.mxu0
    %v3183 = vadd.f32 %v3170, %v2521
    %v3184 = vadd.f32 %v3173, %v2522
    %v3185 = vadd.f32 %v3178, %v2523
    %v3186 = vsel %vm199, %v3183, 0.0
    %3187 = vadd.xlane.f32.xlu0 %v3186
    %v3188 = vpop.xlane.xlu0 %3187
    %v3189 = vsel %vm199, %v3184, 0.0
    %3190 = vadd.xlane.f32.xlu0 %v3189
    %v3191 = vpop.xlane.xlu0 %3190
    %v3192 = vsel %vm203, %v3185, 0.0
    %3193 = vadd.xlane.f32.xlu0 %v3192
    %v3194 = vpop.xlane.xlu0 %3193
    %v3195 = vmul.f32 %v3188, %v207
    %v3196 = vmul.f32 %v3191, %v207
    %v3197 = vmul.f32 %v3194, %v207
    %v3198 = vsub.f32 %v3183, %v3195
    %v3199 = vsub.f32 %v3184, %v3196
    %v3200 = vsub.f32 %v3185, %v3197
    %v3201 = vmul.f32 %v3198, %v3198
    %v3202 = vmul.f32 %v3199, %v3199
    %v3203 = vmul.f32 %v3200, %v3200
    %v3204 = vsel %vm199, %v3201, 0.0
    %3205 = vadd.xlane.f32.xlu0 %v3204
    %v3206 = vpop.xlane.xlu0 %3205
    %v3207 = vsel %vm199, %v3202, 0.0
    %3208 = vadd.xlane.f32.xlu0 %v3207
    %v3209 = vpop.xlane.xlu0 %3208
    %v3210 = vsel %vm203, %v3203, 0.0
    %3211 = vadd.xlane.f32.xlu0 %v3210
    %v3212 = vpop.xlane.xlu0 %3211
    %v3213 = vmul.f32 %v3206, %v207
    %v3214 = vmul.f32 %v3209, %v207
    %v3215 = vmul.f32 %v3212, %v207
    %v3216 = vadd.f32 %v3213, 1e-12
    %v3217 = vadd.f32 %v3214, 1e-12
    %v3218 = vadd.f32 %v3215, 1e-12
    %v3219 = vrsqrt.pop %v3216
    %v3220 = vrsqrt.pop %v3217
    %v3221 = vrsqrt.pop %v3218
    %v3222 = vmul.f32 %v3198, %v3219
    %v3223 = vmul.f32 %v3199, %v3220
    %v3224 = vmul.f32 %v3200, %v3221
    %3225 = vrot.lane.b32.xlu0 %v3119, 64
    %v3226 = vpop.permute.xlu0 %3225
    %v3228 = vmul.f32 %v3222, %v3226
    %v3229 = vmul.f32 %v3223, %v3226
    %v3230 = vmul.f32 %v3224, %v3226
    %3231 = vrot.lane.b32.xlu0 %v3119, 32
    %v3232 = vpop.permute.xlu0 %3231
    %v3234 = vadd.f32 %v3228, %v3232
    %v3235 = vadd.f32 %v3229, %v3232
    %v3236 = vadd.f32 %v3230, %v3232
    %v3237 = vld [vmem:[%s2 + $0x8] sm:$0xff]
    %v3238 = vld [vmem:[%s2 + $0x10] sm:$0xff]
    %v3239 = vld [vmem:[%s2 + $0x20] sm:$0xff]
    %v3240 = vld [vmem:[%s2 + $0x28] sm:$0xff]
    %v3241 = vld [vmem:[%s2 + $0x38] sm:$0xff]
    %v3242 = vld [vmem:[%s2 + $0x40] sm:$0xff]
    %v3243 = vld [vmem:[%s2 + $0x50] sm:$0xff]
    %v3244 = vld [vmem:[%s2 + $0x58] sm:$0xff]
    %v3245 = vld [vmem:[%s2 + $0x68] sm:$0xff]
    %v3246 = vld [vmem:[%s2 + $0x70] sm:$0xff]
    %v3247 = vld [vmem:[%s2 + $0x80] sm:$0xff]
    %v3248 = vld [vmem:[%s2 + $0x88] sm:$0xff]
    %v3249 = vld [vmem:[%s2 + $0x98] sm:$0xff]
    %v3250 = vld [vmem:[%s2 + $0xa0] sm:$0xff]
    %v3251 = vld [vmem:[%s2 + $0xb0] sm:$0xff]
    %v3252 = vld [vmem:[%s2 + $0xb8] sm:$0xff]
    %v3253 = vld [vmem:[%s2 + $0xc8] sm:$0xff]
    %v3254 = vld [vmem:[%s2 + $0xd0] sm:$0xff]
    %v3255 = vld [vmem:[%s6 + $0x14] sm:$0xf]
    %v3256 = vld [vmem:[%s6 + $0x34] sm:$0xf]
    %v3257 = vld [vmem:[%s6 + $0x54] sm:$0xf]
    %v3258 = vld [vmem:[%s6 + $0x74] sm:$0xf]
    %v3259 = vld [vmem:[%s8 + $0xa] sm:$0x1]
    %v3260 = vpack.c.bf16 %v3235, %v3234
    %v3261 = vpack.c.bf16 %v3236, %v3236
    %v3263 = vlaneseq
    %v3264 = vshrl.u32 %v3263, 7
    %v3265 = vsub.s32 0, %v3264
    %v3266 = vrot.slane %v3259, %v3265
    %v3272 = vunpack.c.l.b16 %v3255
    %v3273 = vunpack.c.l.b16 %v3256
    %v3274 = vunpack.c.l.b16 %v3257
    %v3275 = vunpack.c.l.b16 %v3258
    %v3276 = vpack.c.b16 %v3273, %v3272
    %v3277 = vpack.c.b16 %v3275, %v3274
    %v3281 = vsel %vm199, %v3260, 0
    %v3284 = vsel %vm199, %v3261, 0
    %3286 = vmatprep.subr.bf16.mxu0 0
    %3287 = vmatpush1.bf16.msra.mxu0 %v3276
    %3288 = vmatprep.subr.bf16.mxu0 0
    %3289 = vmatpush1.bf16.msra.mxu0 %v3277
    %3290 = vmatprep.subr.bf16.mxu0 0
    %3291 = vmatpush1.bf16.msra.mxu0 0
    %3292 = vmatprep.subr.bf16.mxu0 0
    %3293 = vmatpush1.bf16.msra.mxu0 0
    %3294 = vmatprep.subr.bf16.mxu0 0
    %3295 = vmatpush1.bf16.msra.mxu0 0
    %3296 = vmatprep.subr.bf16.mxu0 0
    %3297 = vmatpush1.bf16.msra.mxu0 0
    %3298 = vmatprep.subr.bf16.mxu0 0
    %3299 = vmatpush1.bf16.msra.mxu0 0
    %3300 = vmatprep.subr.bf16.mxu0 0
    %3301 = vmatpush1.bf16.msra.mxu0 0
    %3302 = vmatprep.subr.bf16.mxu0 0
    %3303 = vmatpush1.bf16.msra.mxu0 0
    %3304 = vmatprep.subr.bf16.mxu0 0
    %3305 = vmatpush1.bf16.msra.mxu0 0
    %3306 = vmatprep.subr.bf16.mxu0 0
    %3307 = vmatpush1.bf16.msra.mxu0 0
    %3308 = vmatprep.subr.bf16.mxu0 0
    %3309 = vmatpush1.bf16.msra.mxu0 0
    %3310 = vmatprep.subr.bf16.mxu0 0
    %3311 = vmatpush1.bf16.msra.mxu0 0
    %3312 = vmatprep.subr.bf16.mxu0 0
    %3313 = vmatpush1.bf16.msra.mxu0 0
    %3314 = vmatprep.subr.bf16.mxu0 0
    %3315 = vmatpush1.bf16.msra.mxu0 0
    %3316 = vmatprep.subr.bf16.mxu0 0
    %3317 = vmatpush1.bf16.msra.mxu0 0
    %3318 = vmatprep.mubr.bf16.mxu0 0
    %3319 = vmatmul.mubr.bf16.gmra.mrb[0].mxu0 %v3281
    %v3320 = vpop.f32.mrb[0].mxu0
    %v3321 = vadd.f32 %v3266, %v3320
    %v3322 = vpop.f32.mrb[0].mxu0
    %v3323 = vpop.f32.mrb[0].mxu0
    %v3324 = vadd.f32 %v3266, %v3323
    %v3325 = vpop.f32.mrb[0].mxu0
    %3326 = vmatprep.mubr.bf16.mxu0 0
    %3327 = vmatmul.mubr.bf16.gmra.mrb[0].mxu0 %v3284
    %v3328 = vpop.f32.mrb[0].mxu0
    %v3329 = vadd.f32 %v3266, %v3328
    %v3330 = vpop.f32.mrb[0].mxu0
    %v3331 = vpop.f32.mrb[0].mxu0
    %v3332 = vpop.f32.mrb[0].mxu0
    %3333 = vdwg.mxu0
    %v3334 = vpack.c.bf16 %v2465, %v2464
    %3335 = vrot.lane.b32.xlu0 %v3276, 96
    %v3336 = vpop.permute.xlu0 %3335
    %3337 = vrot.lane.b32.xlu0 %v3277, 96
    %v3338 = vpop.permute.xlu0 %3337
    %3341 = vrot.lane.b32.xlu0 %v3266, 96
    %v3342 = vpop.permute.xlu0 %3341
    %v3345 = vsel %vm199, %v3334, 0
    %3347 = vmatprep.subr.bf16.mxu0 0
    %3348 = vmatpush1.bf16.msra.mxu0 %v3336
    %3349 = vmatprep.subr.bf16.mxu0 0
    %3350 = vmatpush1.bf16.msra.mxu0 %v3338
    %3351 = vmatprep.subr.bf16.mxu0 0
    %3352 = vmatpush1.bf16.msra.mxu0 0
    %3353 = vmatprep.subr.bf16.mxu0 0
    %3354 = vmatpush1.bf16.msra.mxu0 0
    %3355 = vmatprep.subr.bf16.mxu0 0
    %3356 = vmatpush1.bf16.msra.mxu0 0
    %3357 = vmatprep.subr.bf16.mxu0 0
    %3358 = vmatpush1.bf16.msra.mxu0 0
    %3359 = vmatprep.subr.bf16.mxu0 0
    %3360 = vmatpush1.bf16.msra.mxu0 0
    %3361 = vmatprep.subr.bf16.mxu0 0
    %3362 = vmatpush1.bf16.msra.mxu0 0
    %3363 = vmatprep.subr.bf16.mxu0 0
    %3364 = vmatpush1.bf16.msra.mxu0 0
    %3365 = vmatprep.subr.bf16.mxu0 0
    %3366 = vmatpush1.bf16.msra.mxu0 0
    %3367 = vmatprep.subr.bf16.mxu0 0
    %3368 = vmatpush1.bf16.msra.mxu0 0
    %3369 = vmatprep.subr.bf16.mxu0 0
    %3370 = vmatpush1.bf16.msra.mxu0 0
    %3371 = vmatprep.subr.bf16.mxu0 0
    %3372 = vmatpush1.bf16.msra.mxu0 0
    %3373 = vmatprep.subr.bf16.mxu0 0
    %3374 = vmatpush1.bf16.msra.mxu0 0
    %3375 = vmatprep.subr.bf16.mxu0 0
    %3376 = vmatpush1.bf16.msra.mxu0 0
    %3377 = vmatprep.subr.bf16.mxu0 0
    %3378 = vmatpush1.bf16.msra.mxu0 0
    %3379 = vmatprep.mubr.bf16.mxu0 0
    %3380 = vmatmul.mubr.bf16.gmra.mrb[0].mxu0 %v3345
    %v3381 = vpop.f32.mrb[0].mxu0
    %v3382 = vadd.f32 %v3342, %v3381
    %v3383 = vpop.f32.mrb[0].mxu0
    %v3384 = vpop.f32.mrb[0].mxu0
    %v3385 = vadd.f32 %v3342, %v3384
    %v3386 = vpop.f32.mrb[0].mxu0
    %3387 = vdwg.mxu0
    %v3391 = vrot.slane %v3321, 6
    %v3392 = vrot.slane %v3324, 6
    %v3393 = vsel %vm327, %v3391, %v3392
    %v3394 = vrot.slane %v3329, 6
    %v3395 = vsel %vm327, %v3392, %v3394
    %3396 = vrot.lane.b32.xlu0 %v3391, 120
    %v3397 = vpop.permute.xlu0 %3396
    %3398 = vrot.lane.b32.xlu0 %v3393, 120
    %v3399 = vpop.permute.xlu0 %3398
    %3400 = vrot.lane.b32.xlu0 %v3395, 120
    %v3401 = vpop.permute.xlu0 %3400
    %v3405 = vrot.slane %v3321, 4
    %v3406 = vrot.slane %v3324, 4
    %v3407 = vsel %vm337, %v3405, %v3406
    %v3408 = vrot.slane %v3329, 4
    %v3409 = vsel %vm337, %v3406, %v3408
    %3410 = vrot.lane.b32.xlu0 %v3405, 112
    %v3411 = vpop.permute.xlu0 %3410
    %3412 = vrot.lane.b32.xlu0 %v3407, 112
    %v3413 = vpop.permute.xlu0 %3412
    %3414 = vrot.lane.b32.xlu0 %v3409, 112
    %v3415 = vpop.permute.xlu0 %3414
    %v3419 = vrot.slane %v3321, 2
    %v3420 = vrot.slane %v3324, 2
    %v3421 = vsel %vm347, %v3419, %v3420
    %v3422 = vrot.slane %v3329, 2
    %v3423 = vsel %vm347, %v3420, %v3422
    %3424 = vrot.lane.b32.xlu0 %v3419, 104
    %v3425 = vpop.permute.xlu0 %3424
    %3426 = vrot.lane.b32.xlu0 %v3421, 104
    %v3427 = vpop.permute.xlu0 %3426
    %3428 = vrot.lane.b32.xlu0 %v3423, 104
    %v3429 = vpop.permute.xlu0 %3428
    %v3433 = vsel %vm327, %v3329, %v3397
    %v3434 = vsel %vm337, %v3401, %v3411
    %v3435 = vsel %vm347, %v3415, %v3425
    %3438 = vrot.lane.b32.xlu0 %v3382, 120
    %v3439 = vpop.permute.xlu0 %3438
    %3440 = vrot.lane.b32.xlu0 %v3385, 120
    %v3441 = vpop.permute.xlu0 %3440
    %3444 = vrot.lane.b32.xlu0 %v3382, 112
    %v3445 = vpop.permute.xlu0 %3444
    %3446 = vrot.lane.b32.xlu0 %v3385, 112
    %v3447 = vpop.permute.xlu0 %3446
    %3450 = vrot.lane.b32.xlu0 %v3382, 104
    %v3451 = vpop.permute.xlu0 %3450
    %3452 = vrot.lane.b32.xlu0 %v3385, 104
    %v3453 = vpop.permute.xlu0 %3452
    %v3456 = vpack.c.bf16 %v3324, %v3321
    %v3457 = vpack.c.bf16 %v3399, %v3433
    %v3458 = vpack.c.bf16 %v3413, %v3434
    %v3459 = vpack.c.bf16 %v3427, %v3435
    %v3460 = vpack.c.bf16 %v3429, %v3429
    %v3461 = vpack.c.bf16 %v3385, %v3382
    %v3462 = vpack.c.bf16 %v3441, %v3439
    %v3463 = vpack.c.bf16 %v3447, %v3445
    %v3464 = vpack.c.bf16 %v3453, %v3451
    %v3466 = vsel %vm372, %v3456, 0
    %v3469 = vsel %vm372, %v3457, 0
    %v3472 = vsel %vm372, %v3458, 0
    %v3475 = vsel %vm372, %v3459, 0
    %v3478 = vsel %vm372, %v3460, 0
    %v3481 = vsel %vm372, %v3461, 0
    %v3484 = vsel %vm372, %v3462, 0
    %v3487 = vsel %vm372, %v3463, 0
    %v3490 = vsel %vm372, %v3464, 0
    %3492 = vmatprep.subr.bf16.mxu0 0
    %3493 = vmatpush1.bf16.xpose.msra.mxu0 %v3481
    %3494 = vmatprep.subr.bf16.mxu0 0
    %3495 = vmatpush1.bf16.xpose.msra.mxu0 %v3484
    %3496 = vmatprep.subr.bf16.mxu0 0
    %3497 = vmatpush1.bf16.xpose.msra.mxu0 %v3487
    %3498 = vmatprep.subr.bf16.mxu0 0
    %3499 = vmatpush1.bf16.xpose.msra.mxu0 %v3490
    %3500 = vmatprep.subr.bf16.mxu0 0
    %3501 = vmatpush1.bf16.xpose.msra.mxu0 0
    %3502 = vmatprep.subr.bf16.mxu0 0
    %3503 = vmatpush1.bf16.xpose.msra.mxu0 0
    %3504 = vmatprep.subr.bf16.mxu0 0
    %3505 = vmatpush1.bf16.xpose.msra.mxu0 0
    %3506 = vmatprep.subr.bf16.mxu0 0
    %3507 = vmatpush1.bf16.xpose.msra.mxu0 0
    %3508 = vmatprep.subr.bf16.mxu0 0
    %3509 = vmatpush1.bf16.xpose.msra.mxu0 0
    %3510 = vmatprep.subr.bf16.mxu0 0
    %3511 = vmatpush1.bf16.xpose.msra.mxu0 0
    %3512 = vmatprep.subr.bf16.mxu0 0
    %3513 = vmatpush1.bf16.xpose.msra.mxu0 0
    %3514 = vmatprep.subr.bf16.mxu0 0
    %3515 = vmatpush1.bf16.xpose.msra.mxu0 0
    %3516 = vmatprep.subr.bf16.mxu0 0
    %3517 = vmatpush1.bf16.xpose.msra.mxu0 0
    %3518 = vmatprep.subr.bf16.mxu0 0
    %3519 = vmatpush1.bf16.xpose.msra.mxu0 0
    %3520 = vmatprep.subr.bf16.mxu0 0
    %3521 = vmatpush1.bf16.xpose.msra.mxu0 0
    %3522 = vmatprep.subr.bf16.mxu0 0
    %3523 = vmatpush1.bf16.xpose.msra.mxu0 0
    %3524 = vmatprep.mubr.bf16.mxu0 0
    %3525 = vmatmul.mubr.bf16.gmra.mrb[0].mxu0 %v3466
    %v3526 = vpop.f32.mrb[0].mxu0
    %v3527 = vadd.f32 0.0, %v3526
    %v3528 = vpop.f32.mrb[0].mxu0
    %v3529 = vpop.f32.mrb[0].mxu0
    %v3530 = vadd.f32 0.0, %v3529
    %v3531 = vpop.f32.mrb[0].mxu0
    %3532 = vmatprep.mubr.bf16.mxu0 0
    %3533 = vmatmul.mubr.bf16.gmra.mrb[0].mxu0 %v3469
    %v3534 = vpop.f32.mrb[0].mxu0
    %v3535 = vadd.f32 0.0, %v3534
    %v3536 = vpop.f32.mrb[0].mxu0
    %v3537 = vpop.f32.mrb[0].mxu0
    %v3538 = vadd.f32 0.0, %v3537
    %v3539 = vpop.f32.mrb[0].mxu0
    %3540 = vmatprep.mubr.bf16.mxu0 0
    %3541 = vmatmul.mubr.bf16.gmra.mrb[0].mxu0 %v3472
    %v3542 = vpop.f32.mrb[0].mxu0
    %v3543 = vadd.f32 0.0, %v3542
    %v3544 = vpop.f32.mrb[0].mxu0
    %v3545 = vpop.f32.mrb[0].mxu0
    %v3546 = vadd.f32 0.0, %v3545
    %v3547 = vpop.f32.mrb[0].mxu0
    %3548 = vmatprep.mubr.bf16.mxu0 0
    %3549 = vmatmul.mubr.bf16.gmra.mrb[0].mxu0 %v3475
    %v3550 = vpop.f32.mrb[0].mxu0
    %v3551 = vadd.f32 0.0, %v3550
    %v3552 = vpop.f32.mrb[0].mxu0
    %v3553 = vpop.f32.mrb[0].mxu0
    %v3554 = vadd.f32 0.0, %v3553
    %v3555 = vpop.f32.mrb[0].mxu0
    %3556 = vmatprep.mubr.bf16.mxu0 0
    %3557 = vmatmul.mubr.bf16.gmra.mrb[0].mxu0 %v3478
    %v3558 = vpop.f32.mrb[0].mxu0
    %v3559 = vadd.f32 0.0, %v3558
    %v3560 = vpop.f32.mrb[0].mxu0
    %v3561 = vpop.f32.mrb[0].mxu0
    %v3562 = vpop.f32.mrb[0].mxu0
    %3563 = vdwg.mxu0
    %v3564 = vmul.f32 %v3527, 0.35355338
    %v3565 = vmul.f32 %v3530, 0.35355338
    %v3566 = vmul.f32 %v3535, 0.35355338
    %v3567 = vmul.f32 %v3538, 0.35355338
    %v3568 = vmul.f32 %v3543, 0.35355338
    %v3569 = vmul.f32 %v3546, 0.35355338
    %v3570 = vmul.f32 %v3551, 0.35355338
    %v3571 = vmul.f32 %v3554, 0.35355338
    %v3572 = vmul.f32 %v3559, 0.35355338
    %3591 = vrot.lane.b32.xlu0 %v3237, 40
    %v3592 = vpop.permute.xlu0 %3591
    %3593 = vrot.lane.b32.xlu0 %v3238, 40
    %v3594 = vpop.permute.xlu0 %3593
    %3595 = vrot.lane.b32.xlu0 %v3239, 40
    %v3596 = vpop.permute.xlu0 %3595
    %3597 = vrot.lane.b32.xlu0 %v3240, 40
    %v3598 = vpop.permute.xlu0 %3597
    %3599 = vrot.lane.b32.xlu0 %v3241, 40
    %v3600 = vpop.permute.xlu0 %3599
    %3601 = vrot.lane.b32.xlu0 %v3242, 40
    %v3602 = vpop.permute.xlu0 %3601
    %3603 = vrot.lane.b32.xlu0 %v3243, 40
    %v3604 = vpop.permute.xlu0 %3603
    %3605 = vrot.lane.b32.xlu0 %v3244, 40
    %v3606 = vpop.permute.xlu0 %3605
    %3607 = vrot.lane.b32.xlu0 %v3245, 40
    %v3608 = vpop.permute.xlu0 %3607
    %3609 = vrot.lane.b32.xlu0 %v3246, 40
    %v3610 = vpop.permute.xlu0 %3609
    %3611 = vrot.lane.b32.xlu0 %v3247, 40
    %v3612 = vpop.permute.xlu0 %3611
    %3613 = vrot.lane.b32.xlu0 %v3248, 40
    %v3614 = vpop.permute.xlu0 %3613
    %3615 = vrot.lane.b32.xlu0 %v3249, 40
    %v3616 = vpop.permute.xlu0 %3615
    %3617 = vrot.lane.b32.xlu0 %v3250, 40
    %v3618 = vpop.permute.xlu0 %3617
    %3619 = vrot.lane.b32.xlu0 %v3251, 40
    %v3620 = vpop.permute.xlu0 %3619
    %3621 = vrot.lane.b32.xlu0 %v3252, 40
    %v3622 = vpop.permute.xlu0 %3621
    %3623 = vrot.lane.b32.xlu0 %v3253, 40
    %v3624 = vpop.permute.xlu0 %3623
    %3625 = vrot.lane.b32.xlu0 %v3254, 40
    %v3626 = vpop.permute.xlu0 %3625
    %v3627 = vsel %vm457, %v3592, %v3594
    %v3628 = vsel %vm457, %v3596, %v3598
    %v3629 = vsel %vm457, %v3600, %v3602
    %v3630 = vsel %vm457, %v3604, %v3606
    %v3631 = vsel %vm457, %v3608, %v3610
    %v3632 = vsel %vm457, %v3612, %v3614
    %v3633 = vsel %vm457, %v3616, %v3618
    %v3634 = vsel %vm457, %v3620, %v3622
    %v3635 = vsel %vm457, %v3624, %v3626
    %v3645 = vadd.f32 %v3564, %v3627
    %v3646 = vadd.f32 %v3565, %v3628
    %v3647 = vadd.f32 %v3566, %v3629
    %v3648 = vadd.f32 %v3567, %v3630
    %v3649 = vadd.f32 %v3568, %v3631
    %v3650 = vadd.f32 %v3569, %v3632
    %v3651 = vadd.f32 %v3570, %v3633
    %v3652 = vadd.f32 %v3571, %v3634
    %v3653 = vadd.f32 %v3572, %v3635
    %v3654 = vsel %vm278, %v3645, -inf
    %3655 = vmax.xlane.f32.xlu0 %v3654
    %v3656 = vpop.xlane.xlu0 %3655
    %v3657 = vsel %vm278, %v3646, -inf
    %3658 = vmax.xlane.f32.xlu0 %v3657
    %v3659 = vpop.xlane.xlu0 %3658
    %v3660 = vsel %vm278, %v3647, -inf
    %3661 = vmax.xlane.f32.xlu0 %v3660
    %v3662 = vpop.xlane.xlu0 %3661
    %v3663 = vsel %vm278, %v3648, -inf
    %3664 = vmax.xlane.f32.xlu0 %v3663
    %v3665 = vpop.xlane.xlu0 %3664
    %v3666 = vsel %vm278, %v3649, -inf
    %3667 = vmax.xlane.f32.xlu0 %v3666
    %v3668 = vpop.xlane.xlu0 %3667
    %v3669 = vsel %vm278, %v3650, -inf
    %3670 = vmax.xlane.f32.xlu0 %v3669
    %v3671 = vpop.xlane.xlu0 %3670
    %v3672 = vsel %vm278, %v3651, -inf
    %3673 = vmax.xlane.f32.xlu0 %v3672
    %v3674 = vpop.xlane.xlu0 %3673
    %v3675 = vsel %vm278, %v3652, -inf
    %3676 = vmax.xlane.f32.xlu0 %v3675
    %v3677 = vpop.xlane.xlu0 %3676
    %v3678 = vsel %vm278, %v3653, -inf
    %3679 = vmax.xlane.f32.xlu0 %v3678
    %v3680 = vpop.xlane.xlu0 %3679
    %v3681 = vsub.f32 %v3645, %v3656
    %v3682 = vsub.f32 %v3646, %v3659
    %v3683 = vsub.f32 %v3647, %v3662
    %v3684 = vsub.f32 %v3648, %v3665
    %v3685 = vsub.f32 %v3649, %v3668
    %v3686 = vsub.f32 %v3650, %v3671
    %v3687 = vsub.f32 %v3651, %v3674
    %v3688 = vsub.f32 %v3652, %v3677
    %v3689 = vsub.f32 %v3653, %v3680
    %v3690 = vmul.f32 %v3681, 1.442695
    %v3691 = vpow.pop %v3690
    %v3692 = vmul.f32 %v3682, 1.442695
    %v3693 = vpow.pop %v3692
    %v3694 = vmul.f32 %v3683, 1.442695
    %v3695 = vpow.pop %v3694
    %v3696 = vmul.f32 %v3684, 1.442695
    %v3697 = vpow.pop %v3696
    %v3698 = vmul.f32 %v3685, 1.442695
    %v3699 = vpow.pop %v3698
    %v3700 = vmul.f32 %v3686, 1.442695
    %v3701 = vpow.pop %v3700
    %v3702 = vmul.f32 %v3687, 1.442695
    %v3703 = vpow.pop %v3702
    %v3704 = vmul.f32 %v3688, 1.442695
    %v3705 = vpow.pop %v3704
    %v3706 = vmul.f32 %v3689, 1.442695
    %v3707 = vpow.pop %v3706
    %v3708 = vsel %vm278, %v3691, 0.0
    %3709 = vadd.xlane.f32.xlu0 %v3708
    %v3710 = vpop.xlane.xlu0 %3709
    %v3711 = vsel %vm278, %v3693, 0.0
    %3712 = vadd.xlane.f32.xlu0 %v3711
    %v3713 = vpop.xlane.xlu0 %3712
    %v3714 = vsel %vm278, %v3695, 0.0
    %3715 = vadd.xlane.f32.xlu0 %v3714
    %v3716 = vpop.xlane.xlu0 %3715
    %v3717 = vsel %vm278, %v3697, 0.0
    %3718 = vadd.xlane.f32.xlu0 %v3717
    %v3719 = vpop.xlane.xlu0 %3718
    %v3720 = vsel %vm278, %v3699, 0.0
    %3721 = vadd.xlane.f32.xlu0 %v3720
    %v3722 = vpop.xlane.xlu0 %3721
    %v3723 = vsel %vm278, %v3701, 0.0
    %3724 = vadd.xlane.f32.xlu0 %v3723
    %v3725 = vpop.xlane.xlu0 %3724
    %v3726 = vsel %vm278, %v3703, 0.0
    %3727 = vadd.xlane.f32.xlu0 %v3726
    %v3728 = vpop.xlane.xlu0 %3727
    %v3729 = vsel %vm278, %v3705, 0.0
    %3730 = vadd.xlane.f32.xlu0 %v3729
    %v3731 = vpop.xlane.xlu0 %3730
    %v3732 = vsel %vm278, %v3707, 0.0
    %3733 = vadd.xlane.f32.xlu0 %v3732
    %v3734 = vpop.xlane.xlu0 %3733
    %v3735 = vrcp.pop %v3710
    %v3736 = vrcp.pop %v3713
    %v3737 = vrcp.pop %v3716
    %v3738 = vrcp.pop %v3719
    %v3739 = vrcp.pop %v3722
    %v3740 = vrcp.pop %v3725
    %v3741 = vrcp.pop %v3728
    %v3742 = vrcp.pop %v3731
    %v3743 = vrcp.pop %v3734
    %v3744 = vmul.f32 %v3691, %v3735
    %v3745 = vmul.f32 %v3693, %v3736
    %v3746 = vmul.f32 %v3695, %v3737
    %v3747 = vmul.f32 %v3697, %v3738
    %v3748 = vmul.f32 %v3699, %v3739
    %v3749 = vmul.f32 %v3701, %v3740
    %v3750 = vmul.f32 %v3703, %v3741
    %v3751 = vmul.f32 %v3705, %v3742
    %v3752 = vmul.f32 %v3707, %v3743
    %v3753 = vpack.c.bf16 %v3745, %v3744
    %v3754 = vpack.c.bf16 %v3747, %v3746
    %v3755 = vpack.c.bf16 %v3749, %v3748
    %v3756 = vpack.c.bf16 %v3751, %v3750
    %v3757 = vpack.c.bf16 %v3752, %v3752
    %3762 = vrot.lane.b32.xlu0 %v3461, 96
    %v3763 = vpop.permute.xlu0 %3762
    %3764 = vrot.lane.b32.xlu0 %v3462, 96
    %v3765 = vpop.permute.xlu0 %3764
    %3766 = vrot.lane.b32.xlu0 %v3463, 96
    %v3767 = vpop.permute.xlu0 %3766
    %3768 = vrot.lane.b32.xlu0 %v3464, 96
    %v3769 = vpop.permute.xlu0 %3768
    %v3775 = vsel %vm278, %v3753, 0
    %v3778 = vsel %vm278, %v3754, 0
    %v3781 = vsel %vm278, %v3755, 0
    %v3784 = vsel %vm278, %v3756, 0
    %v3787 = vsel %vm278, %v3757, 0
    %3789 = vmatprep.subr.bf16.mxu0 0
    %3790 = vmatpush1.bf16.msra.mxu0 %v3763
    %3791 = vmatprep.subr.bf16.mxu0 0
    %3792 = vmatpush1.bf16.msra.mxu0 %v3765
    %3793 = vmatprep.subr.bf16.mxu0 0
    %3794 = vmatpush1.bf16.msra.mxu0 %v3767
    %3795 = vmatprep.subr.bf16.mxu0 0
    %3796 = vmatpush1.bf16.msra.mxu0 %v3769
    %3797 = vmatprep.subr.bf16.mxu0 0
    %3798 = vmatpush1.bf16.msra.mxu0 0
    %3799 = vmatprep.subr.bf16.mxu0 0
    %3800 = vmatpush1.bf16.msra.mxu0 0
    %3801 = vmatprep.subr.bf16.mxu0 0
    %3802 = vmatpush1.bf16.msra.mxu0 0
    %3803 = vmatprep.subr.bf16.mxu0 0
    %3804 = vmatpush1.bf16.msra.mxu0 0
    %3805 = vmatprep.subr.bf16.mxu0 0
    %3806 = vmatpush1.bf16.msra.mxu0 0
    %3807 = vmatprep.subr.bf16.mxu0 0
    %3808 = vmatpush1.bf16.msra.mxu0 0
    %3809 = vmatprep.subr.bf16.mxu0 0
    %3810 = vmatpush1.bf16.msra.mxu0 0
    %3811 = vmatprep.subr.bf16.mxu0 0
    %3812 = vmatpush1.bf16.msra.mxu0 0
    %3813 = vmatprep.subr.bf16.mxu0 0
    %3814 = vmatpush1.bf16.msra.mxu0 0
    %3815 = vmatprep.subr.bf16.mxu0 0
    %3816 = vmatpush1.bf16.msra.mxu0 0
    %3817 = vmatprep.subr.bf16.mxu0 0
    %3818 = vmatpush1.bf16.msra.mxu0 0
    %3819 = vmatprep.subr.bf16.mxu0 0
    %3820 = vmatpush1.bf16.msra.mxu0 0
    %3821 = vmatprep.mubr.bf16.mxu0 0
    %3822 = vmatmul.mubr.bf16.gmra.mrb[0].mxu0 %v3775
    %v3823 = vpop.f32.mrb[0].mxu0
    %v3824 = vadd.f32 0.0, %v3823
    %v3825 = vpop.f32.mrb[0].mxu0
    %v3826 = vpop.f32.mrb[0].mxu0
    %v3827 = vadd.f32 0.0, %v3826
    %v3828 = vpop.f32.mrb[0].mxu0
    %3829 = vmatprep.mubr.bf16.mxu0 0
    %3830 = vmatmul.mubr.bf16.gmra.mrb[0].mxu0 %v3778
    %v3831 = vpop.f32.mrb[0].mxu0
    %v3832 = vadd.f32 0.0, %v3831
    %v3833 = vpop.f32.mrb[0].mxu0
    %v3834 = vpop.f32.mrb[0].mxu0
    %v3835 = vadd.f32 0.0, %v3834
    %v3836 = vpop.f32.mrb[0].mxu0
    %3837 = vmatprep.mubr.bf16.mxu0 0
    %3838 = vmatmul.mubr.bf16.gmra.mrb[0].mxu0 %v3781
    %v3839 = vpop.f32.mrb[0].mxu0
    %v3840 = vadd.f32 0.0, %v3839
    %v3841 = vpop.f32.mrb[0].mxu0
    %v3842 = vpop.f32.mrb[0].mxu0
    %v3843 = vadd.f32 0.0, %v3842
    %v3844 = vpop.f32.mrb[0].mxu0
    %3845 = vmatprep.mubr.bf16.mxu0 0
    %3846 = vmatmul.mubr.bf16.gmra.mrb[0].mxu0 %v3784
    %v3847 = vpop.f32.mrb[0].mxu0
    %v3848 = vadd.f32 0.0, %v3847
    %v3849 = vpop.f32.mrb[0].mxu0
    %v3850 = vpop.f32.mrb[0].mxu0
    %v3851 = vadd.f32 0.0, %v3850
    %v3852 = vpop.f32.mrb[0].mxu0
    %3853 = vmatprep.mubr.bf16.mxu0 0
    %3854 = vmatmul.mubr.bf16.gmra.mrb[0].mxu0 %v3787
    %v3855 = vpop.f32.mrb[0].mxu0
    %v3856 = vadd.f32 0.0, %v3855
    %v3857 = vpop.f32.mrb[0].mxu0
    %v3858 = vpop.f32.mrb[0].mxu0
    %v3859 = vpop.f32.mrb[0].mxu0
    %3860 = vdwg.mxu0
    %v3864 = vrot.slane %v3832, 2
    %v3865 = vrot.slane %v3835, 2
    %v3866 = vsel %vm347, %v3864, %v3865
    %v3867 = vrot.slane %v3840, 2
    %v3868 = vsel %vm347, %v3865, %v3867
    %3869 = vrot.lane.b32.xlu0 %v3866, 8
    %v3870 = vpop.permute.xlu0 %3869
    %3871 = vrot.lane.b32.xlu0 %v3868, 8
    %v3872 = vpop.permute.xlu0 %3871
    %3873 = vrot.lane.b32.xlu0 %v3867, 8
    %v3874 = vpop.permute.xlu0 %3873
    %v3880 = vrot.slane %v3840, 4
    %v3881 = vrot.slane %v3843, 4
    %v3882 = vsel %vm337, %v3880, %v3881
    %v3883 = vrot.slane %v3848, 4
    %v3884 = vsel %vm337, %v3881, %v3883
    %3885 = vrot.lane.b32.xlu0 %v3882, 16
    %v3886 = vpop.permute.xlu0 %3885
    %3887 = vrot.lane.b32.xlu0 %v3884, 16
    %v3888 = vpop.permute.xlu0 %3887
    %3889 = vrot.lane.b32.xlu0 %v3883, 16
    %v3890 = vpop.permute.xlu0 %3889
    %v3896 = vrot.slane %v3848, 6
    %v3897 = vrot.slane %v3851, 6
    %v3898 = vsel %vm327, %v3896, %v3897
    %v3899 = vrot.slane %v3856, 6
    %v3900 = vsel %vm327, %v3897, %v3899
    %3901 = vrot.lane.b32.xlu0 %v3898, 24
    %v3902 = vpop.permute.xlu0 %3901
    %3903 = vrot.lane.b32.xlu0 %v3900, 24
    %v3904 = vpop.permute.xlu0 %3903
    %3905 = vrot.lane.b32.xlu0 %v3899, 24
    %v3906 = vpop.permute.xlu0 %3905
    %v3910 = vsel %vm372, %v3824, %v3870
    %v3911 = vsel %vm372, %v3827, %v3872
    %v3912 = vsel %vm372, %v3832, %v3874
    %v3913 = vsel %vm625, %v3910, %v3886
    %v3914 = vsel %vm625, %v3911, %v3888
    %v3915 = vsel %vm625, %v3912, %v3890
    %v3916 = vsel %vm628, %v3913, %v3902
    %v3917 = vsel %vm628, %v3914, %v3904
    %v3918 = vsel %vm628, %v3915, %v3906
    %v3919 = vpack.c.bf16 %v3917, %v3916
    %v3920 = vpack.c.bf16 %v3918, %v3918
    %3921 = vrot.lane.b32.xlu0 %v3276, 32
    %v3922 = vpop.permute.xlu0 %3921
    %3923 = vrot.lane.b32.xlu0 %v3277, 32
    %v3924 = vpop.permute.xlu0 %3923
    %3927 = vrot.lane.b32.xlu0 %v3266, 32
    %v3928 = vpop.permute.xlu0 %3927
    %v3931 = vsel %vm199, %v3919, 0
    %v3934 = vsel %vm199, %v3920, 0
    %3936 = vmatprep.subr.bf16.mxu0 0
    %3937 = vmatpush1.bf16.msra.mxu0 %v3922
    %3938 = vmatprep.subr.bf16.mxu0 0
    %3939 = vmatpush1.bf16.msra.mxu0 %v3924
    %3940 = vmatprep.subr.bf16.mxu0 0
    %3941 = vmatpush1.bf16.msra.mxu0 0
    %3942 = vmatprep.subr.bf16.mxu0 0
    %3943 = vmatpush1.bf16.msra.mxu0 0
    %3944 = vmatprep.subr.bf16.mxu0 0
    %3945 = vmatpush1.bf16.msra.mxu0 0
    %3946 = vmatprep.subr.bf16.mxu0 0
    %3947 = vmatpush1.bf16.msra.mxu0 0
    %3948 = vmatprep.subr.bf16.mxu0 0
    %3949 = vmatpush1.bf16.msra.mxu0 0
    %3950 = vmatprep.subr.bf16.mxu0 0
    %3951 = vmatpush1.bf16.msra.mxu0 0
    %3952 = vmatprep.subr.bf16.mxu0 0
    %3953 = vmatpush1.bf16.msra.mxu0 0
    %3954 = vmatprep.subr.bf16.mxu0 0
    %3955 = vmatpush1.bf16.msra.mxu0 0
    %3956 = vmatprep.subr.bf16.mxu0 0
    %3957 = vmatpush1.bf16.msra.mxu0 0
    %3958 = vmatprep.subr.bf16.mxu0 0
    %3959 = vmatpush1.bf16.msra.mxu0 0
    %3960 = vmatprep.subr.bf16.mxu0 0
    %3961 = vmatpush1.bf16.msra.mxu0 0
    %3962 = vmatprep.subr.bf16.mxu0 0
    %3963 = vmatpush1.bf16.msra.mxu0 0
    %3964 = vmatprep.subr.bf16.mxu0 0
    %3965 = vmatpush1.bf16.msra.mxu0 0
    %3966 = vmatprep.subr.bf16.mxu0 0
    %3967 = vmatpush1.bf16.msra.mxu0 0
    %3968 = vmatprep.mubr.bf16.mxu0 0
    %3969 = vmatmul.mubr.bf16.gmra.mrb[0].mxu0 %v3931
    %v3970 = vpop.f32.mrb[0].mxu0
    %v3971 = vadd.f32 %v3928, %v3970
    %v3972 = vpop.f32.mrb[0].mxu0
    %v3973 = vpop.f32.mrb[0].mxu0
    %v3974 = vadd.f32 %v3928, %v3973
    %v3975 = vpop.f32.mrb[0].mxu0
    %3976 = vmatprep.mubr.bf16.mxu0 0
    %3977 = vmatmul.mubr.bf16.gmra.mrb[0].mxu0 %v3934
    %v3978 = vpop.f32.mrb[0].mxu0
    %v3979 = vadd.f32 %v3928, %v3978
    %v3980 = vpop.f32.mrb[0].mxu0
    %v3981 = vpop.f32.mrb[0].mxu0
    %v3982 = vpop.f32.mrb[0].mxu0
    %3983 = vdwg.mxu0
    %v3984 = vadd.f32 %v3971, %v3234
    %v3985 = vadd.f32 %v3974, %v3235
    %v3986 = vadd.f32 %v3979, %v3236
    %v3987 = vld [vmem:[%s8 + $0xb] sm:$0x1]
    %v3988 = vsel %vm199, %v3984, 0.0
    %3989 = vadd.xlane.f32.xlu0 %v3988
    %v3990 = vpop.xlane.xlu0 %3989
    %v3991 = vsel %vm199, %v3985, 0.0
    %3992 = vadd.xlane.f32.xlu0 %v3991
    %v3993 = vpop.xlane.xlu0 %3992
    %v3994 = vsel %vm203, %v3986, 0.0
    %3995 = vadd.xlane.f32.xlu0 %v3994
    %v3996 = vpop.xlane.xlu0 %3995
    %v3997 = vmul.f32 %v3990, %v207
    %v3998 = vmul.f32 %v3993, %v207
    %v3999 = vmul.f32 %v3996, %v207
    %v4000 = vsub.f32 %v3984, %v3997
    %v4001 = vsub.f32 %v3985, %v3998
    %v4002 = vsub.f32 %v3986, %v3999
    %v4003 = vmul.f32 %v4000, %v4000
    %v4004 = vmul.f32 %v4001, %v4001
    %v4005 = vmul.f32 %v4002, %v4002
    %v4006 = vsel %vm199, %v4003, 0.0
    %4007 = vadd.xlane.f32.xlu0 %v4006
    %v4008 = vpop.xlane.xlu0 %4007
    %v4009 = vsel %vm199, %v4004, 0.0
    %4010 = vadd.xlane.f32.xlu0 %v4009
    %v4011 = vpop.xlane.xlu0 %4010
    %v4012 = vsel %vm203, %v4005, 0.0
    %4013 = vadd.xlane.f32.xlu0 %v4012
    %v4014 = vpop.xlane.xlu0 %4013
    %v4015 = vmul.f32 %v4008, %v207
    %v4016 = vmul.f32 %v4011, %v207
    %v4017 = vmul.f32 %v4014, %v207
    %v4018 = vadd.f32 %v4015, 1e-12
    %v4019 = vadd.f32 %v4016, 1e-12
    %v4020 = vadd.f32 %v4017, 1e-12
    %v4021 = vrsqrt.pop %v4018
    %v4022 = vrsqrt.pop %v4019
    %v4023 = vrsqrt.pop %v4020
    %v4024 = vmul.f32 %v4000, %v4021
    %v4025 = vmul.f32 %v4001, %v4022
    %v4026 = vmul.f32 %v4002, %v4023
    %v4028 = vlaneseq
    %v4029 = vshrl.u32 %v4028, 7
    %v4030 = vsub.s32 0, %v4029
    %v4031 = vrot.slane %v3987, %v4030
    %v4033 = vmul.f32 %v4024, %v4031
    %v4034 = vmul.f32 %v4025, %v4031
    %v4035 = vmul.f32 %v4026, %v4031
    %4036 = vrot.lane.b32.xlu0 %v4031, 96
    %v4037 = vpop.permute.xlu0 %4036
    %v4039 = vadd.f32 %v4033, %v4037
    %v4040 = vadd.f32 %v4034, %v4037
    %v4041 = vadd.f32 %v4035, %v4037
    %v4042 = vld [vmem:[%s6 + $0x18] sm:$0xf]
    %v4043 = vld [vmem:[%s6 + $0x38] sm:$0xf]
    %v4044 = vld [vmem:[%s6 + $0x58] sm:$0xf]
    %v4045 = vld [vmem:[%s6 + $0x78] sm:$0xf]
    %v4046 = vpack.c.bf16 %v4040, %v4039
    %v4047 = vpack.c.bf16 %v4041, %v4041
    %v4052 = vunpack.c.l.b16 %v4042
    %v4053 = vunpack.c.l.b16 %v4043
    %v4054 = vunpack.c.l.b16 %v4044
    %v4055 = vunpack.c.l.b16 %v4045
    %v4056 = vpack.c.b16 %v4053, %v4052
    %v4057 = vpack.c.b16 %v4055, %v4054
    %4060 = vrot.lane.b32.xlu0 %v4031, 64
    %v4061 = vpop.permute.xlu0 %4060
    %v4064 = vsel %vm199, %v4046, 0
    %v4067 = vsel %vm199, %v4047, 0
    %4069 = vmatprep.subr.bf16.mxu0 0
    %4070 = vmatpush1.bf16.msra.mxu0 %v4056
    %4071 = vmatprep.subr.bf16.mxu0 0
    %4072 = vmatpush1.bf16.msra.mxu0 %v4057
    %4073 = vmatprep.subr.bf16.mxu0 0
    %4074 = vmatpush1.bf16.msra.mxu0 0
    %4075 = vmatprep.subr.bf16.mxu0 0
    %4076 = vmatpush1.bf16.msra.mxu0 0
    %4077 = vmatprep.subr.bf16.mxu0 0
    %4078 = vmatpush1.bf16.msra.mxu0 0
    %4079 = vmatprep.subr.bf16.mxu0 0
    %4080 = vmatpush1.bf16.msra.mxu0 0
    %4081 = vmatprep.subr.bf16.mxu0 0
    %4082 = vmatpush1.bf16.msra.mxu0 0
    %4083 = vmatprep.subr.bf16.mxu0 0
    %4084 = vmatpush1.bf16.msra.mxu0 0
    %4085 = vmatprep.subr.bf16.mxu0 0
    %4086 = vmatpush1.bf16.msra.mxu0 0
    %4087 = vmatprep.subr.bf16.mxu0 0
    %4088 = vmatpush1.bf16.msra.mxu0 0
    %4089 = vmatprep.subr.bf16.mxu0 0
    %4090 = vmatpush1.bf16.msra.mxu0 0
    %4091 = vmatprep.subr.bf16.mxu0 0
    %4092 = vmatpush1.bf16.msra.mxu0 0
    %4093 = vmatprep.subr.bf16.mxu0 0
    %4094 = vmatpush1.bf16.msra.mxu0 0
    %4095 = vmatprep.subr.bf16.mxu0 0
    %4096 = vmatpush1.bf16.msra.mxu0 0
    %4097 = vmatprep.subr.bf16.mxu0 0
    %4098 = vmatpush1.bf16.msra.mxu0 0
    %4099 = vmatprep.subr.bf16.mxu0 0
    %4100 = vmatpush1.bf16.msra.mxu0 0
    %4101 = vmatprep.mubr.bf16.mxu0 0
    %4102 = vmatmul.mubr.bf16.gmra.mrb[0].mxu0 %v4064
    %v4103 = vpop.f32.mrb[0].mxu0
    %v4104 = vadd.f32 %v4061, %v4103
    %v4105 = vpop.f32.mrb[0].mxu0
    %v4106 = vpop.f32.mrb[0].mxu0
    %v4107 = vadd.f32 %v4061, %v4106
    %v4108 = vpop.f32.mrb[0].mxu0
    %4109 = vmatprep.mubr.bf16.mxu0 0
    %4110 = vmatmul.mubr.bf16.gmra.mrb[0].mxu0 %v4067
    %v4111 = vpop.f32.mrb[0].mxu0
    %v4112 = vadd.f32 %v4061, %v4111
    %v4113 = vpop.f32.mrb[0].mxu0
    %v4114 = vpop.f32.mrb[0].mxu0
    %v4115 = vpop.f32.mrb[0].mxu0
    %4116 = vdwg.mxu0
    %v4117 = vmul.f32 %v4104, %v4104
    %v4118 = vmul.f32 %v4107, %v4107
    %v4119 = vmul.f32 %v4112, %v4112
    %v4120 = vmul.f32 %v4104, %v4117
    %v4121 = vmul.f32 %v4107, %v4118
    %v4122 = vmul.f32 %v4112, %v4119
    %v4123 = vmul.f32 %v4120, 0.044715
    %v4124 = vmul.f32 %v4121, 0.044715
    %v4125 = vmul.f32 %v4122, 0.044715
    %v4126 = vadd.f32 %v4104, %v4123
    %v4127 = vadd.f32 %v4107, %v4124
    %v4128 = vadd.f32 %v4112, %v4125
    %v4129 = vmul.f32 %v4126, 0.7978846
    %v4130 = vmul.f32 %v4127, 0.7978846
    %v4131 = vmul.f32 %v4128, 0.7978846
    %v4132 = vtanh.pop %v4129
    %v4133 = vtanh.pop %v4130
    %v4134 = vtanh.pop %v4131
    %v4135 = vadd.f32 %v4132, 1.0
    %v4136 = vadd.f32 %v4133, 1.0
    %v4137 = vadd.f32 %v4134, 1.0
    %v4138 = vmul.f32 %v4135, 0.5
    %v4139 = vmul.f32 %v4136, 0.5
    %v4140 = vmul.f32 %v4137, 0.5
    %v4141 = vmul.f32 %v4104, %v4138
    %v4142 = vmul.f32 %v4107, %v4139
    %v4143 = vmul.f32 %v4112, %v4140
    %v4144 = vpack.c.bf16 %v4142, %v4141
    %v4145 = vpack.c.bf16 %v4143, %v4143
    %v4146 = vld [vmem:[%s8 + $0xc] sm:$0x1]
    %v4148 = vlaneseq
    %v4149 = vshrl.u32 %v4148, 7
    %v4150 = vsub.s32 0, %v4149
    %v4151 = vrot.slane %v4146, %v4150
    %4153 = vrot.lane.b32.xlu0 %v839, 64
    %v4154 = vpop.permute.xlu0 %4153
    %4155 = vrot.lane.b32.xlu0 %v840, 64
    %v4156 = vpop.permute.xlu0 %4155
    %4157 = vrot.lane.b32.xlu0 %v841, 64
    %v4158 = vpop.permute.xlu0 %4157
    %4159 = vrot.lane.b32.xlu0 %v842, 64
    %v4160 = vpop.permute.xlu0 %4159
    %v4166 = vsel %vm278, %v4144, 0
    %v4169 = vsel %vm278, %v4145, 0
    %4171 = vmatprep.subr.bf16.mxu0 0
    %4172 = vmatpush1.bf16.msra.mxu0 %v4154
    %4173 = vmatprep.subr.bf16.mxu0 0
    %4174 = vmatpush1.bf16.msra.mxu0 %v4156
    %4175 = vmatprep.subr.bf16.mxu0 0
    %4176 = vmatpush1.bf16.msra.mxu0 %v4158
    %4177 = vmatprep.subr.bf16.mxu0 0
    %4178 = vmatpush1.bf16.msra.mxu0 %v4160
    %4179 = vmatprep.subr.bf16.mxu0 0
    %4180 = vmatpush1.bf16.msra.mxu0 0
    %4181 = vmatprep.subr.bf16.mxu0 0
    %4182 = vmatpush1.bf16.msra.mxu0 0
    %4183 = vmatprep.subr.bf16.mxu0 0
    %4184 = vmatpush1.bf16.msra.mxu0 0
    %4185 = vmatprep.subr.bf16.mxu0 0
    %4186 = vmatpush1.bf16.msra.mxu0 0
    %4187 = vmatprep.subr.bf16.mxu0 0
    %4188 = vmatpush1.bf16.msra.mxu0 0
    %4189 = vmatprep.subr.bf16.mxu0 0
    %4190 = vmatpush1.bf16.msra.mxu0 0
    %4191 = vmatprep.subr.bf16.mxu0 0
    %4192 = vmatpush1.bf16.msra.mxu0 0
    %4193 = vmatprep.subr.bf16.mxu0 0
    %4194 = vmatpush1.bf16.msra.mxu0 0
    %4195 = vmatprep.subr.bf16.mxu0 0
    %4196 = vmatpush1.bf16.msra.mxu0 0
    %4197 = vmatprep.subr.bf16.mxu0 0
    %4198 = vmatpush1.bf16.msra.mxu0 0
    %4199 = vmatprep.subr.bf16.mxu0 0
    %4200 = vmatpush1.bf16.msra.mxu0 0
    %4201 = vmatprep.subr.bf16.mxu0 0
    %4202 = vmatpush1.bf16.msra.mxu0 0
    %4203 = vmatprep.mubr.bf16.mxu0 0
    %4204 = vmatmul.mubr.bf16.gmra.mrb[0].mxu0 %v4166
    %v4205 = vpop.f32.mrb[0].mxu0
    %v4206 = vadd.f32 %v4151, %v4205
    %v4207 = vpop.f32.mrb[0].mxu0
    %v4208 = vpop.f32.mrb[0].mxu0
    %v4209 = vadd.f32 %v4151, %v4208
    %v4210 = vpop.f32.mrb[0].mxu0
    %4211 = vmatprep.mubr.bf16.mxu0 0
    %4212 = vmatmul.mubr.bf16.gmra.mrb[0].mxu0 %v4169
    %v4213 = vpop.f32.mrb[0].mxu0
    %v4214 = vadd.f32 %v4151, %v4213
    %v4215 = vpop.f32.mrb[0].mxu0
    %v4216 = vpop.f32.mrb[0].mxu0
    %v4217 = vpop.f32.mrb[0].mxu0
    %4218 = vdwg.mxu0
    %v4219 = vadd.f32 %v4206, %v4039
    %v4220 = vadd.f32 %v4209, %v4040
    %v4221 = vadd.f32 %v4214, %v4041
    %v4222 = vsel %vm199, %v4219, 0.0
    %4223 = vadd.xlane.f32.xlu0 %v4222
    %v4224 = vpop.xlane.xlu0 %4223
    %v4225 = vsel %vm199, %v4220, 0.0
    %4226 = vadd.xlane.f32.xlu0 %v4225
    %v4227 = vpop.xlane.xlu0 %4226
    %v4228 = vsel %vm203, %v4221, 0.0
    %4229 = vadd.xlane.f32.xlu0 %v4228
    %v4230 = vpop.xlane.xlu0 %4229
    %v4231 = vmul.f32 %v4224, %v207
    %v4232 = vmul.f32 %v4227, %v207
    %v4233 = vmul.f32 %v4230, %v207
    %v4234 = vsub.f32 %v4219, %v4231
    %v4235 = vsub.f32 %v4220, %v4232
    %v4236 = vsub.f32 %v4221, %v4233
    %v4237 = vmul.f32 %v4234, %v4234
    %v4238 = vmul.f32 %v4235, %v4235
    %v4239 = vmul.f32 %v4236, %v4236
    %v4240 = vsel %vm199, %v4237, 0.0
    %4241 = vadd.xlane.f32.xlu0 %v4240
    %v4242 = vpop.xlane.xlu0 %4241
    %v4243 = vsel %vm199, %v4238, 0.0
    %4244 = vadd.xlane.f32.xlu0 %v4243
    %v4245 = vpop.xlane.xlu0 %4244
    %v4246 = vsel %vm203, %v4239, 0.0
    %4247 = vadd.xlane.f32.xlu0 %v4246
    %v4248 = vpop.xlane.xlu0 %4247
    %v4249 = vmul.f32 %v4242, %v207
    %v4250 = vmul.f32 %v4245, %v207
    %v4251 = vmul.f32 %v4248, %v207
    %v4252 = vadd.f32 %v4249, 1e-12
    %v4253 = vadd.f32 %v4250, 1e-12
    %v4254 = vadd.f32 %v4251, 1e-12
    %v4255 = vrsqrt.pop %v4252
    %v4256 = vrsqrt.pop %v4253
    %v4257 = vrsqrt.pop %v4254
    %v4258 = vmul.f32 %v4234, %v4255
    %v4259 = vmul.f32 %v4235, %v4256
    %v4260 = vmul.f32 %v4236, %v4257
    %4261 = vrot.lane.b32.xlu0 %v4151, 96
    %v4262 = vpop.permute.xlu0 %4261
    %v4264 = vmul.f32 %v4258, %v4262
    %v4265 = vmul.f32 %v4259, %v4262
    %v4266 = vmul.f32 %v4260, %v4262
    %4267 = vrot.lane.b32.xlu0 %v4151, 64
    %v4268 = vpop.permute.xlu0 %4267
    %v4270 = vadd.f32 %v4264, %v4268
    %v4271 = vadd.f32 %v4265, %v4268
    %v4272 = vadd.f32 %v4266, %v4268
    %v4273 = vpack.c.bf16 %v4271, %v4270
    %v4274 = vpack.c.bf16 %v4272, %v4272
    %4275 = vrot.lane.b32.xlu0 %v4056, 64
    %v4276 = vpop.permute.xlu0 %4275
    %4277 = vrot.lane.b32.xlu0 %v4057, 64
    %v4278 = vpop.permute.xlu0 %4277
    %4281 = vrot.lane.b32.xlu0 %v4151, 32
    %v4282 = vpop.permute.xlu0 %4281
    %v4285 = vsel %vm199, %v4273, 0
    %v4288 = vsel %vm199, %v4274, 0
    %4290 = vmatprep.subr.bf16.mxu0 0
    %4291 = vmatpush1.bf16.msra.mxu0 %v4276
    %4292 = vmatprep.subr.bf16.mxu0 0
    %4293 = vmatpush1.bf16.msra.mxu0 %v4278
    %4294 = vmatprep.subr.bf16.mxu0 0
    %4295 = vmatpush1.bf16.msra.mxu0 0
    %4296 = vmatprep.subr.bf16.mxu0 0
    %4297 = vmatpush1.bf16.msra.mxu0 0
    %4298 = vmatprep.subr.bf16.mxu0 0
    %4299 = vmatpush1.bf16.msra.mxu0 0
    %4300 = vmatprep.subr.bf16.mxu0 0
    %4301 = vmatpush1.bf16.msra.mxu0 0
    %4302 = vmatprep.subr.bf16.mxu0 0
    %4303 = vmatpush1.bf16.msra.mxu0 0
    %4304 = vmatprep.subr.bf16.mxu0 0
    %4305 = vmatpush1.bf16.msra.mxu0 0
    %4306 = vmatprep.subr.bf16.mxu0 0
    %4307 = vmatpush1.bf16.msra.mxu0 0
    %4308 = vmatprep.subr.bf16.mxu0 0
    %4309 = vmatpush1.bf16.msra.mxu0 0
    %4310 = vmatprep.subr.bf16.mxu0 0
    %4311 = vmatpush1.bf16.msra.mxu0 0
    %4312 = vmatprep.subr.bf16.mxu0 0
    %4313 = vmatpush1.bf16.msra.mxu0 0
    %4314 = vmatprep.subr.bf16.mxu0 0
    %4315 = vmatpush1.bf16.msra.mxu0 0
    %4316 = vmatprep.subr.bf16.mxu0 0
    %4317 = vmatpush1.bf16.msra.mxu0 0
    %4318 = vmatprep.subr.bf16.mxu0 0
    %4319 = vmatpush1.bf16.msra.mxu0 0
    %4320 = vmatprep.subr.bf16.mxu0 0
    %4321 = vmatpush1.bf16.msra.mxu0 0
    %4322 = vmatprep.mubr.bf16.mxu0 0
    %4323 = vmatmul.mubr.bf16.gmra.mrb[0].mxu0 %v4285
    %v4324 = vpop.f32.mrb[0].mxu0
    %v4325 = vadd.f32 %v4282, %v4324
    %v4326 = vpop.f32.mrb[0].mxu0
    %v4327 = vpop.f32.mrb[0].mxu0
    %v4328 = vadd.f32 %v4282, %v4327
    %v4329 = vpop.f32.mrb[0].mxu0
    %4330 = vmatprep.mubr.bf16.mxu0 0
    %4331 = vmatmul.mubr.bf16.gmra.mrb[0].mxu0 %v4288
    %v4332 = vpop.f32.mrb[0].mxu0
    %v4333 = vadd.f32 %v4282, %v4332
    %v4334 = vpop.f32.mrb[0].mxu0
    %v4335 = vpop.f32.mrb[0].mxu0
    %v4336 = vpop.f32.mrb[0].mxu0
    %4337 = vdwg.mxu0
    %v4338 = vmul.f32 %v4325, %v4325
    %v4339 = vmul.f32 %v4328, %v4328
    %v4340 = vmul.f32 %v4333, %v4333
    %v4341 = vmul.f32 %v4325, %v4338
    %v4342 = vmul.f32 %v4328, %v4339
    %v4343 = vmul.f32 %v4333, %v4340
    %v4344 = vmul.f32 %v4341, 0.044715
    %v4345 = vmul.f32 %v4342, 0.044715
    %v4346 = vmul.f32 %v4343, 0.044715
    %v4347 = vadd.f32 %v4325, %v4344
    %v4348 = vadd.f32 %v4328, %v4345
    %v4349 = vadd.f32 %v4333, %v4346
    %v4350 = vmul.f32 %v4347, 0.7978846
    %v4351 = vmul.f32 %v4348, 0.7978846
    %v4352 = vmul.f32 %v4349, 0.7978846
    %v4353 = vtanh.pop %v4350
    %v4354 = vtanh.pop %v4351
    %v4355 = vtanh.pop %v4352
    %v4356 = vadd.f32 %v4353, 1.0
    %v4357 = vadd.f32 %v4354, 1.0
    %v4358 = vadd.f32 %v4355, 1.0
    %v4359 = vmul.f32 %v4356, 0.5
    %v4360 = vmul.f32 %v4357, 0.5
    %v4361 = vmul.f32 %v4358, 0.5
    %v4362 = vmul.f32 %v4325, %v4359
    %v4363 = vmul.f32 %v4328, %v4360
    %v4364 = vmul.f32 %v4333, %v4361
    %v4365 = vld [vmem:[%s8 + $0xd] sm:$0x1]
    %v4366 = vsel %vm199, %v4362, 0.0
    %4367 = vadd.xlane.f32.xlu0 %v4366
    %v4368 = vpop.xlane.xlu0 %4367
    %v4369 = vsel %vm199, %v4363, 0.0
    %4370 = vadd.xlane.f32.xlu0 %v4369
    %v4371 = vpop.xlane.xlu0 %4370
    %v4372 = vsel %vm203, %v4364, 0.0
    %4373 = vadd.xlane.f32.xlu0 %v4372
    %v4374 = vpop.xlane.xlu0 %4373
    %v4375 = vmul.f32 %v4368, %v207
    %v4376 = vmul.f32 %v4371, %v207
    %v4377 = vmul.f32 %v4374, %v207
    %v4378 = vsub.f32 %v4362, %v4375
    %v4379 = vsub.f32 %v4363, %v4376
    %v4380 = vsub.f32 %v4364, %v4377
    %v4381 = vmul.f32 %v4378, %v4378
    %v4382 = vmul.f32 %v4379, %v4379
    %v4383 = vmul.f32 %v4380, %v4380
    %v4384 = vsel %vm199, %v4381, 0.0
    %4385 = vadd.xlane.f32.xlu0 %v4384
    %v4386 = vpop.xlane.xlu0 %4385
    %v4387 = vsel %vm199, %v4382, 0.0
    %4388 = vadd.xlane.f32.xlu0 %v4387
    %v4389 = vpop.xlane.xlu0 %4388
    %v4390 = vsel %vm203, %v4383, 0.0
    %4391 = vadd.xlane.f32.xlu0 %v4390
    %v4392 = vpop.xlane.xlu0 %4391
    %v4393 = vmul.f32 %v4386, %v207
    %v4394 = vmul.f32 %v4389, %v207
    %v4395 = vmul.f32 %v4392, %v207
    %v4396 = vadd.f32 %v4393, 1e-12
    %v4397 = vadd.f32 %v4394, 1e-12
    %v4398 = vadd.f32 %v4395, 1e-12
    %v4399 = vrsqrt.pop %v4396
    %v4400 = vrsqrt.pop %v4397
    %v4401 = vrsqrt.pop %v4398
    %v4402 = vmul.f32 %v4378, %v4399
    %v4403 = vmul.f32 %v4379, %v4400
    %v4404 = vmul.f32 %v4380, %v4401
    %v4406 = vlaneseq
    %v4407 = vshrl.u32 %v4406, 7
    %v4408 = vsub.s32 0, %v4407
    %v4409 = vrot.slane %v4365, %v4408
    %v4411 = vmul.f32 %v4402, %v4409
    %v4412 = vmul.f32 %v4403, %v4409
    %v4413 = vmul.f32 %v4404, %v4409
    %4414 = vrot.lane.b32.xlu0 %v4409, 96
    %v4415 = vpop.permute.xlu0 %4414
    %v4417 = vadd.f32 %v4411, %v4415
    %v4418 = vadd.f32 %v4412, %v4415
    %v4419 = vadd.f32 %v4413, %v4415
    %v4420 = vld [vmem:[%s6 + $0x18] sm:$0xff]
    %v4421 = vld [vmem:[%s6 + $0x38] sm:$0xff]
    %v4422 = vld [vmem:[%s6 + $0x58] sm:$0xff]
    %v4423 = vld [vmem:[%s6 + $0x78] sm:$0xff]
    %v4424 = vpack.c.bf16 %v4418, %v4417
    %v4425 = vpack.c.bf16 %v4419, %v4419
    %v4426 = vld [vmem:[%s8 + $0xd] sm:$0x3]
    %v4428 = vlaneseq
    %v4429 = vshrl.u32 %v4428, 7
    %v4430 = vsub.s32 0, %v4429
    %v4431 = vrot.slane %v4426, %v4430
    %v4432 = vlaneseq
    %v4433 = vshrl.u32 %v4432, 7
    %v4434 = vsub.s32 1, %v4433
    %v4435 = vrot.slane %v4426, %v4434
    %v4440 = vunpack.c.l.b16 %v4420
    %v4441 = vunpack.c.h.b16 %v4420
    %v4442 = vunpack.c.l.b16 %v4421
    %v4443 = vunpack.c.h.b16 %v4421
    %v4444 = vunpack.c.l.b16 %v4422
    %v4445 = vunpack.c.h.b16 %v4422
    %v4446 = vunpack.c.l.b16 %v4423
    %v4447 = vunpack.c.h.b16 %v4423
    %v4448 = vpack.c.b16 %v4442, %v4440
    %v4449 = vpack.c.b16 %v4443, %v4441
    %v4450 = vpack.c.b16 %v4446, %v4444
    %v4451 = vpack.c.b16 %v4447, %v4445
    %4452 = vrot.lane.b32.xlu0 %v4448, 32
    %v4453 = vpop.permute.xlu0 %4452
    %4454 = vrot.lane.b32.xlu0 %v4449, 32
    %v4455 = vpop.permute.xlu0 %4454
    %4456 = vrot.lane.b32.xlu0 %v4450, 32
    %v4457 = vpop.permute.xlu0 %4456
    %4458 = vrot.lane.b32.xlu0 %v4451, 32
    %v4459 = vpop.permute.xlu0 %4458
    %v4460 = vsel %vm1682, %v4453, %v4455
    %v4461 = vsel %vm1682, %v4457, %v4459
    %4466 = vrot.lane.b32.xlu0 %v4431, 64
    %v4467 = vpop.permute.xlu0 %4466
    %4468 = vrot.lane.b32.xlu0 %v4435, 64
    %v4469 = vpop.permute.xlu0 %4468
    %v4470 = vsel %vm278, %v4467, %v4469
    %v4474 = vsel %vm199, %v4424, 0
    %v4477 = vsel %vm199, %v4425, 0
    %4479 = vmatprep.subr.bf16.mxu0 %v4455
    %4480 = vmatpush1.bf16.msra.mxu0 %v4460
    %4481 = vmatprep.subr.bf16.mxu0 %v4459
    %4482 = vmatpush1.bf16.msra.mxu0 %v4461
    %4483 = vmatprep.subr.bf16.mxu0 0
    %4484 = vmatpush1.bf16.msra.mxu0 0
    %4485 = vmatprep.subr.bf16.mxu0 0
    %4486 = vmatpush1.bf16.msra.mxu0 0
    %4487 = vmatprep.subr.bf16.mxu0 0
    %4488 = vmatpush1.bf16.msra.mxu0 0
    %4489 = vmatprep.subr.bf16.mxu0 0
    %4490 = vmatpush1.bf16.msra.mxu0 0
    %4491 = vmatprep.subr.bf16.mxu0 0
    %4492 = vmatpush1.bf16.msra.mxu0 0
    %4493 = vmatprep.subr.bf16.mxu0 0
    %4494 = vmatpush1.bf16.msra.mxu0 0
    %4495 = vmatprep.subr.bf16.mxu0 0
    %4496 = vmatpush1.bf16.msra.mxu0 0
    %4497 = vmatprep.subr.bf16.mxu0 0
    %4498 = vmatpush1.bf16.msra.mxu0 0
    %4499 = vmatprep.subr.bf16.mxu0 0
    %4500 = vmatpush1.bf16.msra.mxu0 0
    %4501 = vmatprep.subr.bf16.mxu0 0
    %4502 = vmatpush1.bf16.msra.mxu0 0
    %4503 = vmatprep.subr.bf16.mxu0 0
    %4504 = vmatpush1.bf16.msra.mxu0 0
    %4505 = vmatprep.subr.bf16.mxu0 0
    %4506 = vmatpush1.bf16.msra.mxu0 0
    %4507 = vmatprep.subr.bf16.mxu0 0
    %4508 = vmatpush1.bf16.msra.mxu0 0
    %4509 = vmatprep.subr.bf16.mxu0 0
    %4510 = vmatpush1.bf16.msra.mxu0 0
    %4511 = vmatprep.mubr.bf16.mxu0 0
    %4512 = vmatmul.mubr.bf16.gmra.mrb[0].mxu0 %v4474
    %v4513 = vpop.f32.mrb[0].mxu0
    %v4514 = vadd.f32 %v4470, %v4513
    %v4515 = vpop.f32.mrb[0].mxu0
    %v4516 = vadd.f32 %v4469, %v4515
    %v4517 = vpop.f32.mrb[0].mxu0
    %v4518 = vadd.f32 %v4470, %v4517
    %v4519 = vpop.f32.mrb[0].mxu0
    %v4520 = vadd.f32 %v4469, %v4519
    %4521 = vmatprep.mubr.bf16.mxu0 0
    %4522 = vmatmul.mubr.bf16.gmra.mrb[0].mxu0 %v4477
    %v4523 = vpop.f32.mrb[0].mxu0
    %v4524 = vadd.f32 %v4470, %v4523
    %v4525 = vpop.f32.mrb[0].mxu0
    %v4526 = vadd.f32 %v4469, %v4525
    %v4527 = vpop.f32.mrb[0].mxu0
    %v4528 = vpop.f32.mrb[0].mxu0
    %4529 = vdwg.mxu0
    %vm4530 = vcmask 15360
    %v4531 = vsel %vm4530, %v4516, -inf
    %v4532 = vmax.f32 %v4514, %v4531
    %4533 = vmax.xlane.f32.xlu0 %v4532
    %v4534 = vpop.xlane.xlu0 %4533
    %v4535 = vsel %vm4530, %v4520, -inf
    %v4536 = vmax.f32 %v4518, %v4535
    %4537 = vmax.xlane.f32.xlu0 %v4536
    %v4538 = vpop.xlane.xlu0 %4537
    %v4539 = vsel %vm327, %v4524, -inf
    %vm4540 = vcmask 9216
    %v4541 = vsel %vm4540, %v4526, -inf
    %v4542 = vmax.f32 %v4539, %v4541
    %4543 = vmax.xlane.f32.xlu0 %v4542
    %v4544 = vpop.xlane.xlu0 %4543
    %v4545 = vsub.f32 %v4514, %v4534
    %v4546 = vsub.f32 %v4516, %v4534
    %v4547 = vsub.f32 %v4518, %v4538
    %v4548 = vsub.f32 %v4520, %v4538
    %v4549 = vsub.f32 %v4524, %v4544
    %v4550 = vsub.f32 %v4526, %v4544
    %v4551 = vmul.f32 %v4545, 1.442695
    %v4552 = vpow.pop %v4551
    %v4553 = vmul.f32 %v4546, 1.442695
    %v4554 = vpow.pop %v4553
    %v4555 = vmul.f32 %v4547, 1.442695
    %v4556 = vpow.pop %v4555
    %v4557 = vmul.f32 %v4548, 1.442695
    %v4558 = vpow.pop %v4557
    %v4559 = vmul.f32 %v4549, 1.442695
    %v4560 = vpow.pop %v4559
    %v4561 = vmul.f32 %v4550, 1.442695
    %v4562 = vpow.pop %v4561
    %v4563 = vsel %vm4530, %v4554, 0.0
    %v4564 = vadd.f32 %v4552, %v4563
    %4565 = vadd.xlane.f32.xlu0 %v4564
    %v4566 = vpop.xlane.xlu0 %4565
    %v4567 = vsel %vm4530, %v4558, 0.0
    %v4568 = vadd.f32 %v4556, %v4567
    %4569 = vadd.xlane.f32.xlu0 %v4568
    %v4570 = vpop.xlane.xlu0 %4569
    %v4571 = vsel %vm327, %v4560, 0.0
    %v4572 = vsel %vm4540, %v4562, 0.0
    %v4573 = vadd.f32 %v4571, %v4572
    %4574 = vadd.xlane.f32.xlu0 %v4573
    %v4575 = vpop.xlane.xlu0 %4574
    %v4576 = vlog2.pop %v4566
    %v4577 = vmul.f32 %v4576, 0.6931472
    %v4578 = vlog2.pop %v4570
    %v4579 = vmul.f32 %v4578, 0.6931472
    %v4580 = vlog2.pop %v4575
    %v4581 = vmul.f32 %v4580, 0.6931472
    %v4582 = vadd.f32 %v4577, %v4534
    %v4583 = vadd.f32 %v4579, %v4538
    %v4584 = vadd.f32 %v4581, %v4544
    %v4585 = vld [vmem:[%s3] sm:$0xff]
    %v4586 = vld [vmem:[%s3 + $0x8] sm:$0xff]
    %v4587 = vld [vmem:[%s3 + $0x10] sm:$0xff]
    %v4588 = vld [vmem:[%s3 + $0x18] sm:$0xff]
    %v4589 = vld [vmem:[%s3 + $0x20] sm:$0x3]
    %v4590 = vld [vmem:[%s3 + $0x28] sm:$0x3]
    %v4591 = vmul.f32 %v4514, %v4585
    %v4592 = vmul.f32 %v4516, %v4586
    %v4593 = vmul.f32 %v4518, %v4587
    %v4594 = vmul.f32 %v4520, %v4588
    %v4595 = vmul.f32 %v4524, %v4589
    %v4596 = vmul.f32 %v4526, %v4590
    %v4597 = vsel %vm4530, %v4592, 0.0
    %v4598 = vadd.f32 %v4591, %v4597
    %4599 = vadd.xlane.f32.xlu0 %v4598
    %v4600 = vpop.xlane.xlu0 %4599
    %v4601 = vsel %vm4530, %v4594, 0.0
    %v4602 = vadd.f32 %v4593, %v4601
    %4603 = vadd.xlane.f32.xlu0 %v4602
    %v4604 = vpop.xlane.xlu0 %4603
    %v4605 = vsel %vm327, %v4595, 0.0
    %v4606 = vsel %vm4540, %v4596, 0.0
    %v4607 = vadd.f32 %v4605, %v4606
    %4608 = vadd.xlane.f32.xlu0 %v4607
    %v4609 = vpop.xlane.xlu0 %4608
    %v4610 = vsel %vm4530, %v4586, 0.0
    %v4611 = vadd.f32 %v4585, %v4610
    %4612 = vadd.xlane.f32.xlu0 %v4611
    %v4613 = vpop.xlane.xlu0 %4612
    %v4614 = vsel %vm4530, %v4588, 0.0
    %v4615 = vadd.f32 %v4587, %v4614
    %4616 = vadd.xlane.f32.xlu0 %v4615
    %v4617 = vpop.xlane.xlu0 %4616
    %v4618 = vsel %vm327, %v4589, 0.0
    %v4619 = vsel %vm4540, %v4590, 0.0
    %v4620 = vadd.f32 %v4618, %v4619
    %4621 = vadd.xlane.f32.xlu0 %v4620
    %v4622 = vpop.xlane.xlu0 %4621
    %v4623 = vsub.f32 %v4582, %v4600
    %v4624 = vsub.f32 %v4583, %v4604
    %v4625 = vsub.f32 %v4584, %v4609
    %v4626 = vmul.f32 %v4613, %v4623
    %v4627 = vmul.f32 %v4617, %v4624
    %v4628 = vmul.f32 %v4622, %v4625
    %v4629 = vadd.f32 %v4626, %v4627
    %v4630 = vsel %vm327, %v4628, 0.0
    %v4631 = vadd.f32 %v4629, %v4630
    %v4632 = vrot.slane %v4631, 4
    %v4633 = vadd.f32 %v4631, %v4632
    %v4634 = vrot.slane %v4633, 2
    %v4635 = vadd.f32 %v4633, %v4634
    %v4636 = vrot.slane %v4635, 1
    %v4637 = vadd.f32 %v4635, %v4636
    %v4638 = vmul.f32 %v4637, 0.5
    %vm4639 = vcmask 0
    %4640 = vst.msk [vmem:[#allocation2] sm:$0x1] %vm4639, %v4638
    // Predicated region
    $region38: #{blip_vqa_forward_train.1} parent=1 // pred_check
      _
    $region39: #{blip_vqa_forward_train.1} parent=1 // pred_check_branch
      %4642 = sbr.rel (0) target = $region41
    $region40: #{blip_vqa_forward_train.1} parent=1 // pred_region
      %s4644 = ssub.s32 16, 16
      %4645 = vsyncadd [#allocation3], %s4644
      %s4647 = sshll.u32 [#allocation2], 4
      %s4648 = int_to_ptr.vmem [resolvable:$true] %s4647
      %4650 = dma.vmem_to_hbm [thread:$0]  %s4648, 16, %s9, [#allocation3]
    $region41: #{blip_vqa_forward_train.1} parent=1 // pred_fallthru
      _
    // Predicated region
    $region42: #{blip_vqa_forward_train.1} parent=1 // pred_check
      _
    $region43: #{blip_vqa_forward_train.1} parent=1 // pred_check_branch
      %4652 = sbr.rel (0) target = $region45
    $region44: #{blip_vqa_forward_train.1} parent=1 // pred_region
      %4653 = dma.done [#allocation3], 16
    $region45: #{blip_vqa_forward_train.1} parent=1 // pred_fallthru
      _
    %4654 = vsyncpa [#allocation3], 1

</llo_original>
